<compile_context>
chip_gen: v5e
topology: v5e:2x2
jax: 0.10.0
libtpu: 0.0.40
codegen_flags: <defaults>
</compile_context>

<pallas_src>
import functools
import math

import jax
import jax.numpy as jnp
from jax.experimental import pallas as pl
from jax.experimental.pallas import tpu as pltpu

NUM_HEADS = 8


# --------------------------------------------------------------------------
# The single fused kernel: one grid step == one batch element.
# --------------------------------------------------------------------------
def _big_model_kernel(
        valid_len_ref,                        # SMEM (B,) int32 (scalar prefetch)
        x0_ref, gfeat_ref, mask_ref,          # per-batch data blocks
        mlp_w_ref, mlp_b_ref, mlp_g_ref, mlp_beta_ref,
        wq_ref, bq_ref, wk_ref, bk_ref, wv_ref, bv_ref, wo_ref, bo_ref,
        g1_ref, beta1_ref, w1_ref, b1_ref, w2_ref, b2_ref, g2_ref, beta2_ref,
        gg_wq_ref, gg_bq_ref, gg_wk_ref, gg_bk_ref, gg_wv_ref, gg_bv_ref,
        pos_ref, wp_ref, bp_ref,
        o_ref,
        *, n_heads):
    b = pl.program_id(0)
    T, W = pos_ref.shape
    dh = W // n_heads
    f32 = jnp.float32

    def layer_norm(y, g, beta):
        mu = jnp.mean(y, axis=-1, keepdims=True)
        var = jnp.mean((y - mu) ** 2, axis=-1, keepdims=True)
        return (y - mu) * jax.lax.rsqrt(var + 1e-5) * g + beta

    def softmax(s):
        s = s - jnp.max(s, axis=-1, keepdims=True)
        p = jnp.exp(s)
        return p * pl.reciprocal(jnp.sum(p, axis=-1, keepdims=True), approx=True)

    # ---- 1) multi_layer_mlp: 6 x (Linear -> LayerNorm -> LeakyReLU) ----------
    h = x0_ref[0]                                               # (T, W) padded traj
    for l in range(mlp_w_ref.shape[0]):
        y = jnp.dot(h, mlp_w_ref[l], preferred_element_type=f32) + mlp_b_ref[l]
        y = layer_norm(y, mlp_g_ref[l], mlp_beta_ref[l])
        h = jnp.where(y >= 0.0, y, 0.01 * y)
    x = h + pos_ref[...]                                        # + position encoder

    # ---- 2) TransformerEncoderLayer (post-LN, 8 heads, ReLU FFN, eval) -------
    scale = 1.0 / math.sqrt(dh)
    attn = jnp.zeros((T, W), f32)
    for hd in range(n_heads):                                   # per-head weights
        qh = jnp.dot(x, wq_ref[hd], preferred_element_type=f32) + bq_ref[hd]
        kh = jnp.dot(x, wk_ref[hd], preferred_element_type=f32) + bk_ref[hd]
        vh = jnp.dot(x, wv_ref[hd], preferred_element_type=f32) + bv_ref[hd]
        s = jax.lax.dot_general(qh, kh, (((1,), (1,)), ((), ())),
                                preferred_element_type=f32) * scale
        oh = jnp.dot(softmax(s), vh, preferred_element_type=f32)
        # out-projection applied per-head and summed == concat(heads) @ Wo
        attn = attn + jnp.dot(oh, wo_ref[hd], preferred_element_type=f32)
    attn = attn + bo_ref[...]
    x = layer_norm(x + attn, g1_ref[...], beta1_ref[...])

    # FFN (bf16 weights, f32 accumulation) fused with residual add + LayerNorm;
    # the (T, d_ff) hidden never leaves VMEM.
    h1 = jnp.dot(x.astype(w1_ref.dtype), w1_ref[...],
                 preferred_element_type=f32) + b1_ref[...]
    h1 = jnp.maximum(h1, 0.0)
    h2 = jnp.dot(h1.astype(w2_ref.dtype), w2_ref[...],
                 preferred_element_type=f32) + b2_ref[...]
    x = layer_norm(x + h2, g2_ref[...], beta2_ref[...])

    # ---- 3) GlobalGraph2: cross-attention, keys >= valid_len masked ----------
    gf = gfeat_ref[0]                                           # (S, W)
    S = gf.shape[0]
    gq = jnp.dot(x, gg_wq_ref[...], preferred_element_type=f32) + gg_bq_ref[...]
    gk = jnp.dot(gf, gg_wk_ref[...], preferred_element_type=f32) + gg_bk_ref[...]
    gv = jnp.dot(gf, gg_wv_ref[...], preferred_element_type=f32) + gg_bv_ref[...]
    s = jax.lax.dot_general(gq, gk, (((1,), (1,)), ((), ())),
                            preferred_element_type=f32) * (1.0 / math.sqrt(W))
    vl = valid_len_ref[b]
    key_ok = jax.lax.broadcasted_iota(jnp.int32, (1, S), 1) < vl
    ctx = jnp.dot(softmax(s + jnp.where(key_ok, 0.0, -1e9)), gv,
                  preferred_element_type=f32)                   # (T, W)

    # ---- 4) masked max over seq + position encoder + pred Linear -------------
    m = mask_ref[0]                                             # (T, 1) float mask
    pooled = jnp.max(jnp.where(m > 0.0, ctx, -1e30), axis=0, keepdims=True)
    y = pooled + pos_ref[...]                                   # (T, W)
    o_ref[0] = jnp.dot(y, wp_ref[...], preferred_element_type=f32) + bp_ref[...]


# --------------------------------------------------------------------------
# Parameters (deterministic synthetic init, laid out for the fused kernel)
# --------------------------------------------------------------------------
def init_params(key, W=32, T=8, d_ff=2048, n_heads=NUM_HEADS):
    ks = iter(jax.random.split(key, 32))

    def dense(kin, kout):
        return 0.1 * jax.random.normal(next(ks), (kin, kout), jnp.float32)

    dh = W // n_heads

    # 6 MLP blocks.  The first layer is 2 -> W; its weight is stored padded to
    # (W, W) with zero rows so all six layers stack into one (6, W, W) array
    # (the trajectory input is zero-padded 2 -> W to match; identical math).
    w0 = jnp.zeros((W, W), jnp.float32).at[:2, :].set(dense(2, W))
    mlp_w = jnp.stack([w0] + [dense(W, W) for _ in range(5)])        # (6, W, W)
    mlp_b = jnp.zeros((6, 1, W), jnp.float32)
    mlp_g = jnp.ones((6, 1, W), jnp.float32)
    mlp_beta = jnp.zeros((6, 1, W), jnp.float32)

    def per_head_cols(w):   # (W, W) in-proj weight -> (H, W, dh) per-head slices
        return w.reshape(W, n_heads, dh).transpose(1, 0, 2)

    enc = dict(
        wq=per_head_cols(dense(W, W)), bq=jnp.zeros((n_heads, 1, dh), jnp.float32),
        wk=per_head_cols(dense(W, W)), bk=jnp.zeros((n_heads, 1, dh), jnp.float32),
        wv=per_head_cols(dense(W, W)), bv=jnp.zeros((n_heads, 1, dh), jnp.float32),
        wo=dense(W, W).reshape(n_heads, dh, W),     # out-proj rows grouped per head
        bo=jnp.zeros((1, W), jnp.float32),
        g1=jnp.ones((1, W), jnp.float32), beta1=jnp.zeros((1, W), jnp.float32),
        w1=dense(W, d_ff).astype(jnp.bfloat16), b1=jnp.zeros((1, d_ff), jnp.float32),
        w2=dense(d_ff, W).astype(jnp.bfloat16), b2=jnp.zeros((1, W), jnp.float32),
        g2=jnp.ones((1, W), jnp.float32), beta2=jnp.zeros((1, W), jnp.float32),
    )
    gg = dict(wq=dense(W, W), bq=jnp.zeros((1, W), jnp.float32),
              wk=dense(W, W), bk=jnp.zeros((1, W), jnp.float32),
              wv=dense(W, W), bv=jnp.zeros((1, W), jnp.float32))

    pos_enc = jax.random.normal(next(ks), (T, W), jnp.float32)
    wp = dense(W, 2)
    bp = jnp.zeros((1, 2), jnp.float32)
    return dict(mlp_w=mlp_w, mlp_b=mlp_b, mlp_g=mlp_g, mlp_beta=mlp_beta,
                enc=enc, gg=gg, pos_enc=pos_enc, wp=wp, bp=bp)


# --------------------------------------------------------------------------
# Forward pass: a single pallas_call (grid over batch only)
# --------------------------------------------------------------------------
@jax.jit
def big_model_forward(params, agt_traj, global_feat, valid_len, mask):
    B, T, c_in = agt_traj.shape
    W = params["pos_enc"].shape[1]

    x0 = jnp.pad(agt_traj.astype(jnp.float32), ((0, 0), (0, 0), (0, W - c_in)))
    gfeat = global_feat.astype(jnp.float32)
    mask_f = mask.astype(jnp.float32)

    enc, gg = params["enc"], params["gg"]
    weights = (params["mlp_w"], params["mlp_b"], params["mlp_g"], params["mlp_beta"],
               enc["wq"], enc["bq"], enc["wk"], enc["bk"], enc["wv"], enc["bv"],
               enc["wo"], enc["bo"], enc["g1"], enc["beta1"],
               enc["w1"], enc["b1"], enc["w2"], enc["b2"], enc["g2"], enc["beta2"],
               gg["wq"], gg["bq"], gg["wk"], gg["bk"], gg["wv"], gg["bv"],
               params["pos_enc"], params["wp"], params["bp"])

    def batch_spec(shape):                       # one batch element per grid step
        nz = len(shape) - 1
        return pl.BlockSpec((1,) + tuple(shape[1:]),
                            lambda i, vl, _nz=nz: (i,) + (0,) * _nz)

    def const_spec(arr):                         # weight resident across the grid
        nd = arr.ndim
        return pl.BlockSpec(arr.shape, lambda i, vl, _nd=nd: (0,) * _nd)

    grid_spec = pltpu.PrefetchScalarGridSpec(
        num_scalar_prefetch=1,                   # valid_len lives in SMEM
        grid=(B,),
        in_specs=[batch_spec(x0.shape), batch_spec(gfeat.shape),
                  batch_spec(mask_f.shape)] + [const_spec(a) for a in weights],
        out_specs=pl.BlockSpec((1, T, 2), lambda i, vl: (i, 0, 0)),
    )

    return pl.pallas_call(
        functools.partial(_big_model_kernel, n_heads=NUM_HEADS),
        out_shape=jax.ShapeDtypeStruct((B, T, 2), jnp.float32),
        grid_spec=grid_spec,
        compiler_params=pltpu.CompilerParams(
            dimension_semantics=("parallel",)),  # batch across v7x's 2 TCs
    )(valid_len.astype(jnp.int32), x0, gfeat, mask_f, *weights)


# --------------------------------------------------------------------------
if __name__ == "__main__":
    B, T, W, S = 2, 8, 32, 6     # small shapes: batch=2, obs_horizon=8, width=32
    key = jax.random.PRNGKey(0)
    k1, k2, k3, kp = jax.random.split(key, 4)

    agt_traj = jax.random.normal(k1, (B, T, 2), jnp.float32)
    global_feat = jax.random.normal(k2, (B, S, W), jnp.float32)
    valid_len = jnp.array([S, 4], jnp.int32)
    mask = jax.random.bernoulli(k3, 0.7, (B, T, 1))
    mask = mask.at[:, 0, :].set(True)            # keep >= 1 valid step per batch

    params = init_params(kp, W=W, T=T)
    out = big_model_forward(params, agt_traj, global_feat, valid_len, mask)
    jax.block_until_ready(out)
    assert out.shape == (B, T, 2) and bool(jnp.all(jnp.isfinite(out)))
    print("KERNEL_OK")
</pallas_src>

<mosaic_0001>
module attributes {stable_mosaic.version = 11 : i64} {
  func.func @_big_model_kernel(%arg0: i32, %arg1: memref<2xi32, #tpu.memory_space<smem>>, %arg2: memref<1x8x32xf32, #tpu.memory_space<vmem>>, %arg3: memref<1x6x32xf32, #tpu.memory_space<vmem>>, %arg4: memref<1x8x1xf32, #tpu.memory_space<vmem>>, %arg5: memref<6x32x32xf32, #tpu.memory_space<vmem>>, %arg6: memref<6x1x32xf32, #tpu.memory_space<vmem>>, %arg7: memref<6x1x32xf32, #tpu.memory_space<vmem>>, %arg8: memref<6x1x32xf32, #tpu.memory_space<vmem>>, %arg9: memref<8x32x4xf32, #tpu.memory_space<vmem>>, %arg10: memref<8x1x4xf32, #tpu.memory_space<vmem>>, %arg11: memref<8x32x4xf32, #tpu.memory_space<vmem>>, %arg12: memref<8x1x4xf32, #tpu.memory_space<vmem>>, %arg13: memref<8x32x4xf32, #tpu.memory_space<vmem>>, %arg14: memref<8x1x4xf32, #tpu.memory_space<vmem>>, %arg15: memref<8x4x32xf32, #tpu.memory_space<vmem>>, %arg16: memref<1x32xf32, #tpu.memory_space<vmem>>, %arg17: memref<1x32xf32, #tpu.memory_space<vmem>>, %arg18: memref<1x32xf32, #tpu.memory_space<vmem>>, %arg19: memref<32x2048xbf16, #tpu.memory_space<vmem>>, %arg20: memref<1x2048xf32, #tpu.memory_space<vmem>>, %arg21: memref<2048x32xbf16, #tpu.memory_space<vmem>>, %arg22: memref<1x32xf32, #tpu.memory_space<vmem>>, %arg23: memref<1x32xf32, #tpu.memory_space<vmem>>, %arg24: memref<1x32xf32, #tpu.memory_space<vmem>>, %arg25: memref<32x32xf32, #tpu.memory_space<vmem>>, %arg26: memref<1x32xf32, #tpu.memory_space<vmem>>, %arg27: memref<32x32xf32, #tpu.memory_space<vmem>>, %arg28: memref<1x32xf32, #tpu.memory_space<vmem>>, %arg29: memref<32x32xf32, #tpu.memory_space<vmem>>, %arg30: memref<1x32xf32, #tpu.memory_space<vmem>>, %arg31: memref<8x32xf32, #tpu.memory_space<vmem>>, %arg32: memref<32x2xf32, #tpu.memory_space<vmem>>, %arg33: memref<1x2xf32, #tpu.memory_space<vmem>>, %arg34: memref<1x8x2xf32, #tpu.memory_space<vmem>>) attributes {dimension_semantics = [#tpu.dimension_semantics<parallel>], iteration_bounds = array<i64: 2>, scalar_prefetch = 1 : i64, scratch_operands = 0 : i64, tpu.core_type = #tpu.core_type<tc>, window_params = [{transform_indices = @transform_0, window_bounds = array<i64: 1, 8, 32>}, {transform_indices = @transform_1, window_bounds = array<i64: 1, 6, 32>}, {transform_indices = @transform_2, window_bounds = array<i64: 1, 8, 1>}, {pipeline_mode = #tpu.pipeline_mode<synchronous>, transform_indices = @transform_3, window_bounds = array<i64: 6, 32, 32>}, {pipeline_mode = #tpu.pipeline_mode<synchronous>, transform_indices = @transform_4, window_bounds = array<i64: 6, 1, 32>}, {pipeline_mode = #tpu.pipeline_mode<synchronous>, transform_indices = @transform_5, window_bounds = array<i64: 6, 1, 32>}, {pipeline_mode = #tpu.pipeline_mode<synchronous>, transform_indices = @transform_6, window_bounds = array<i64: 6, 1, 32>}, {pipeline_mode = #tpu.pipeline_mode<synchronous>, transform_indices = @transform_7, window_bounds = array<i64: 8, 32, 4>}, {pipeline_mode = #tpu.pipeline_mode<synchronous>, transform_indices = @transform_8, window_bounds = array<i64: 8, 1, 4>}, {pipeline_mode = #tpu.pipeline_mode<synchronous>, transform_indices = @transform_9, window_bounds = array<i64: 8, 32, 4>}, {pipeline_mode = #tpu.pipeline_mode<synchronous>, transform_indices = @transform_10, window_bounds = array<i64: 8, 1, 4>}, {pipeline_mode = #tpu.pipeline_mode<synchronous>, transform_indices = @transform_11, window_bounds = array<i64: 8, 32, 4>}, {pipeline_mode = #tpu.pipeline_mode<synchronous>, transform_indices = @transform_12, window_bounds = array<i64: 8, 1, 4>}, {pipeline_mode = #tpu.pipeline_mode<synchronous>, transform_indices = @transform_13, window_bounds = array<i64: 8, 4, 32>}, {pipeline_mode = #tpu.pipeline_mode<synchronous>, transform_indices = @transform_14, window_bounds = array<i64: 1, 32>}, {pipeline_mode = #tpu.pipeline_mode<synchronous>, transform_indices = @transform_15, window_bounds = array<i64: 1, 32>}, {pipeline_mode = #tpu.pipeline_mode<synchronous>, transform_indices = @transform_16, window_bounds = array<i64: 1, 32>}, {pipeline_mode = #tpu.pipeline_mode<synchronous>, transform_indices = @transform_17, window_bounds = array<i64: 32, 2048>}, {pipeline_mode = #tpu.pipeline_mode<synchronous>, transform_indices = @transform_18, window_bounds = array<i64: 1, 2048>}, {pipeline_mode = #tpu.pipeline_mode<synchronous>, transform_indices = @transform_19, window_bounds = array<i64: 2048, 32>}, {pipeline_mode = #tpu.pipeline_mode<synchronous>, transform_indices = @transform_20, window_bounds = array<i64: 1, 32>}, {pipeline_mode = #tpu.pipeline_mode<synchronous>, transform_indices = @transform_21, window_bounds = array<i64: 1, 32>}, {pipeline_mode = #tpu.pipeline_mode<synchronous>, transform_indices = @transform_22, window_bounds = array<i64: 1, 32>}, {pipeline_mode = #tpu.pipeline_mode<synchronous>, transform_indices = @transform_23, window_bounds = array<i64: 32, 32>}, {pipeline_mode = #tpu.pipeline_mode<synchronous>, transform_indices = @transform_24, window_bounds = array<i64: 1, 32>}, {pipeline_mode = #tpu.pipeline_mode<synchronous>, transform_indices = @transform_25, window_bounds = array<i64: 32, 32>}, {pipeline_mode = #tpu.pipeline_mode<synchronous>, transform_indices = @transform_26, window_bounds = array<i64: 1, 32>}, {pipeline_mode = #tpu.pipeline_mode<synchronous>, transform_indices = @transform_27, window_bounds = array<i64: 32, 32>}, {pipeline_mode = #tpu.pipeline_mode<synchronous>, transform_indices = @transform_28, window_bounds = array<i64: 1, 32>}, {pipeline_mode = #tpu.pipeline_mode<synchronous>, transform_indices = @transform_29, window_bounds = array<i64: 8, 32>}, {pipeline_mode = #tpu.pipeline_mode<synchronous>, transform_indices = @transform_30, window_bounds = array<i64: 32, 2>}, {pipeline_mode = #tpu.pipeline_mode<synchronous>, transform_indices = @transform_31, window_bounds = array<i64: 1, 2>}, {transform_indices = @transform_32, window_bounds = array<i64: 1, 8, 2>}]} {
    %c0 = arith.constant 0 : index
    %c0_0 = arith.constant 0 : index
    %c0_1 = arith.constant 0 : index
    %0 = vector.load %arg2[%c0, %c0_0, %c0_1] : memref<1x8x32xf32, #tpu.memory_space<vmem>>, vector<1x8x32xf32>
    %1 = vector.shape_cast %0 : vector<1x8x32xf32> to vector<8x32xf32>
    %c0_2 = arith.constant 0 : index
    %c0_3 = arith.constant 0 : index
    %c0_4 = arith.constant 0 : index
    %2 = vector.load %arg5[%c0_2, %c0_3, %c0_4] : memref<6x32x32xf32, #tpu.memory_space<vmem>>, vector<1x32x32xf32>
    %3 = vector.shape_cast %2 : vector<1x32x32xf32> to vector<32x32xf32>
    %cst = arith.constant dense<0.000000e+00> : vector<8x32xf32>
    %4 = tpu.matmul %1, %3, %cst {dimension_numbers = #tpu.dot_dimension_numbers<[1], [0], [0], [1], [0, 0, 1, 1], [], []>} : vector<8x32xf32>, vector<32x32xf32>, vector<8x32xf32> -> vector<8x32xf32>
    %c0_5 = arith.constant 0 : index
    %c0_6 = arith.constant 0 : index
    %c0_7 = arith.constant 0 : index
    %5 = vector.load %arg6[%c0_5, %c0_6, %c0_7] : memref<6x1x32xf32, #tpu.memory_space<vmem>>, vector<1x1x32xf32>
    %6 = vector.shape_cast %5 : vector<1x1x32xf32> to vector<1x32xf32>
    %7 = vector.broadcast %6 : vector<1x32xf32> to vector<8x32xf32>
    %8 = arith.addf %4, %7 : vector<8x32xf32>
    %c0_8 = arith.constant 0 : index
    %c0_9 = arith.constant 0 : index
    %c0_10 = arith.constant 0 : index
    %9 = vector.load %arg7[%c0_8, %c0_9, %c0_10] : memref<6x1x32xf32, #tpu.memory_space<vmem>>, vector<1x1x32xf32>
    %10 = vector.shape_cast %9 : vector<1x1x32xf32> to vector<1x32xf32>
    %c0_11 = arith.constant 0 : index
    %c0_12 = arith.constant 0 : index
    %c0_13 = arith.constant 0 : index
    %11 = vector.load %arg8[%c0_11, %c0_12, %c0_13] : memref<6x1x32xf32, #tpu.memory_space<vmem>>, vector<1x1x32xf32>
    %12 = vector.shape_cast %11 : vector<1x1x32xf32> to vector<1x32xf32>
    %cst_14 = arith.constant dense<0.000000e+00> : vector<8xf32>
    %13 = vector.multi_reduction <add>, %8, %cst_14 [1] : vector<8x32xf32> to vector<8xf32>
    %14 = vector.shape_cast %13 : vector<8xf32> to vector<8x1xf32>
    %cst_15 = arith.constant 3.200000e+01 : f32
    %15 = vector.broadcast %cst_15 : f32 to vector<8x1xf32>
    %16 = arith.divf %14, %15 : vector<8x1xf32>
    %17 = vector.broadcast %16 : vector<8x1xf32> to vector<8x32xf32>
    %18 = arith.subf %8, %17 : vector<8x32xf32>
    %19 = arith.mulf %18, %18 : vector<8x32xf32>
    %cst_16 = arith.constant dense<0.000000e+00> : vector<8xf32>
    %20 = vector.multi_reduction <add>, %19, %cst_16 [1] : vector<8x32xf32> to vector<8xf32>
    %21 = vector.shape_cast %20 : vector<8xf32> to vector<8x1xf32>
    %cst_17 = arith.constant 3.200000e+01 : f32
    %22 = vector.broadcast %cst_17 : f32 to vector<8x1xf32>
    %23 = arith.divf %21, %22 : vector<8x1xf32>
    %24 = vector.broadcast %16 : vector<8x1xf32> to vector<8x32xf32>
    %25 = arith.subf %8, %24 : vector<8x32xf32>
    %cst_18 = arith.constant 9.99999974E-6 : f32
    %26 = vector.broadcast %cst_18 : f32 to vector<8x1xf32>
    %27 = arith.addf %23, %26 : vector<8x1xf32>
    %28 = math.rsqrt %27 : vector<8x1xf32>
    %29 = vector.broadcast %28 : vector<8x1xf32> to vector<8x32xf32>
    %30 = arith.mulf %25, %29 : vector<8x32xf32>
    %31 = vector.broadcast %10 : vector<1x32xf32> to vector<8x32xf32>
    %32 = arith.mulf %30, %31 : vector<8x32xf32>
    %33 = vector.broadcast %12 : vector<1x32xf32> to vector<8x32xf32>
    %34 = arith.addf %32, %33 : vector<8x32xf32>
    %cst_19 = arith.constant 0.000000e+00 : f32
    %35 = vector.broadcast %cst_19 : f32 to vector<8x32xf32>
    %36 = arith.cmpf oge, %34, %35 : vector<8x32xf32>
    %cst_20 = arith.constant 0.00999999977 : f32
    %37 = vector.broadcast %cst_20 : f32 to vector<8x32xf32>
    %38 = arith.mulf %37, %34 : vector<8x32xf32>
    %39 = arith.select %36, %34, %38 : vector<8x32xi1>, vector<8x32xf32>
    %c1 = arith.constant 1 : index
    %c0_21 = arith.constant 0 : index
    %c0_22 = arith.constant 0 : index
    %40 = vector.load %arg5[%c1, %c0_21, %c0_22] : memref<6x32x32xf32, #tpu.memory_space<vmem>>, vector<1x32x32xf32>
    %41 = vector.shape_cast %40 : vector<1x32x32xf32> to vector<32x32xf32>
    %cst_23 = arith.constant dense<0.000000e+00> : vector<8x32xf32>
    %42 = tpu.matmul %39, %41, %cst_23 {dimension_numbers = #tpu.dot_dimension_numbers<[1], [0], [0], [1], [0, 0, 1, 1], [], []>} : vector<8x32xf32>, vector<32x32xf32>, vector<8x32xf32> -> vector<8x32xf32>
    %c1_24 = arith.constant 1 : index
    %c0_25 = arith.constant 0 : index
    %c0_26 = arith.constant 0 : index
    %43 = vector.load %arg6[%c1_24, %c0_25, %c0_26] : memref<6x1x32xf32, #tpu.memory_space<vmem>>, vector<1x1x32xf32>
    %44 = vector.shape_cast %43 : vector<1x1x32xf32> to vector<1x32xf32>
    %45 = vector.broadcast %44 : vector<1x32xf32> to vector<8x32xf32>
    %46 = arith.addf %42, %45 : vector<8x32xf32>
    %c1_27 = arith.constant 1 : index
    %c0_28 = arith.constant 0 : index
    %c0_29 = arith.constant 0 : index
    %47 = vector.load %arg7[%c1_27, %c0_28, %c0_29] : memref<6x1x32xf32, #tpu.memory_space<vmem>>, vector<1x1x32xf32>
    %48 = vector.shape_cast %47 : vector<1x1x32xf32> to vector<1x32xf32>
    %c1_30 = arith.constant 1 : index
    %c0_31 = arith.constant 0 : index
    %c0_32 = arith.constant 0 : index
    %49 = vector.load %arg8[%c1_30, %c0_31, %c0_32] : memref<6x1x32xf32, #tpu.memory_space<vmem>>, vector<1x1x32xf32>
    %50 = vector.shape_cast %49 : vector<1x1x32xf32> to vector<1x32xf32>
    %cst_33 = arith.constant dense<0.000000e+00> : vector<8xf32>
    %51 = vector.multi_reduction <add>, %46, %cst_33 [1] : vector<8x32xf32> to vector<8xf32>
    %52 = vector.shape_cast %51 : vector<8xf32> to vector<8x1xf32>
    %cst_34 = arith.constant 3.200000e+01 : f32
    %53 = vector.broadcast %cst_34 : f32 to vector<8x1xf32>
    %54 = arith.divf %52, %53 : vector<8x1xf32>
    %55 = vector.broadcast %54 : vector<8x1xf32> to vector<8x32xf32>
    %56 = arith.subf %46, %55 : vector<8x32xf32>
    %57 = arith.mulf %56, %56 : vector<8x32xf32>
    %cst_35 = arith.constant dense<0.000000e+00> : vector<8xf32>
    %58 = vector.multi_reduction <add>, %57, %cst_35 [1] : vector<8x32xf32> to vector<8xf32>
    %59 = vector.shape_cast %58 : vector<8xf32> to vector<8x1xf32>
    %cst_36 = arith.constant 3.200000e+01 : f32
    %60 = vector.broadcast %cst_36 : f32 to vector<8x1xf32>
    %61 = arith.divf %59, %60 : vector<8x1xf32>
    %62 = vector.broadcast %54 : vector<8x1xf32> to vector<8x32xf32>
    %63 = arith.subf %46, %62 : vector<8x32xf32>
    %cst_37 = arith.constant 9.99999974E-6 : f32
    %64 = vector.broadcast %cst_37 : f32 to vector<8x1xf32>
    %65 = arith.addf %61, %64 : vector<8x1xf32>
    %66 = math.rsqrt %65 : vector<8x1xf32>
    %67 = vector.broadcast %66 : vector<8x1xf32> to vector<8x32xf32>
    %68 = arith.mulf %63, %67 : vector<8x32xf32>
    %69 = vector.broadcast %48 : vector<1x32xf32> to vector<8x32xf32>
    %70 = arith.mulf %68, %69 : vector<8x32xf32>
    %71 = vector.broadcast %50 : vector<1x32xf32> to vector<8x32xf32>
    %72 = arith.addf %70, %71 : vector<8x32xf32>
    %cst_38 = arith.constant 0.000000e+00 : f32
    %73 = vector.broadcast %cst_38 : f32 to vector<8x32xf32>
    %74 = arith.cmpf oge, %72, %73 : vector<8x32xf32>
    %cst_39 = arith.constant 0.00999999977 : f32
    %75 = vector.broadcast %cst_39 : f32 to vector<8x32xf32>
    %76 = arith.mulf %75, %72 : vector<8x32xf32>
    %77 = arith.select %74, %72, %76 : vector<8x32xi1>, vector<8x32xf32>
    %c2 = arith.constant 2 : index
    %c0_40 = arith.constant 0 : index
    %c0_41 = arith.constant 0 : index
    %78 = vector.load %arg5[%c2, %c0_40, %c0_41] : memref<6x32x32xf32, #tpu.memory_space<vmem>>, vector<1x32x32xf32>
    %79 = vector.shape_cast %78 : vector<1x32x32xf32> to vector<32x32xf32>
    %cst_42 = arith.constant dense<0.000000e+00> : vector<8x32xf32>
    %80 = tpu.matmul %77, %79, %cst_42 {dimension_numbers = #tpu.dot_dimension_numbers<[1], [0], [0], [1], [0, 0, 1, 1], [], []>} : vector<8x32xf32>, vector<32x32xf32>, vector<8x32xf32> -> vector<8x32xf32>
    %c2_43 = arith.constant 2 : index
    %c0_44 = arith.constant 0 : index
    %c0_45 = arith.constant 0 : index
    %81 = vector.load %arg6[%c2_43, %c0_44, %c0_45] : memref<6x1x32xf32, #tpu.memory_space<vmem>>, vector<1x1x32xf32>
    %82 = vector.shape_cast %81 : vector<1x1x32xf32> to vector<1x32xf32>
    %83 = vector.broadcast %82 : vector<1x32xf32> to vector<8x32xf32>
    %84 = arith.addf %80, %83 : vector<8x32xf32>
    %c2_46 = arith.constant 2 : index
    %c0_47 = arith.constant 0 : index
    %c0_48 = arith.constant 0 : index
    %85 = vector.load %arg7[%c2_46, %c0_47, %c0_48] : memref<6x1x32xf32, #tpu.memory_space<vmem>>, vector<1x1x32xf32>
    %86 = vector.shape_cast %85 : vector<1x1x32xf32> to vector<1x32xf32>
    %c2_49 = arith.constant 2 : index
    %c0_50 = arith.constant 0 : index
    %c0_51 = arith.constant 0 : index
    %87 = vector.load %arg8[%c2_49, %c0_50, %c0_51] : memref<6x1x32xf32, #tpu.memory_space<vmem>>, vector<1x1x32xf32>
    %88 = vector.shape_cast %87 : vector<1x1x32xf32> to vector<1x32xf32>
    %cst_52 = arith.constant dense<0.000000e+00> : vector<8xf32>
    %89 = vector.multi_reduction <add>, %84, %cst_52 [1] : vector<8x32xf32> to vector<8xf32>
    %90 = vector.shape_cast %89 : vector<8xf32> to vector<8x1xf32>
    %cst_53 = arith.constant 3.200000e+01 : f32
    %91 = vector.broadcast %cst_53 : f32 to vector<8x1xf32>
    %92 = arith.divf %90, %91 : vector<8x1xf32>
    %93 = vector.broadcast %92 : vector<8x1xf32> to vector<8x32xf32>
    %94 = arith.subf %84, %93 : vector<8x32xf32>
    %95 = arith.mulf %94, %94 : vector<8x32xf32>
    %cst_54 = arith.constant dense<0.000000e+00> : vector<8xf32>
    %96 = vector.multi_reduction <add>, %95, %cst_54 [1] : vector<8x32xf32> to vector<8xf32>
    %97 = vector.shape_cast %96 : vector<8xf32> to vector<8x1xf32>
    %cst_55 = arith.constant 3.200000e+01 : f32
    %98 = vector.broadcast %cst_55 : f32 to vector<8x1xf32>
    %99 = arith.divf %97, %98 : vector<8x1xf32>
    %100 = vector.broadcast %92 : vector<8x1xf32> to vector<8x32xf32>
    %101 = arith.subf %84, %100 : vector<8x32xf32>
    %cst_56 = arith.constant 9.99999974E-6 : f32
    %102 = vector.broadcast %cst_56 : f32 to vector<8x1xf32>
    %103 = arith.addf %99, %102 : vector<8x1xf32>
    %104 = math.rsqrt %103 : vector<8x1xf32>
    %105 = vector.broadcast %104 : vector<8x1xf32> to vector<8x32xf32>
    %106 = arith.mulf %101, %105 : vector<8x32xf32>
    %107 = vector.broadcast %86 : vector<1x32xf32> to vector<8x32xf32>
    %108 = arith.mulf %106, %107 : vector<8x32xf32>
    %109 = vector.broadcast %88 : vector<1x32xf32> to vector<8x32xf32>
    %110 = arith.addf %108, %109 : vector<8x32xf32>
    %cst_57 = arith.constant 0.000000e+00 : f32
    %111 = vector.broadcast %cst_57 : f32 to vector<8x32xf32>
    %112 = arith.cmpf oge, %110, %111 : vector<8x32xf32>
    %cst_58 = arith.constant 0.00999999977 : f32
    %113 = vector.broadcast %cst_58 : f32 to vector<8x32xf32>
    %114 = arith.mulf %113, %110 : vector<8x32xf32>
    %115 = arith.select %112, %110, %114 : vector<8x32xi1>, vector<8x32xf32>
    %c3 = arith.constant 3 : index
    %c0_59 = arith.constant 0 : index
    %c0_60 = arith.constant 0 : index
    %116 = vector.load %arg5[%c3, %c0_59, %c0_60] : memref<6x32x32xf32, #tpu.memory_space<vmem>>, vector<1x32x32xf32>
    %117 = vector.shape_cast %116 : vector<1x32x32xf32> to vector<32x32xf32>
    %cst_61 = arith.constant dense<0.000000e+00> : vector<8x32xf32>
    %118 = tpu.matmul %115, %117, %cst_61 {dimension_numbers = #tpu.dot_dimension_numbers<[1], [0], [0], [1], [0, 0, 1, 1], [], []>} : vector<8x32xf32>, vector<32x32xf32>, vector<8x32xf32> -> vector<8x32xf32>
    %c3_62 = arith.constant 3 : index
    %c0_63 = arith.constant 0 : index
    %c0_64 = arith.constant 0 : index
    %119 = vector.load %arg6[%c3_62, %c0_63, %c0_64] : memref<6x1x32xf32, #tpu.memory_space<vmem>>, vector<1x1x32xf32>
    %120 = vector.shape_cast %119 : vector<1x1x32xf32> to vector<1x32xf32>
    %121 = vector.broadcast %120 : vector<1x32xf32> to vector<8x32xf32>
    %122 = arith.addf %118, %121 : vector<8x32xf32>
    %c3_65 = arith.constant 3 : index
    %c0_66 = arith.constant 0 : index
    %c0_67 = arith.constant 0 : index
    %123 = vector.load %arg7[%c3_65, %c0_66, %c0_67] : memref<6x1x32xf32, #tpu.memory_space<vmem>>, vector<1x1x32xf32>
    %124 = vector.shape_cast %123 : vector<1x1x32xf32> to vector<1x32xf32>
    %c3_68 = arith.constant 3 : index
    %c0_69 = arith.constant 0 : index
    %c0_70 = arith.constant 0 : index
    %125 = vector.load %arg8[%c3_68, %c0_69, %c0_70] : memref<6x1x32xf32, #tpu.memory_space<vmem>>, vector<1x1x32xf32>
    %126 = vector.shape_cast %125 : vector<1x1x32xf32> to vector<1x32xf32>
    %cst_71 = arith.constant dense<0.000000e+00> : vector<8xf32>
    %127 = vector.multi_reduction <add>, %122, %cst_71 [1] : vector<8x32xf32> to vector<8xf32>
    %128 = vector.shape_cast %127 : vector<8xf32> to vector<8x1xf32>
    %cst_72 = arith.constant 3.200000e+01 : f32
    %129 = vector.broadcast %cst_72 : f32 to vector<8x1xf32>
    %130 = arith.divf %128, %129 : vector<8x1xf32>
    %131 = vector.broadcast %130 : vector<8x1xf32> to vector<8x32xf32>
    %132 = arith.subf %122, %131 : vector<8x32xf32>
    %133 = arith.mulf %132, %132 : vector<8x32xf32>
    %cst_73 = arith.constant dense<0.000000e+00> : vector<8xf32>
    %134 = vector.multi_reduction <add>, %133, %cst_73 [1] : vector<8x32xf32> to vector<8xf32>
    %135 = vector.shape_cast %134 : vector<8xf32> to vector<8x1xf32>
    %cst_74 = arith.constant 3.200000e+01 : f32
    %136 = vector.broadcast %cst_74 : f32 to vector<8x1xf32>
    %137 = arith.divf %135, %136 : vector<8x1xf32>
    %138 = vector.broadcast %130 : vector<8x1xf32> to vector<8x32xf32>
    %139 = arith.subf %122, %138 : vector<8x32xf32>
    %cst_75 = arith.constant 9.99999974E-6 : f32
    %140 = vector.broadcast %cst_75 : f32 to vector<8x1xf32>
    %141 = arith.addf %137, %140 : vector<8x1xf32>
    %142 = math.rsqrt %141 : vector<8x1xf32>
    %143 = vector.broadcast %142 : vector<8x1xf32> to vector<8x32xf32>
    %144 = arith.mulf %139, %143 : vector<8x32xf32>
    %145 = vector.broadcast %124 : vector<1x32xf32> to vector<8x32xf32>
    %146 = arith.mulf %144, %145 : vector<8x32xf32>
    %147 = vector.broadcast %126 : vector<1x32xf32> to vector<8x32xf32>
    %148 = arith.addf %146, %147 : vector<8x32xf32>
    %cst_76 = arith.constant 0.000000e+00 : f32
    %149 = vector.broadcast %cst_76 : f32 to vector<8x32xf32>
    %150 = arith.cmpf oge, %148, %149 : vector<8x32xf32>
    %cst_77 = arith.constant 0.00999999977 : f32
    %151 = vector.broadcast %cst_77 : f32 to vector<8x32xf32>
    %152 = arith.mulf %151, %148 : vector<8x32xf32>
    %153 = arith.select %150, %148, %152 : vector<8x32xi1>, vector<8x32xf32>
    %c4 = arith.constant 4 : index
    %c0_78 = arith.constant 0 : index
    %c0_79 = arith.constant 0 : index
    %154 = vector.load %arg5[%c4, %c0_78, %c0_79] : memref<6x32x32xf32, #tpu.memory_space<vmem>>, vector<1x32x32xf32>
    %155 = vector.shape_cast %154 : vector<1x32x32xf32> to vector<32x32xf32>
    %cst_80 = arith.constant dense<0.000000e+00> : vector<8x32xf32>
    %156 = tpu.matmul %153, %155, %cst_80 {dimension_numbers = #tpu.dot_dimension_numbers<[1], [0], [0], [1], [0, 0, 1, 1], [], []>} : vector<8x32xf32>, vector<32x32xf32>, vector<8x32xf32> -> vector<8x32xf32>
    %c4_81 = arith.constant 4 : index
    %c0_82 = arith.constant 0 : index
    %c0_83 = arith.constant 0 : index
    %157 = vector.load %arg6[%c4_81, %c0_82, %c0_83] : memref<6x1x32xf32, #tpu.memory_space<vmem>>, vector<1x1x32xf32>
    %158 = vector.shape_cast %157 : vector<1x1x32xf32> to vector<1x32xf32>
    %159 = vector.broadcast %158 : vector<1x32xf32> to vector<8x32xf32>
    %160 = arith.addf %156, %159 : vector<8x32xf32>
    %c4_84 = arith.constant 4 : index
    %c0_85 = arith.constant 0 : index
    %c0_86 = arith.constant 0 : index
    %161 = vector.load %arg7[%c4_84, %c0_85, %c0_86] : memref<6x1x32xf32, #tpu.memory_space<vmem>>, vector<1x1x32xf32>
    %162 = vector.shape_cast %161 : vector<1x1x32xf32> to vector<1x32xf32>
    %c4_87 = arith.constant 4 : index
    %c0_88 = arith.constant 0 : index
    %c0_89 = arith.constant 0 : index
    %163 = vector.load %arg8[%c4_87, %c0_88, %c0_89] : memref<6x1x32xf32, #tpu.memory_space<vmem>>, vector<1x1x32xf32>
    %164 = vector.shape_cast %163 : vector<1x1x32xf32> to vector<1x32xf32>
    %cst_90 = arith.constant dense<0.000000e+00> : vector<8xf32>
    %165 = vector.multi_reduction <add>, %160, %cst_90 [1] : vector<8x32xf32> to vector<8xf32>
    %166 = vector.shape_cast %165 : vector<8xf32> to vector<8x1xf32>
    %cst_91 = arith.constant 3.200000e+01 : f32
    %167 = vector.broadcast %cst_91 : f32 to vector<8x1xf32>
    %168 = arith.divf %166, %167 : vector<8x1xf32>
    %169 = vector.broadcast %168 : vector<8x1xf32> to vector<8x32xf32>
    %170 = arith.subf %160, %169 : vector<8x32xf32>
    %171 = arith.mulf %170, %170 : vector<8x32xf32>
    %cst_92 = arith.constant dense<0.000000e+00> : vector<8xf32>
    %172 = vector.multi_reduction <add>, %171, %cst_92 [1] : vector<8x32xf32> to vector<8xf32>
    %173 = vector.shape_cast %172 : vector<8xf32> to vector<8x1xf32>
    %cst_93 = arith.constant 3.200000e+01 : f32
    %174 = vector.broadcast %cst_93 : f32 to vector<8x1xf32>
    %175 = arith.divf %173, %174 : vector<8x1xf32>
    %176 = vector.broadcast %168 : vector<8x1xf32> to vector<8x32xf32>
    %177 = arith.subf %160, %176 : vector<8x32xf32>
    %cst_94 = arith.constant 9.99999974E-6 : f32
    %178 = vector.broadcast %cst_94 : f32 to vector<8x1xf32>
    %179 = arith.addf %175, %178 : vector<8x1xf32>
    %180 = math.rsqrt %179 : vector<8x1xf32>
    %181 = vector.broadcast %180 : vector<8x1xf32> to vector<8x32xf32>
    %182 = arith.mulf %177, %181 : vector<8x32xf32>
    %183 = vector.broadcast %162 : vector<1x32xf32> to vector<8x32xf32>
    %184 = arith.mulf %182, %183 : vector<8x32xf32>
    %185 = vector.broadcast %164 : vector<1x32xf32> to vector<8x32xf32>
    %186 = arith.addf %184, %185 : vector<8x32xf32>
    %cst_95 = arith.constant 0.000000e+00 : f32
    %187 = vector.broadcast %cst_95 : f32 to vector<8x32xf32>
    %188 = arith.cmpf oge, %186, %187 : vector<8x32xf32>
    %cst_96 = arith.constant 0.00999999977 : f32
    %189 = vector.broadcast %cst_96 : f32 to vector<8x32xf32>
    %190 = arith.mulf %189, %186 : vector<8x32xf32>
    %191 = arith.select %188, %186, %190 : vector<8x32xi1>, vector<8x32xf32>
    %c5 = arith.constant 5 : index
    %c0_97 = arith.constant 0 : index
    %c0_98 = arith.constant 0 : index
    %192 = vector.load %arg5[%c5, %c0_97, %c0_98] : memref<6x32x32xf32, #tpu.memory_space<vmem>>, vector<1x32x32xf32>
    %193 = vector.shape_cast %192 : vector<1x32x32xf32> to vector<32x32xf32>
    %cst_99 = arith.constant dense<0.000000e+00> : vector<8x32xf32>
    %194 = tpu.matmul %191, %193, %cst_99 {dimension_numbers = #tpu.dot_dimension_numbers<[1], [0], [0], [1], [0, 0, 1, 1], [], []>} : vector<8x32xf32>, vector<32x32xf32>, vector<8x32xf32> -> vector<8x32xf32>
    %c5_100 = arith.constant 5 : index
    %c0_101 = arith.constant 0 : index
    %c0_102 = arith.constant 0 : index
    %195 = vector.load %arg6[%c5_100, %c0_101, %c0_102] : memref<6x1x32xf32, #tpu.memory_space<vmem>>, vector<1x1x32xf32>
    %196 = vector.shape_cast %195 : vector<1x1x32xf32> to vector<1x32xf32>
    %197 = vector.broadcast %196 : vector<1x32xf32> to vector<8x32xf32>
    %198 = arith.addf %194, %197 : vector<8x32xf32>
    %c5_103 = arith.constant 5 : index
    %c0_104 = arith.constant 0 : index
    %c0_105 = arith.constant 0 : index
    %199 = vector.load %arg7[%c5_103, %c0_104, %c0_105] : memref<6x1x32xf32, #tpu.memory_space<vmem>>, vector<1x1x32xf32>
    %200 = vector.shape_cast %199 : vector<1x1x32xf32> to vector<1x32xf32>
    %c5_106 = arith.constant 5 : index
    %c0_107 = arith.constant 0 : index
    %c0_108 = arith.constant 0 : index
    %201 = vector.load %arg8[%c5_106, %c0_107, %c0_108] : memref<6x1x32xf32, #tpu.memory_space<vmem>>, vector<1x1x32xf32>
    %202 = vector.shape_cast %201 : vector<1x1x32xf32> to vector<1x32xf32>
    %cst_109 = arith.constant dense<0.000000e+00> : vector<8xf32>
    %203 = vector.multi_reduction <add>, %198, %cst_109 [1] : vector<8x32xf32> to vector<8xf32>
    %204 = vector.shape_cast %203 : vector<8xf32> to vector<8x1xf32>
    %cst_110 = arith.constant 3.200000e+01 : f32
    %205 = vector.broadcast %cst_110 : f32 to vector<8x1xf32>
    %206 = arith.divf %204, %205 : vector<8x1xf32>
    %207 = vector.broadcast %206 : vector<8x1xf32> to vector<8x32xf32>
    %208 = arith.subf %198, %207 : vector<8x32xf32>
    %209 = arith.mulf %208, %208 : vector<8x32xf32>
    %cst_111 = arith.constant dense<0.000000e+00> : vector<8xf32>
    %210 = vector.multi_reduction <add>, %209, %cst_111 [1] : vector<8x32xf32> to vector<8xf32>
    %211 = vector.shape_cast %210 : vector<8xf32> to vector<8x1xf32>
    %cst_112 = arith.constant 3.200000e+01 : f32
    %212 = vector.broadcast %cst_112 : f32 to vector<8x1xf32>
    %213 = arith.divf %211, %212 : vector<8x1xf32>
    %214 = vector.broadcast %206 : vector<8x1xf32> to vector<8x32xf32>
    %215 = arith.subf %198, %214 : vector<8x32xf32>
    %cst_113 = arith.constant 9.99999974E-6 : f32
    %216 = vector.broadcast %cst_113 : f32 to vector<8x1xf32>
    %217 = arith.addf %213, %216 : vector<8x1xf32>
    %218 = math.rsqrt %217 : vector<8x1xf32>
    %219 = vector.broadcast %218 : vector<8x1xf32> to vector<8x32xf32>
    %220 = arith.mulf %215, %219 : vector<8x32xf32>
    %221 = vector.broadcast %200 : vector<1x32xf32> to vector<8x32xf32>
    %222 = arith.mulf %220, %221 : vector<8x32xf32>
    %223 = vector.broadcast %202 : vector<1x32xf32> to vector<8x32xf32>
    %224 = arith.addf %222, %223 : vector<8x32xf32>
    %cst_114 = arith.constant 0.000000e+00 : f32
    %225 = vector.broadcast %cst_114 : f32 to vector<8x32xf32>
    %226 = arith.cmpf oge, %224, %225 : vector<8x32xf32>
    %cst_115 = arith.constant 0.00999999977 : f32
    %227 = vector.broadcast %cst_115 : f32 to vector<8x32xf32>
    %228 = arith.mulf %227, %224 : vector<8x32xf32>
    %229 = arith.select %226, %224, %228 : vector<8x32xi1>, vector<8x32xf32>
    %c0_116 = arith.constant 0 : index
    %c0_117 = arith.constant 0 : index
    %230 = vector.load %arg31[%c0_116, %c0_117] : memref<8x32xf32, #tpu.memory_space<vmem>>, vector<8x32xf32>
    %231 = arith.addf %229, %230 : vector<8x32xf32>
    %cst_118 = arith.constant 0.000000e+00 : f32
    %232 = vector.broadcast %cst_118 : f32 to vector<8x32xf32>
    %c0_119 = arith.constant 0 : index
    %c0_120 = arith.constant 0 : index
    %c0_121 = arith.constant 0 : index
    %233 = vector.load %arg9[%c0_119, %c0_120, %c0_121] : memref<8x32x4xf32, #tpu.memory_space<vmem>>, vector<1x32x4xf32>
    %234 = vector.shape_cast %233 : vector<1x32x4xf32> to vector<32x4xf32>
    %cst_122 = arith.constant dense<0.000000e+00> : vector<8x4xf32>
    %235 = tpu.matmul %231, %234, %cst_122 {dimension_numbers = #tpu.dot_dimension_numbers<[1], [0], [0], [1], [0, 0, 1, 1], [], []>} : vector<8x32xf32>, vector<32x4xf32>, vector<8x4xf32> -> vector<8x4xf32>
    %c0_123 = arith.constant 0 : index
    %c0_124 = arith.constant 0 : index
    %c0_125 = arith.constant 0 : index
    %236 = vector.load %arg10[%c0_123, %c0_124, %c0_125] : memref<8x1x4xf32, #tpu.memory_space<vmem>>, vector<1x1x4xf32>
    %237 = vector.shape_cast %236 : vector<1x1x4xf32> to vector<1x4xf32>
    %238 = vector.broadcast %237 : vector<1x4xf32> to vector<8x4xf32>
    %239 = arith.addf %235, %238 : vector<8x4xf32>
    %c0_126 = arith.constant 0 : index
    %c0_127 = arith.constant 0 : index
    %c0_128 = arith.constant 0 : index
    %240 = vector.load %arg11[%c0_126, %c0_127, %c0_128] : memref<8x32x4xf32, #tpu.memory_space<vmem>>, vector<1x32x4xf32>
    %241 = vector.shape_cast %240 : vector<1x32x4xf32> to vector<32x4xf32>
    %cst_129 = arith.constant dense<0.000000e+00> : vector<8x4xf32>
    %242 = tpu.matmul %231, %241, %cst_129 {dimension_numbers = #tpu.dot_dimension_numbers<[1], [0], [0], [1], [0, 0, 1, 1], [], []>} : vector<8x32xf32>, vector<32x4xf32>, vector<8x4xf32> -> vector<8x4xf32>
    %c0_130 = arith.constant 0 : index
    %c0_131 = arith.constant 0 : index
    %c0_132 = arith.constant 0 : index
    %243 = vector.load %arg12[%c0_130, %c0_131, %c0_132] : memref<8x1x4xf32, #tpu.memory_space<vmem>>, vector<1x1x4xf32>
    %244 = vector.shape_cast %243 : vector<1x1x4xf32> to vector<1x4xf32>
    %245 = vector.broadcast %244 : vector<1x4xf32> to vector<8x4xf32>
    %246 = arith.addf %242, %245 : vector<8x4xf32>
    %c0_133 = arith.constant 0 : index
    %c0_134 = arith.constant 0 : index
    %c0_135 = arith.constant 0 : index
    %247 = vector.load %arg13[%c0_133, %c0_134, %c0_135] : memref<8x32x4xf32, #tpu.memory_space<vmem>>, vector<1x32x4xf32>
    %248 = vector.shape_cast %247 : vector<1x32x4xf32> to vector<32x4xf32>
    %cst_136 = arith.constant dense<0.000000e+00> : vector<8x4xf32>
    %249 = tpu.matmul %231, %248, %cst_136 {dimension_numbers = #tpu.dot_dimension_numbers<[1], [0], [0], [1], [0, 0, 1, 1], [], []>} : vector<8x32xf32>, vector<32x4xf32>, vector<8x4xf32> -> vector<8x4xf32>
    %c0_137 = arith.constant 0 : index
    %c0_138 = arith.constant 0 : index
    %c0_139 = arith.constant 0 : index
    %250 = vector.load %arg14[%c0_137, %c0_138, %c0_139] : memref<8x1x4xf32, #tpu.memory_space<vmem>>, vector<1x1x4xf32>
    %251 = vector.shape_cast %250 : vector<1x1x4xf32> to vector<1x4xf32>
    %252 = vector.broadcast %251 : vector<1x4xf32> to vector<8x4xf32>
    %253 = arith.addf %249, %252 : vector<8x4xf32>
    %cst_140 = arith.constant dense<0.000000e+00> : vector<8x8xf32>
    %254 = tpu.matmul %239, %246, %cst_140 {dimension_numbers = #tpu.dot_dimension_numbers<[1], [1], [0], [0], [0, 0, 1, 0], [], []>} : vector<8x4xf32>, vector<8x4xf32>, vector<8x8xf32> -> vector<8x8xf32>
    %cst_141 = arith.constant 5.000000e-01 : f32
    %255 = vector.broadcast %cst_141 : f32 to vector<8x8xf32>
    %256 = arith.mulf %254, %255 : vector<8x8xf32>
    %cst_142 = arith.constant dense<0xFF800000> : vector<8xf32>
    %257 = vector.multi_reduction <maximumf>, %256, %cst_142 [1] : vector<8x8xf32> to vector<8xf32>
    %258 = vector.shape_cast %257 : vector<8xf32> to vector<8x1xf32>
    %259 = vector.broadcast %258 : vector<8x1xf32> to vector<8x8xf32>
    %260 = arith.subf %256, %259 : vector<8x8xf32>
    %261 = math.exp %260 : vector<8x8xf32>
    %cst_143 = arith.constant dense<0.000000e+00> : vector<8xf32>
    %262 = vector.multi_reduction <add>, %261, %cst_143 [1] : vector<8x8xf32> to vector<8xf32>
    %263 = vector.shape_cast %262 : vector<8xf32> to vector<8x1xf32>
    %264 = tpu.reciprocal %263 {approx = true} : vector<8x1xf32> -> vector<8x1xf32>
    %265 = vector.broadcast %264 : vector<8x1xf32> to vector<8x8xf32>
    %266 = arith.mulf %261, %265 : vector<8x8xf32>
    %cst_144 = arith.constant dense<0.000000e+00> : vector<8x4xf32>
    %267 = tpu.matmul %266, %253, %cst_144 {dimension_numbers = #tpu.dot_dimension_numbers<[1], [0], [0], [1], [0, 0, 1, 1], [], []>} : vector<8x8xf32>, vector<8x4xf32>, vector<8x4xf32> -> vector<8x4xf32>
    %c0_145 = arith.constant 0 : index
    %c0_146 = arith.constant 0 : index
    %c0_147 = arith.constant 0 : index
    %268 = vector.load %arg15[%c0_145, %c0_146, %c0_147] : memref<8x4x32xf32, #tpu.memory_space<vmem>>, vector<1x4x32xf32>
    %269 = vector.shape_cast %268 : vector<1x4x32xf32> to vector<4x32xf32>
    %cst_148 = arith.constant dense<0.000000e+00> : vector<8x32xf32>
    %270 = tpu.matmul %267, %269, %cst_148 {dimension_numbers = #tpu.dot_dimension_numbers<[1], [0], [0], [1], [0, 0, 1, 1], [], []>} : vector<8x4xf32>, vector<4x32xf32>, vector<8x32xf32> -> vector<8x32xf32>
    %271 = arith.addf %232, %270 : vector<8x32xf32>
    %c1_149 = arith.constant 1 : index
    %c0_150 = arith.constant 0 : index
    %c0_151 = arith.constant 0 : index
    %272 = vector.load %arg9[%c1_149, %c0_150, %c0_151] : memref<8x32x4xf32, #tpu.memory_space<vmem>>, vector<1x32x4xf32>
    %273 = vector.shape_cast %272 : vector<1x32x4xf32> to vector<32x4xf32>
    %cst_152 = arith.constant dense<0.000000e+00> : vector<8x4xf32>
    %274 = tpu.matmul %231, %273, %cst_152 {dimension_numbers = #tpu.dot_dimension_numbers<[1], [0], [0], [1], [0, 0, 1, 1], [], []>} : vector<8x32xf32>, vector<32x4xf32>, vector<8x4xf32> -> vector<8x4xf32>
    %c1_153 = arith.constant 1 : index
    %c0_154 = arith.constant 0 : index
    %c0_155 = arith.constant 0 : index
    %275 = vector.load %arg10[%c1_153, %c0_154, %c0_155] : memref<8x1x4xf32, #tpu.memory_space<vmem>>, vector<1x1x4xf32>
    %276 = vector.shape_cast %275 : vector<1x1x4xf32> to vector<1x4xf32>
    %277 = vector.broadcast %276 : vector<1x4xf32> to vector<8x4xf32>
    %278 = arith.addf %274, %277 : vector<8x4xf32>
    %c1_156 = arith.constant 1 : index
    %c0_157 = arith.constant 0 : index
    %c0_158 = arith.constant 0 : index
    %279 = vector.load %arg11[%c1_156, %c0_157, %c0_158] : memref<8x32x4xf32, #tpu.memory_space<vmem>>, vector<1x32x4xf32>
    %280 = vector.shape_cast %279 : vector<1x32x4xf32> to vector<32x4xf32>
    %cst_159 = arith.constant dense<0.000000e+00> : vector<8x4xf32>
    %281 = tpu.matmul %231, %280, %cst_159 {dimension_numbers = #tpu.dot_dimension_numbers<[1], [0], [0], [1], [0, 0, 1, 1], [], []>} : vector<8x32xf32>, vector<32x4xf32>, vector<8x4xf32> -> vector<8x4xf32>
    %c1_160 = arith.constant 1 : index
    %c0_161 = arith.constant 0 : index
    %c0_162 = arith.constant 0 : index
    %282 = vector.load %arg12[%c1_160, %c0_161, %c0_162] : memref<8x1x4xf32, #tpu.memory_space<vmem>>, vector<1x1x4xf32>
    %283 = vector.shape_cast %282 : vector<1x1x4xf32> to vector<1x4xf32>
    %284 = vector.broadcast %283 : vector<1x4xf32> to vector<8x4xf32>
    %285 = arith.addf %281, %284 : vector<8x4xf32>
    %c1_163 = arith.constant 1 : index
    %c0_164 = arith.constant 0 : index
    %c0_165 = arith.constant 0 : index
    %286 = vector.load %arg13[%c1_163, %c0_164, %c0_165] : memref<8x32x4xf32, #tpu.memory_space<vmem>>, vector<1x32x4xf32>
    %287 = vector.shape_cast %286 : vector<1x32x4xf32> to vector<32x4xf32>
    %cst_166 = arith.constant dense<0.000000e+00> : vector<8x4xf32>
    %288 = tpu.matmul %231, %287, %cst_166 {dimension_numbers = #tpu.dot_dimension_numbers<[1], [0], [0], [1], [0, 0, 1, 1], [], []>} : vector<8x32xf32>, vector<32x4xf32>, vector<8x4xf32> -> vector<8x4xf32>
    %c1_167 = arith.constant 1 : index
    %c0_168 = arith.constant 0 : index
    %c0_169 = arith.constant 0 : index
    %289 = vector.load %arg14[%c1_167, %c0_168, %c0_169] : memref<8x1x4xf32, #tpu.memory_space<vmem>>, vector<1x1x4xf32>
    %290 = vector.shape_cast %289 : vector<1x1x4xf32> to vector<1x4xf32>
    %291 = vector.broadcast %290 : vector<1x4xf32> to vector<8x4xf32>
    %292 = arith.addf %288, %291 : vector<8x4xf32>
    %cst_170 = arith.constant dense<0.000000e+00> : vector<8x8xf32>
    %293 = tpu.matmul %278, %285, %cst_170 {dimension_numbers = #tpu.dot_dimension_numbers<[1], [1], [0], [0], [0, 0, 1, 0], [], []>} : vector<8x4xf32>, vector<8x4xf32>, vector<8x8xf32> -> vector<8x8xf32>
    %cst_171 = arith.constant 5.000000e-01 : f32
    %294 = vector.broadcast %cst_171 : f32 to vector<8x8xf32>
    %295 = arith.mulf %293, %294 : vector<8x8xf32>
    %cst_172 = arith.constant dense<0xFF800000> : vector<8xf32>
    %296 = vector.multi_reduction <maximumf>, %295, %cst_172 [1] : vector<8x8xf32> to vector<8xf32>
    %297 = vector.shape_cast %296 : vector<8xf32> to vector<8x1xf32>
    %298 = vector.broadcast %297 : vector<8x1xf32> to vector<8x8xf32>
    %299 = arith.subf %295, %298 : vector<8x8xf32>
    %300 = math.exp %299 : vector<8x8xf32>
    %cst_173 = arith.constant dense<0.000000e+00> : vector<8xf32>
    %301 = vector.multi_reduction <add>, %300, %cst_173 [1] : vector<8x8xf32> to vector<8xf32>
    %302 = vector.shape_cast %301 : vector<8xf32> to vector<8x1xf32>
    %303 = tpu.reciprocal %302 {approx = true} : vector<8x1xf32> -> vector<8x1xf32>
    %304 = vector.broadcast %303 : vector<8x1xf32> to vector<8x8xf32>
    %305 = arith.mulf %300, %304 : vector<8x8xf32>
    %cst_174 = arith.constant dense<0.000000e+00> : vector<8x4xf32>
    %306 = tpu.matmul %305, %292, %cst_174 {dimension_numbers = #tpu.dot_dimension_numbers<[1], [0], [0], [1], [0, 0, 1, 1], [], []>} : vector<8x8xf32>, vector<8x4xf32>, vector<8x4xf32> -> vector<8x4xf32>
    %c1_175 = arith.constant 1 : index
    %c0_176 = arith.constant 0 : index
    %c0_177 = arith.constant 0 : index
    %307 = vector.load %arg15[%c1_175, %c0_176, %c0_177] : memref<8x4x32xf32, #tpu.memory_space<vmem>>, vector<1x4x32xf32>
    %308 = vector.shape_cast %307 : vector<1x4x32xf32> to vector<4x32xf32>
    %cst_178 = arith.constant dense<0.000000e+00> : vector<8x32xf32>
    %309 = tpu.matmul %306, %308, %cst_178 {dimension_numbers = #tpu.dot_dimension_numbers<[1], [0], [0], [1], [0, 0, 1, 1], [], []>} : vector<8x4xf32>, vector<4x32xf32>, vector<8x32xf32> -> vector<8x32xf32>
    %310 = arith.addf %271, %309 : vector<8x32xf32>
    %c2_179 = arith.constant 2 : index
    %c0_180 = arith.constant 0 : index
    %c0_181 = arith.constant 0 : index
    %311 = vector.load %arg9[%c2_179, %c0_180, %c0_181] : memref<8x32x4xf32, #tpu.memory_space<vmem>>, vector<1x32x4xf32>
    %312 = vector.shape_cast %311 : vector<1x32x4xf32> to vector<32x4xf32>
    %cst_182 = arith.constant dense<0.000000e+00> : vector<8x4xf32>
    %313 = tpu.matmul %231, %312, %cst_182 {dimension_numbers = #tpu.dot_dimension_numbers<[1], [0], [0], [1], [0, 0, 1, 1], [], []>} : vector<8x32xf32>, vector<32x4xf32>, vector<8x4xf32> -> vector<8x4xf32>
    %c2_183 = arith.constant 2 : index
    %c0_184 = arith.constant 0 : index
    %c0_185 = arith.constant 0 : index
    %314 = vector.load %arg10[%c2_183, %c0_184, %c0_185] : memref<8x1x4xf32, #tpu.memory_space<vmem>>, vector<1x1x4xf32>
    %315 = vector.shape_cast %314 : vector<1x1x4xf32> to vector<1x4xf32>
    %316 = vector.broadcast %315 : vector<1x4xf32> to vector<8x4xf32>
    %317 = arith.addf %313, %316 : vector<8x4xf32>
    %c2_186 = arith.constant 2 : index
    %c0_187 = arith.constant 0 : index
    %c0_188 = arith.constant 0 : index
    %318 = vector.load %arg11[%c2_186, %c0_187, %c0_188] : memref<8x32x4xf32, #tpu.memory_space<vmem>>, vector<1x32x4xf32>
    %319 = vector.shape_cast %318 : vector<1x32x4xf32> to vector<32x4xf32>
    %cst_189 = arith.constant dense<0.000000e+00> : vector<8x4xf32>
    %320 = tpu.matmul %231, %319, %cst_189 {dimension_numbers = #tpu.dot_dimension_numbers<[1], [0], [0], [1], [0, 0, 1, 1], [], []>} : vector<8x32xf32>, vector<32x4xf32>, vector<8x4xf32> -> vector<8x4xf32>
    %c2_190 = arith.constant 2 : index
    %c0_191 = arith.constant 0 : index
    %c0_192 = arith.constant 0 : index
    %321 = vector.load %arg12[%c2_190, %c0_191, %c0_192] : memref<8x1x4xf32, #tpu.memory_space<vmem>>, vector<1x1x4xf32>
    %322 = vector.shape_cast %321 : vector<1x1x4xf32> to vector<1x4xf32>
    %323 = vector.broadcast %322 : vector<1x4xf32> to vector<8x4xf32>
    %324 = arith.addf %320, %323 : vector<8x4xf32>
    %c2_193 = arith.constant 2 : index
    %c0_194 = arith.constant 0 : index
    %c0_195 = arith.constant 0 : index
    %325 = vector.load %arg13[%c2_193, %c0_194, %c0_195] : memref<8x32x4xf32, #tpu.memory_space<vmem>>, vector<1x32x4xf32>
    %326 = vector.shape_cast %325 : vector<1x32x4xf32> to vector<32x4xf32>
    %cst_196 = arith.constant dense<0.000000e+00> : vector<8x4xf32>
    %327 = tpu.matmul %231, %326, %cst_196 {dimension_numbers = #tpu.dot_dimension_numbers<[1], [0], [0], [1], [0, 0, 1, 1], [], []>} : vector<8x32xf32>, vector<32x4xf32>, vector<8x4xf32> -> vector<8x4xf32>
    %c2_197 = arith.constant 2 : index
    %c0_198 = arith.constant 0 : index
    %c0_199 = arith.constant 0 : index
    %328 = vector.load %arg14[%c2_197, %c0_198, %c0_199] : memref<8x1x4xf32, #tpu.memory_space<vmem>>, vector<1x1x4xf32>
    %329 = vector.shape_cast %328 : vector<1x1x4xf32> to vector<1x4xf32>
    %330 = vector.broadcast %329 : vector<1x4xf32> to vector<8x4xf32>
    %331 = arith.addf %327, %330 : vector<8x4xf32>
    %cst_200 = arith.constant dense<0.000000e+00> : vector<8x8xf32>
    %332 = tpu.matmul %317, %324, %cst_200 {dimension_numbers = #tpu.dot_dimension_numbers<[1], [1], [0], [0], [0, 0, 1, 0], [], []>} : vector<8x4xf32>, vector<8x4xf32>, vector<8x8xf32> -> vector<8x8xf32>
    %cst_201 = arith.constant 5.000000e-01 : f32
    %333 = vector.broadcast %cst_201 : f32 to vector<8x8xf32>
    %334 = arith.mulf %332, %333 : vector<8x8xf32>
    %cst_202 = arith.constant dense<0xFF800000> : vector<8xf32>
    %335 = vector.multi_reduction <maximumf>, %334, %cst_202 [1] : vector<8x8xf32> to vector<8xf32>
    %336 = vector.shape_cast %335 : vector<8xf32> to vector<8x1xf32>
    %337 = vector.broadcast %336 : vector<8x1xf32> to vector<8x8xf32>
    %338 = arith.subf %334, %337 : vector<8x8xf32>
    %339 = math.exp %338 : vector<8x8xf32>
    %cst_203 = arith.constant dense<0.000000e+00> : vector<8xf32>
    %340 = vector.multi_reduction <add>, %339, %cst_203 [1] : vector<8x8xf32> to vector<8xf32>
    %341 = vector.shape_cast %340 : vector<8xf32> to vector<8x1xf32>
    %342 = tpu.reciprocal %341 {approx = true} : vector<8x1xf32> -> vector<8x1xf32>
    %343 = vector.broadcast %342 : vector<8x1xf32> to vector<8x8xf32>
    %344 = arith.mulf %339, %343 : vector<8x8xf32>
    %cst_204 = arith.constant dense<0.000000e+00> : vector<8x4xf32>
    %345 = tpu.matmul %344, %331, %cst_204 {dimension_numbers = #tpu.dot_dimension_numbers<[1], [0], [0], [1], [0, 0, 1, 1], [], []>} : vector<8x8xf32>, vector<8x4xf32>, vector<8x4xf32> -> vector<8x4xf32>
    %c2_205 = arith.constant 2 : index
    %c0_206 = arith.constant 0 : index
    %c0_207 = arith.constant 0 : index
    %346 = vector.load %arg15[%c2_205, %c0_206, %c0_207] : memref<8x4x32xf32, #tpu.memory_space<vmem>>, vector<1x4x32xf32>
    %347 = vector.shape_cast %346 : vector<1x4x32xf32> to vector<4x32xf32>
    %cst_208 = arith.constant dense<0.000000e+00> : vector<8x32xf32>
    %348 = tpu.matmul %345, %347, %cst_208 {dimension_numbers = #tpu.dot_dimension_numbers<[1], [0], [0], [1], [0, 0, 1, 1], [], []>} : vector<8x4xf32>, vector<4x32xf32>, vector<8x32xf32> -> vector<8x32xf32>
    %349 = arith.addf %310, %348 : vector<8x32xf32>
    %c3_209 = arith.constant 3 : index
    %c0_210 = arith.constant 0 : index
    %c0_211 = arith.constant 0 : index
    %350 = vector.load %arg9[%c3_209, %c0_210, %c0_211] : memref<8x32x4xf32, #tpu.memory_space<vmem>>, vector<1x32x4xf32>
    %351 = vector.shape_cast %350 : vector<1x32x4xf32> to vector<32x4xf32>
    %cst_212 = arith.constant dense<0.000000e+00> : vector<8x4xf32>
    %352 = tpu.matmul %231, %351, %cst_212 {dimension_numbers = #tpu.dot_dimension_numbers<[1], [0], [0], [1], [0, 0, 1, 1], [], []>} : vector<8x32xf32>, vector<32x4xf32>, vector<8x4xf32> -> vector<8x4xf32>
    %c3_213 = arith.constant 3 : index
    %c0_214 = arith.constant 0 : index
    %c0_215 = arith.constant 0 : index
    %353 = vector.load %arg10[%c3_213, %c0_214, %c0_215] : memref<8x1x4xf32, #tpu.memory_space<vmem>>, vector<1x1x4xf32>
    %354 = vector.shape_cast %353 : vector<1x1x4xf32> to vector<1x4xf32>
    %355 = vector.broadcast %354 : vector<1x4xf32> to vector<8x4xf32>
    %356 = arith.addf %352, %355 : vector<8x4xf32>
    %c3_216 = arith.constant 3 : index
    %c0_217 = arith.constant 0 : index
    %c0_218 = arith.constant 0 : index
    %357 = vector.load %arg11[%c3_216, %c0_217, %c0_218] : memref<8x32x4xf32, #tpu.memory_space<vmem>>, vector<1x32x4xf32>
    %358 = vector.shape_cast %357 : vector<1x32x4xf32> to vector<32x4xf32>
    %cst_219 = arith.constant dense<0.000000e+00> : vector<8x4xf32>
    %359 = tpu.matmul %231, %358, %cst_219 {dimension_numbers = #tpu.dot_dimension_numbers<[1], [0], [0], [1], [0, 0, 1, 1], [], []>} : vector<8x32xf32>, vector<32x4xf32>, vector<8x4xf32> -> vector<8x4xf32>
    %c3_220 = arith.constant 3 : index
    %c0_221 = arith.constant 0 : index
    %c0_222 = arith.constant 0 : index
    %360 = vector.load %arg12[%c3_220, %c0_221, %c0_222] : memref<8x1x4xf32, #tpu.memory_space<vmem>>, vector<1x1x4xf32>
    %361 = vector.shape_cast %360 : vector<1x1x4xf32> to vector<1x4xf32>
    %362 = vector.broadcast %361 : vector<1x4xf32> to vector<8x4xf32>
    %363 = arith.addf %359, %362 : vector<8x4xf32>
    %c3_223 = arith.constant 3 : index
    %c0_224 = arith.constant 0 : index
    %c0_225 = arith.constant 0 : index
    %364 = vector.load %arg13[%c3_223, %c0_224, %c0_225] : memref<8x32x4xf32, #tpu.memory_space<vmem>>, vector<1x32x4xf32>
    %365 = vector.shape_cast %364 : vector<1x32x4xf32> to vector<32x4xf32>
    %cst_226 = arith.constant dense<0.000000e+00> : vector<8x4xf32>
    %366 = tpu.matmul %231, %365, %cst_226 {dimension_numbers = #tpu.dot_dimension_numbers<[1], [0], [0], [1], [0, 0, 1, 1], [], []>} : vector<8x32xf32>, vector<32x4xf32>, vector<8x4xf32> -> vector<8x4xf32>
    %c3_227 = arith.constant 3 : index
    %c0_228 = arith.constant 0 : index
    %c0_229 = arith.constant 0 : index
    %367 = vector.load %arg14[%c3_227, %c0_228, %c0_229] : memref<8x1x4xf32, #tpu.memory_space<vmem>>, vector<1x1x4xf32>
    %368 = vector.shape_cast %367 : vector<1x1x4xf32> to vector<1x4xf32>
    %369 = vector.broadcast %368 : vector<1x4xf32> to vector<8x4xf32>
    %370 = arith.addf %366, %369 : vector<8x4xf32>
    %cst_230 = arith.constant dense<0.000000e+00> : vector<8x8xf32>
    %371 = tpu.matmul %356, %363, %cst_230 {dimension_numbers = #tpu.dot_dimension_numbers<[1], [1], [0], [0], [0, 0, 1, 0], [], []>} : vector<8x4xf32>, vector<8x4xf32>, vector<8x8xf32> -> vector<8x8xf32>
    %cst_231 = arith.constant 5.000000e-01 : f32
    %372 = vector.broadcast %cst_231 : f32 to vector<8x8xf32>
    %373 = arith.mulf %371, %372 : vector<8x8xf32>
    %cst_232 = arith.constant dense<0xFF800000> : vector<8xf32>
    %374 = vector.multi_reduction <maximumf>, %373, %cst_232 [1] : vector<8x8xf32> to vector<8xf32>
    %375 = vector.shape_cast %374 : vector<8xf32> to vector<8x1xf32>
    %376 = vector.broadcast %375 : vector<8x1xf32> to vector<8x8xf32>
    %377 = arith.subf %373, %376 : vector<8x8xf32>
    %378 = math.exp %377 : vector<8x8xf32>
    %cst_233 = arith.constant dense<0.000000e+00> : vector<8xf32>
    %379 = vector.multi_reduction <add>, %378, %cst_233 [1] : vector<8x8xf32> to vector<8xf32>
    %380 = vector.shape_cast %379 : vector<8xf32> to vector<8x1xf32>
    %381 = tpu.reciprocal %380 {approx = true} : vector<8x1xf32> -> vector<8x1xf32>
    %382 = vector.broadcast %381 : vector<8x1xf32> to vector<8x8xf32>
    %383 = arith.mulf %378, %382 : vector<8x8xf32>
    %cst_234 = arith.constant dense<0.000000e+00> : vector<8x4xf32>
    %384 = tpu.matmul %383, %370, %cst_234 {dimension_numbers = #tpu.dot_dimension_numbers<[1], [0], [0], [1], [0, 0, 1, 1], [], []>} : vector<8x8xf32>, vector<8x4xf32>, vector<8x4xf32> -> vector<8x4xf32>
    %c3_235 = arith.constant 3 : index
    %c0_236 = arith.constant 0 : index
    %c0_237 = arith.constant 0 : index
    %385 = vector.load %arg15[%c3_235, %c0_236, %c0_237] : memref<8x4x32xf32, #tpu.memory_space<vmem>>, vector<1x4x32xf32>
    %386 = vector.shape_cast %385 : vector<1x4x32xf32> to vector<4x32xf32>
    %cst_238 = arith.constant dense<0.000000e+00> : vector<8x32xf32>
    %387 = tpu.matmul %384, %386, %cst_238 {dimension_numbers = #tpu.dot_dimension_numbers<[1], [0], [0], [1], [0, 0, 1, 1], [], []>} : vector<8x4xf32>, vector<4x32xf32>, vector<8x32xf32> -> vector<8x32xf32>
    %388 = arith.addf %349, %387 : vector<8x32xf32>
    %c4_239 = arith.constant 4 : index
    %c0_240 = arith.constant 0 : index
    %c0_241 = arith.constant 0 : index
    %389 = vector.load %arg9[%c4_239, %c0_240, %c0_241] : memref<8x32x4xf32, #tpu.memory_space<vmem>>, vector<1x32x4xf32>
    %390 = vector.shape_cast %389 : vector<1x32x4xf32> to vector<32x4xf32>
    %cst_242 = arith.constant dense<0.000000e+00> : vector<8x4xf32>
    %391 = tpu.matmul %231, %390, %cst_242 {dimension_numbers = #tpu.dot_dimension_numbers<[1], [0], [0], [1], [0, 0, 1, 1], [], []>} : vector<8x32xf32>, vector<32x4xf32>, vector<8x4xf32> -> vector<8x4xf32>
    %c4_243 = arith.constant 4 : index
    %c0_244 = arith.constant 0 : index
    %c0_245 = arith.constant 0 : index
    %392 = vector.load %arg10[%c4_243, %c0_244, %c0_245] : memref<8x1x4xf32, #tpu.memory_space<vmem>>, vector<1x1x4xf32>
    %393 = vector.shape_cast %392 : vector<1x1x4xf32> to vector<1x4xf32>
    %394 = vector.broadcast %393 : vector<1x4xf32> to vector<8x4xf32>
    %395 = arith.addf %391, %394 : vector<8x4xf32>
    %c4_246 = arith.constant 4 : index
    %c0_247 = arith.constant 0 : index
    %c0_248 = arith.constant 0 : index
    %396 = vector.load %arg11[%c4_246, %c0_247, %c0_248] : memref<8x32x4xf32, #tpu.memory_space<vmem>>, vector<1x32x4xf32>
    %397 = vector.shape_cast %396 : vector<1x32x4xf32> to vector<32x4xf32>
    %cst_249 = arith.constant dense<0.000000e+00> : vector<8x4xf32>
    %398 = tpu.matmul %231, %397, %cst_249 {dimension_numbers = #tpu.dot_dimension_numbers<[1], [0], [0], [1], [0, 0, 1, 1], [], []>} : vector<8x32xf32>, vector<32x4xf32>, vector<8x4xf32> -> vector<8x4xf32>
    %c4_250 = arith.constant 4 : index
    %c0_251 = arith.constant 0 : index
    %c0_252 = arith.constant 0 : index
    %399 = vector.load %arg12[%c4_250, %c0_251, %c0_252] : memref<8x1x4xf32, #tpu.memory_space<vmem>>, vector<1x1x4xf32>
    %400 = vector.shape_cast %399 : vector<1x1x4xf32> to vector<1x4xf32>
    %401 = vector.broadcast %400 : vector<1x4xf32> to vector<8x4xf32>
    %402 = arith.addf %398, %401 : vector<8x4xf32>
    %c4_253 = arith.constant 4 : index
    %c0_254 = arith.constant 0 : index
    %c0_255 = arith.constant 0 : index
    %403 = vector.load %arg13[%c4_253, %c0_254, %c0_255] : memref<8x32x4xf32, #tpu.memory_space<vmem>>, vector<1x32x4xf32>
    %404 = vector.shape_cast %403 : vector<1x32x4xf32> to vector<32x4xf32>
    %cst_256 = arith.constant dense<0.000000e+00> : vector<8x4xf32>
    %405 = tpu.matmul %231, %404, %cst_256 {dimension_numbers = #tpu.dot_dimension_numbers<[1], [0], [0], [1], [0, 0, 1, 1], [], []>} : vector<8x32xf32>, vector<32x4xf32>, vector<8x4xf32> -> vector<8x4xf32>
    %c4_257 = arith.constant 4 : index
    %c0_258 = arith.constant 0 : index
    %c0_259 = arith.constant 0 : index
    %406 = vector.load %arg14[%c4_257, %c0_258, %c0_259] : memref<8x1x4xf32, #tpu.memory_space<vmem>>, vector<1x1x4xf32>
    %407 = vector.shape_cast %406 : vector<1x1x4xf32> to vector<1x4xf32>
    %408 = vector.broadcast %407 : vector<1x4xf32> to vector<8x4xf32>
    %409 = arith.addf %405, %408 : vector<8x4xf32>
    %cst_260 = arith.constant dense<0.000000e+00> : vector<8x8xf32>
    %410 = tpu.matmul %395, %402, %cst_260 {dimension_numbers = #tpu.dot_dimension_numbers<[1], [1], [0], [0], [0, 0, 1, 0], [], []>} : vector<8x4xf32>, vector<8x4xf32>, vector<8x8xf32> -> vector<8x8xf32>
    %cst_261 = arith.constant 5.000000e-01 : f32
    %411 = vector.broadcast %cst_261 : f32 to vector<8x8xf32>
    %412 = arith.mulf %410, %411 : vector<8x8xf32>
    %cst_262 = arith.constant dense<0xFF800000> : vector<8xf32>
    %413 = vector.multi_reduction <maximumf>, %412, %cst_262 [1] : vector<8x8xf32> to vector<8xf32>
    %414 = vector.shape_cast %413 : vector<8xf32> to vector<8x1xf32>
    %415 = vector.broadcast %414 : vector<8x1xf32> to vector<8x8xf32>
    %416 = arith.subf %412, %415 : vector<8x8xf32>
    %417 = math.exp %416 : vector<8x8xf32>
    %cst_263 = arith.constant dense<0.000000e+00> : vector<8xf32>
    %418 = vector.multi_reduction <add>, %417, %cst_263 [1] : vector<8x8xf32> to vector<8xf32>
    %419 = vector.shape_cast %418 : vector<8xf32> to vector<8x1xf32>
    %420 = tpu.reciprocal %419 {approx = true} : vector<8x1xf32> -> vector<8x1xf32>
    %421 = vector.broadcast %420 : vector<8x1xf32> to vector<8x8xf32>
    %422 = arith.mulf %417, %421 : vector<8x8xf32>
    %cst_264 = arith.constant dense<0.000000e+00> : vector<8x4xf32>
    %423 = tpu.matmul %422, %409, %cst_264 {dimension_numbers = #tpu.dot_dimension_numbers<[1], [0], [0], [1], [0, 0, 1, 1], [], []>} : vector<8x8xf32>, vector<8x4xf32>, vector<8x4xf32> -> vector<8x4xf32>
    %c4_265 = arith.constant 4 : index
    %c0_266 = arith.constant 0 : index
    %c0_267 = arith.constant 0 : index
    %424 = vector.load %arg15[%c4_265, %c0_266, %c0_267] : memref<8x4x32xf32, #tpu.memory_space<vmem>>, vector<1x4x32xf32>
    %425 = vector.shape_cast %424 : vector<1x4x32xf32> to vector<4x32xf32>
    %cst_268 = arith.constant dense<0.000000e+00> : vector<8x32xf32>
    %426 = tpu.matmul %423, %425, %cst_268 {dimension_numbers = #tpu.dot_dimension_numbers<[1], [0], [0], [1], [0, 0, 1, 1], [], []>} : vector<8x4xf32>, vector<4x32xf32>, vector<8x32xf32> -> vector<8x32xf32>
    %427 = arith.addf %388, %426 : vector<8x32xf32>
    %c5_269 = arith.constant 5 : index
    %c0_270 = arith.constant 0 : index
    %c0_271 = arith.constant 0 : index
    %428 = vector.load %arg9[%c5_269, %c0_270, %c0_271] : memref<8x32x4xf32, #tpu.memory_space<vmem>>, vector<1x32x4xf32>
    %429 = vector.shape_cast %428 : vector<1x32x4xf32> to vector<32x4xf32>
    %cst_272 = arith.constant dense<0.000000e+00> : vector<8x4xf32>
    %430 = tpu.matmul %231, %429, %cst_272 {dimension_numbers = #tpu.dot_dimension_numbers<[1], [0], [0], [1], [0, 0, 1, 1], [], []>} : vector<8x32xf32>, vector<32x4xf32>, vector<8x4xf32> -> vector<8x4xf32>
    %c5_273 = arith.constant 5 : index
    %c0_274 = arith.constant 0 : index
    %c0_275 = arith.constant 0 : index
    %431 = vector.load %arg10[%c5_273, %c0_274, %c0_275] : memref<8x1x4xf32, #tpu.memory_space<vmem>>, vector<1x1x4xf32>
    %432 = vector.shape_cast %431 : vector<1x1x4xf32> to vector<1x4xf32>
    %433 = vector.broadcast %432 : vector<1x4xf32> to vector<8x4xf32>
    %434 = arith.addf %430, %433 : vector<8x4xf32>
    %c5_276 = arith.constant 5 : index
    %c0_277 = arith.constant 0 : index
    %c0_278 = arith.constant 0 : index
    %435 = vector.load %arg11[%c5_276, %c0_277, %c0_278] : memref<8x32x4xf32, #tpu.memory_space<vmem>>, vector<1x32x4xf32>
    %436 = vector.shape_cast %435 : vector<1x32x4xf32> to vector<32x4xf32>
    %cst_279 = arith.constant dense<0.000000e+00> : vector<8x4xf32>
    %437 = tpu.matmul %231, %436, %cst_279 {dimension_numbers = #tpu.dot_dimension_numbers<[1], [0], [0], [1], [0, 0, 1, 1], [], []>} : vector<8x32xf32>, vector<32x4xf32>, vector<8x4xf32> -> vector<8x4xf32>
    %c5_280 = arith.constant 5 : index
    %c0_281 = arith.constant 0 : index
    %c0_282 = arith.constant 0 : index
    %438 = vector.load %arg12[%c5_280, %c0_281, %c0_282] : memref<8x1x4xf32, #tpu.memory_space<vmem>>, vector<1x1x4xf32>
    %439 = vector.shape_cast %438 : vector<1x1x4xf32> to vector<1x4xf32>
    %440 = vector.broadcast %439 : vector<1x4xf32> to vector<8x4xf32>
    %441 = arith.addf %437, %440 : vector<8x4xf32>
    %c5_283 = arith.constant 5 : index
    %c0_284 = arith.constant 0 : index
    %c0_285 = arith.constant 0 : index
    %442 = vector.load %arg13[%c5_283, %c0_284, %c0_285] : memref<8x32x4xf32, #tpu.memory_space<vmem>>, vector<1x32x4xf32>
    %443 = vector.shape_cast %442 : vector<1x32x4xf32> to vector<32x4xf32>
    %cst_286 = arith.constant dense<0.000000e+00> : vector<8x4xf32>
    %444 = tpu.matmul %231, %443, %cst_286 {dimension_numbers = #tpu.dot_dimension_numbers<[1], [0], [0], [1], [0, 0, 1, 1], [], []>} : vector<8x32xf32>, vector<32x4xf32>, vector<8x4xf32> -> vector<8x4xf32>
    %c5_287 = arith.constant 5 : index
    %c0_288 = arith.constant 0 : index
    %c0_289 = arith.constant 0 : index
    %445 = vector.load %arg14[%c5_287, %c0_288, %c0_289] : memref<8x1x4xf32, #tpu.memory_space<vmem>>, vector<1x1x4xf32>
    %446 = vector.shape_cast %445 : vector<1x1x4xf32> to vector<1x4xf32>
    %447 = vector.broadcast %446 : vector<1x4xf32> to vector<8x4xf32>
    %448 = arith.addf %444, %447 : vector<8x4xf32>
    %cst_290 = arith.constant dense<0.000000e+00> : vector<8x8xf32>
    %449 = tpu.matmul %434, %441, %cst_290 {dimension_numbers = #tpu.dot_dimension_numbers<[1], [1], [0], [0], [0, 0, 1, 0], [], []>} : vector<8x4xf32>, vector<8x4xf32>, vector<8x8xf32> -> vector<8x8xf32>
    %cst_291 = arith.constant 5.000000e-01 : f32
    %450 = vector.broadcast %cst_291 : f32 to vector<8x8xf32>
    %451 = arith.mulf %449, %450 : vector<8x8xf32>
    %cst_292 = arith.constant dense<0xFF800000> : vector<8xf32>
    %452 = vector.multi_reduction <maximumf>, %451, %cst_292 [1] : vector<8x8xf32> to vector<8xf32>
    %453 = vector.shape_cast %452 : vector<8xf32> to vector<8x1xf32>
    %454 = vector.broadcast %453 : vector<8x1xf32> to vector<8x8xf32>
    %455 = arith.subf %451, %454 : vector<8x8xf32>
    %456 = math.exp %455 : vector<8x8xf32>
    %cst_293 = arith.constant dense<0.000000e+00> : vector<8xf32>
    %457 = vector.multi_reduction <add>, %456, %cst_293 [1] : vector<8x8xf32> to vector<8xf32>
    %458 = vector.shape_cast %457 : vector<8xf32> to vector<8x1xf32>
    %459 = tpu.reciprocal %458 {approx = true} : vector<8x1xf32> -> vector<8x1xf32>
    %460 = vector.broadcast %459 : vector<8x1xf32> to vector<8x8xf32>
    %461 = arith.mulf %456, %460 : vector<8x8xf32>
    %cst_294 = arith.constant dense<0.000000e+00> : vector<8x4xf32>
    %462 = tpu.matmul %461, %448, %cst_294 {dimension_numbers = #tpu.dot_dimension_numbers<[1], [0], [0], [1], [0, 0, 1, 1], [], []>} : vector<8x8xf32>, vector<8x4xf32>, vector<8x4xf32> -> vector<8x4xf32>
    %c5_295 = arith.constant 5 : index
    %c0_296 = arith.constant 0 : index
    %c0_297 = arith.constant 0 : index
    %463 = vector.load %arg15[%c5_295, %c0_296, %c0_297] : memref<8x4x32xf32, #tpu.memory_space<vmem>>, vector<1x4x32xf32>
    %464 = vector.shape_cast %463 : vector<1x4x32xf32> to vector<4x32xf32>
    %cst_298 = arith.constant dense<0.000000e+00> : vector<8x32xf32>
    %465 = tpu.matmul %462, %464, %cst_298 {dimension_numbers = #tpu.dot_dimension_numbers<[1], [0], [0], [1], [0, 0, 1, 1], [], []>} : vector<8x4xf32>, vector<4x32xf32>, vector<8x32xf32> -> vector<8x32xf32>
    %466 = arith.addf %427, %465 : vector<8x32xf32>
    %c6 = arith.constant 6 : index
    %c0_299 = arith.constant 0 : index
    %c0_300 = arith.constant 0 : index
    %467 = vector.load %arg9[%c6, %c0_299, %c0_300] : memref<8x32x4xf32, #tpu.memory_space<vmem>>, vector<1x32x4xf32>
    %468 = vector.shape_cast %467 : vector<1x32x4xf32> to vector<32x4xf32>
    %cst_301 = arith.constant dense<0.000000e+00> : vector<8x4xf32>
    %469 = tpu.matmul %231, %468, %cst_301 {dimension_numbers = #tpu.dot_dimension_numbers<[1], [0], [0], [1], [0, 0, 1, 1], [], []>} : vector<8x32xf32>, vector<32x4xf32>, vector<8x4xf32> -> vector<8x4xf32>
    %c6_302 = arith.constant 6 : index
    %c0_303 = arith.constant 0 : index
    %c0_304 = arith.constant 0 : index
    %470 = vector.load %arg10[%c6_302, %c0_303, %c0_304] : memref<8x1x4xf32, #tpu.memory_space<vmem>>, vector<1x1x4xf32>
    %471 = vector.shape_cast %470 : vector<1x1x4xf32> to vector<1x4xf32>
    %472 = vector.broadcast %471 : vector<1x4xf32> to vector<8x4xf32>
    %473 = arith.addf %469, %472 : vector<8x4xf32>
    %c6_305 = arith.constant 6 : index
    %c0_306 = arith.constant 0 : index
    %c0_307 = arith.constant 0 : index
    %474 = vector.load %arg11[%c6_305, %c0_306, %c0_307] : memref<8x32x4xf32, #tpu.memory_space<vmem>>, vector<1x32x4xf32>
    %475 = vector.shape_cast %474 : vector<1x32x4xf32> to vector<32x4xf32>
    %cst_308 = arith.constant dense<0.000000e+00> : vector<8x4xf32>
    %476 = tpu.matmul %231, %475, %cst_308 {dimension_numbers = #tpu.dot_dimension_numbers<[1], [0], [0], [1], [0, 0, 1, 1], [], []>} : vector<8x32xf32>, vector<32x4xf32>, vector<8x4xf32> -> vector<8x4xf32>
    %c6_309 = arith.constant 6 : index
    %c0_310 = arith.constant 0 : index
    %c0_311 = arith.constant 0 : index
    %477 = vector.load %arg12[%c6_309, %c0_310, %c0_311] : memref<8x1x4xf32, #tpu.memory_space<vmem>>, vector<1x1x4xf32>
    %478 = vector.shape_cast %477 : vector<1x1x4xf32> to vector<1x4xf32>
    %479 = vector.broadcast %478 : vector<1x4xf32> to vector<8x4xf32>
    %480 = arith.addf %476, %479 : vector<8x4xf32>
    %c6_312 = arith.constant 6 : index
    %c0_313 = arith.constant 0 : index
    %c0_314 = arith.constant 0 : index
    %481 = vector.load %arg13[%c6_312, %c0_313, %c0_314] : memref<8x32x4xf32, #tpu.memory_space<vmem>>, vector<1x32x4xf32>
    %482 = vector.shape_cast %481 : vector<1x32x4xf32> to vector<32x4xf32>
    %cst_315 = arith.constant dense<0.000000e+00> : vector<8x4xf32>
    %483 = tpu.matmul %231, %482, %cst_315 {dimension_numbers = #tpu.dot_dimension_numbers<[1], [0], [0], [1], [0, 0, 1, 1], [], []>} : vector<8x32xf32>, vector<32x4xf32>, vector<8x4xf32> -> vector<8x4xf32>
    %c6_316 = arith.constant 6 : index
    %c0_317 = arith.constant 0 : index
    %c0_318 = arith.constant 0 : index
    %484 = vector.load %arg14[%c6_316, %c0_317, %c0_318] : memref<8x1x4xf32, #tpu.memory_space<vmem>>, vector<1x1x4xf32>
    %485 = vector.shape_cast %484 : vector<1x1x4xf32> to vector<1x4xf32>
    %486 = vector.broadcast %485 : vector<1x4xf32> to vector<8x4xf32>
    %487 = arith.addf %483, %486 : vector<8x4xf32>
    %cst_319 = arith.constant dense<0.000000e+00> : vector<8x8xf32>
    %488 = tpu.matmul %473, %480, %cst_319 {dimension_numbers = #tpu.dot_dimension_numbers<[1], [1], [0], [0], [0, 0, 1, 0], [], []>} : vector<8x4xf32>, vector<8x4xf32>, vector<8x8xf32> -> vector<8x8xf32>
    %cst_320 = arith.constant 5.000000e-01 : f32
    %489 = vector.broadcast %cst_320 : f32 to vector<8x8xf32>
    %490 = arith.mulf %488, %489 : vector<8x8xf32>
    %cst_321 = arith.constant dense<0xFF800000> : vector<8xf32>
    %491 = vector.multi_reduction <maximumf>, %490, %cst_321 [1] : vector<8x8xf32> to vector<8xf32>
    %492 = vector.shape_cast %491 : vector<8xf32> to vector<8x1xf32>
    %493 = vector.broadcast %492 : vector<8x1xf32> to vector<8x8xf32>
    %494 = arith.subf %490, %493 : vector<8x8xf32>
    %495 = math.exp %494 : vector<8x8xf32>
    %cst_322 = arith.constant dense<0.000000e+00> : vector<8xf32>
    %496 = vector.multi_reduction <add>, %495, %cst_322 [1] : vector<8x8xf32> to vector<8xf32>
    %497 = vector.shape_cast %496 : vector<8xf32> to vector<8x1xf32>
    %498 = tpu.reciprocal %497 {approx = true} : vector<8x1xf32> -> vector<8x1xf32>
    %499 = vector.broadcast %498 : vector<8x1xf32> to vector<8x8xf32>
    %500 = arith.mulf %495, %499 : vector<8x8xf32>
    %cst_323 = arith.constant dense<0.000000e+00> : vector<8x4xf32>
    %501 = tpu.matmul %500, %487, %cst_323 {dimension_numbers = #tpu.dot_dimension_numbers<[1], [0], [0], [1], [0, 0, 1, 1], [], []>} : vector<8x8xf32>, vector<8x4xf32>, vector<8x4xf32> -> vector<8x4xf32>
    %c6_324 = arith.constant 6 : index
    %c0_325 = arith.constant 0 : index
    %c0_326 = arith.constant 0 : index
    %502 = vector.load %arg15[%c6_324, %c0_325, %c0_326] : memref<8x4x32xf32, #tpu.memory_space<vmem>>, vector<1x4x32xf32>
    %503 = vector.shape_cast %502 : vector<1x4x32xf32> to vector<4x32xf32>
    %cst_327 = arith.constant dense<0.000000e+00> : vector<8x32xf32>
    %504 = tpu.matmul %501, %503, %cst_327 {dimension_numbers = #tpu.dot_dimension_numbers<[1], [0], [0], [1], [0, 0, 1, 1], [], []>} : vector<8x4xf32>, vector<4x32xf32>, vector<8x32xf32> -> vector<8x32xf32>
    %505 = arith.addf %466, %504 : vector<8x32xf32>
    %c7 = arith.constant 7 : index
    %c0_328 = arith.constant 0 : index
    %c0_329 = arith.constant 0 : index
    %506 = vector.load %arg9[%c7, %c0_328, %c0_329] : memref<8x32x4xf32, #tpu.memory_space<vmem>>, vector<1x32x4xf32>
    %507 = vector.shape_cast %506 : vector<1x32x4xf32> to vector<32x4xf32>
    %cst_330 = arith.constant dense<0.000000e+00> : vector<8x4xf32>
    %508 = tpu.matmul %231, %507, %cst_330 {dimension_numbers = #tpu.dot_dimension_numbers<[1], [0], [0], [1], [0, 0, 1, 1], [], []>} : vector<8x32xf32>, vector<32x4xf32>, vector<8x4xf32> -> vector<8x4xf32>
    %c7_331 = arith.constant 7 : index
    %c0_332 = arith.constant 0 : index
    %c0_333 = arith.constant 0 : index
    %509 = vector.load %arg10[%c7_331, %c0_332, %c0_333] : memref<8x1x4xf32, #tpu.memory_space<vmem>>, vector<1x1x4xf32>
    %510 = vector.shape_cast %509 : vector<1x1x4xf32> to vector<1x4xf32>
    %511 = vector.broadcast %510 : vector<1x4xf32> to vector<8x4xf32>
    %512 = arith.addf %508, %511 : vector<8x4xf32>
    %c7_334 = arith.constant 7 : index
    %c0_335 = arith.constant 0 : index
    %c0_336 = arith.constant 0 : index
    %513 = vector.load %arg11[%c7_334, %c0_335, %c0_336] : memref<8x32x4xf32, #tpu.memory_space<vmem>>, vector<1x32x4xf32>
    %514 = vector.shape_cast %513 : vector<1x32x4xf32> to vector<32x4xf32>
    %cst_337 = arith.constant dense<0.000000e+00> : vector<8x4xf32>
    %515 = tpu.matmul %231, %514, %cst_337 {dimension_numbers = #tpu.dot_dimension_numbers<[1], [0], [0], [1], [0, 0, 1, 1], [], []>} : vector<8x32xf32>, vector<32x4xf32>, vector<8x4xf32> -> vector<8x4xf32>
    %c7_338 = arith.constant 7 : index
    %c0_339 = arith.constant 0 : index
    %c0_340 = arith.constant 0 : index
    %516 = vector.load %arg12[%c7_338, %c0_339, %c0_340] : memref<8x1x4xf32, #tpu.memory_space<vmem>>, vector<1x1x4xf32>
    %517 = vector.shape_cast %516 : vector<1x1x4xf32> to vector<1x4xf32>
    %518 = vector.broadcast %517 : vector<1x4xf32> to vector<8x4xf32>
    %519 = arith.addf %515, %518 : vector<8x4xf32>
    %c7_341 = arith.constant 7 : index
    %c0_342 = arith.constant 0 : index
    %c0_343 = arith.constant 0 : index
    %520 = vector.load %arg13[%c7_341, %c0_342, %c0_343] : memref<8x32x4xf32, #tpu.memory_space<vmem>>, vector<1x32x4xf32>
    %521 = vector.shape_cast %520 : vector<1x32x4xf32> to vector<32x4xf32>
    %cst_344 = arith.constant dense<0.000000e+00> : vector<8x4xf32>
    %522 = tpu.matmul %231, %521, %cst_344 {dimension_numbers = #tpu.dot_dimension_numbers<[1], [0], [0], [1], [0, 0, 1, 1], [], []>} : vector<8x32xf32>, vector<32x4xf32>, vector<8x4xf32> -> vector<8x4xf32>
    %c7_345 = arith.constant 7 : index
    %c0_346 = arith.constant 0 : index
    %c0_347 = arith.constant 0 : index
    %523 = vector.load %arg14[%c7_345, %c0_346, %c0_347] : memref<8x1x4xf32, #tpu.memory_space<vmem>>, vector<1x1x4xf32>
    %524 = vector.shape_cast %523 : vector<1x1x4xf32> to vector<1x4xf32>
    %525 = vector.broadcast %524 : vector<1x4xf32> to vector<8x4xf32>
    %526 = arith.addf %522, %525 : vector<8x4xf32>
    %cst_348 = arith.constant dense<0.000000e+00> : vector<8x8xf32>
    %527 = tpu.matmul %512, %519, %cst_348 {dimension_numbers = #tpu.dot_dimension_numbers<[1], [1], [0], [0], [0, 0, 1, 0], [], []>} : vector<8x4xf32>, vector<8x4xf32>, vector<8x8xf32> -> vector<8x8xf32>
    %cst_349 = arith.constant 5.000000e-01 : f32
    %528 = vector.broadcast %cst_349 : f32 to vector<8x8xf32>
    %529 = arith.mulf %527, %528 : vector<8x8xf32>
    %cst_350 = arith.constant dense<0xFF800000> : vector<8xf32>
    %530 = vector.multi_reduction <maximumf>, %529, %cst_350 [1] : vector<8x8xf32> to vector<8xf32>
    %531 = vector.shape_cast %530 : vector<8xf32> to vector<8x1xf32>
    %532 = vector.broadcast %531 : vector<8x1xf32> to vector<8x8xf32>
    %533 = arith.subf %529, %532 : vector<8x8xf32>
    %534 = math.exp %533 : vector<8x8xf32>
    %cst_351 = arith.constant dense<0.000000e+00> : vector<8xf32>
    %535 = vector.multi_reduction <add>, %534, %cst_351 [1] : vector<8x8xf32> to vector<8xf32>
    %536 = vector.shape_cast %535 : vector<8xf32> to vector<8x1xf32>
    %537 = tpu.reciprocal %536 {approx = true} : vector<8x1xf32> -> vector<8x1xf32>
    %538 = vector.broadcast %537 : vector<8x1xf32> to vector<8x8xf32>
    %539 = arith.mulf %534, %538 : vector<8x8xf32>
    %cst_352 = arith.constant dense<0.000000e+00> : vector<8x4xf32>
    %540 = tpu.matmul %539, %526, %cst_352 {dimension_numbers = #tpu.dot_dimension_numbers<[1], [0], [0], [1], [0, 0, 1, 1], [], []>} : vector<8x8xf32>, vector<8x4xf32>, vector<8x4xf32> -> vector<8x4xf32>
    %c7_353 = arith.constant 7 : index
    %c0_354 = arith.constant 0 : index
    %c0_355 = arith.constant 0 : index
    %541 = vector.load %arg15[%c7_353, %c0_354, %c0_355] : memref<8x4x32xf32, #tpu.memory_space<vmem>>, vector<1x4x32xf32>
    %542 = vector.shape_cast %541 : vector<1x4x32xf32> to vector<4x32xf32>
    %cst_356 = arith.constant dense<0.000000e+00> : vector<8x32xf32>
    %543 = tpu.matmul %540, %542, %cst_356 {dimension_numbers = #tpu.dot_dimension_numbers<[1], [0], [0], [1], [0, 0, 1, 1], [], []>} : vector<8x4xf32>, vector<4x32xf32>, vector<8x32xf32> -> vector<8x32xf32>
    %544 = arith.addf %505, %543 : vector<8x32xf32>
    %c0_357 = arith.constant 0 : index
    %c0_358 = arith.constant 0 : index
    %545 = vector.load %arg16[%c0_357, %c0_358] : memref<1x32xf32, #tpu.memory_space<vmem>>, vector<1x32xf32>
    %546 = vector.broadcast %545 : vector<1x32xf32> to vector<8x32xf32>
    %547 = arith.addf %544, %546 : vector<8x32xf32>
    %548 = arith.addf %231, %547 : vector<8x32xf32>
    %c0_359 = arith.constant 0 : index
    %c0_360 = arith.constant 0 : index
    %549 = vector.load %arg17[%c0_359, %c0_360] : memref<1x32xf32, #tpu.memory_space<vmem>>, vector<1x32xf32>
    %c0_361 = arith.constant 0 : index
    %c0_362 = arith.constant 0 : index
    %550 = vector.load %arg18[%c0_361, %c0_362] : memref<1x32xf32, #tpu.memory_space<vmem>>, vector<1x32xf32>
    %cst_363 = arith.constant dense<0.000000e+00> : vector<8xf32>
    %551 = vector.multi_reduction <add>, %548, %cst_363 [1] : vector<8x32xf32> to vector<8xf32>
    %552 = vector.shape_cast %551 : vector<8xf32> to vector<8x1xf32>
    %cst_364 = arith.constant 3.200000e+01 : f32
    %553 = vector.broadcast %cst_364 : f32 to vector<8x1xf32>
    %554 = arith.divf %552, %553 : vector<8x1xf32>
    %555 = vector.broadcast %554 : vector<8x1xf32> to vector<8x32xf32>
    %556 = arith.subf %548, %555 : vector<8x32xf32>
    %557 = arith.mulf %556, %556 : vector<8x32xf32>
    %cst_365 = arith.constant dense<0.000000e+00> : vector<8xf32>
    %558 = vector.multi_reduction <add>, %557, %cst_365 [1] : vector<8x32xf32> to vector<8xf32>
    %559 = vector.shape_cast %558 : vector<8xf32> to vector<8x1xf32>
    %cst_366 = arith.constant 3.200000e+01 : f32
    %560 = vector.broadcast %cst_366 : f32 to vector<8x1xf32>
    %561 = arith.divf %559, %560 : vector<8x1xf32>
    %562 = vector.broadcast %554 : vector<8x1xf32> to vector<8x32xf32>
    %563 = arith.subf %548, %562 : vector<8x32xf32>
    %cst_367 = arith.constant 9.99999974E-6 : f32
    %564 = vector.broadcast %cst_367 : f32 to vector<8x1xf32>
    %565 = arith.addf %561, %564 : vector<8x1xf32>
    %566 = math.rsqrt %565 : vector<8x1xf32>
    %567 = vector.broadcast %566 : vector<8x1xf32> to vector<8x32xf32>
    %568 = arith.mulf %563, %567 : vector<8x32xf32>
    %569 = vector.broadcast %549 : vector<1x32xf32> to vector<8x32xf32>
    %570 = arith.mulf %568, %569 : vector<8x32xf32>
    %571 = vector.broadcast %550 : vector<1x32xf32> to vector<8x32xf32>
    %572 = arith.addf %570, %571 : vector<8x32xf32>
    %573 = arith.truncf %572 : vector<8x32xf32> to vector<8x32xbf16>
    %c0_368 = arith.constant 0 : index
    %c0_369 = arith.constant 0 : index
    %574 = vector.load %arg19[%c0_368, %c0_369] : memref<32x2048xbf16, #tpu.memory_space<vmem>>, vector<32x2048xbf16>
    %cst_370 = arith.constant dense<0.000000e+00> : vector<8x2048xf32>
    %575 = tpu.matmul %573, %574, %cst_370 {dimension_numbers = #tpu.dot_dimension_numbers<[1], [0], [0], [1], [0, 0, 1, 1], [], []>} : vector<8x32xbf16>, vector<32x2048xbf16>, vector<8x2048xf32> -> vector<8x2048xf32>
    %c0_371 = arith.constant 0 : index
    %c0_372 = arith.constant 0 : index
    %576 = vector.load %arg20[%c0_371, %c0_372] : memref<1x2048xf32, #tpu.memory_space<vmem>>, vector<1x2048xf32>
    %577 = vector.broadcast %576 : vector<1x2048xf32> to vector<8x2048xf32>
    %578 = arith.addf %575, %577 : vector<8x2048xf32>
    %cst_373 = arith.constant 0.000000e+00 : f32
    %579 = vector.broadcast %cst_373 : f32 to vector<8x2048xf32>
    %580 = arith.maximumf %578, %579 : vector<8x2048xf32>
    %581 = arith.truncf %580 : vector<8x2048xf32> to vector<8x2048xbf16>
    %c0_374 = arith.constant 0 : index
    %c0_375 = arith.constant 0 : index
    %582 = vector.load %arg21[%c0_374, %c0_375] : memref<2048x32xbf16, #tpu.memory_space<vmem>>, vector<2048x32xbf16>
    %cst_376 = arith.constant dense<0.000000e+00> : vector<8x32xf32>
    %583 = tpu.matmul %581, %582, %cst_376 {dimension_numbers = #tpu.dot_dimension_numbers<[1], [0], [0], [1], [0, 0, 1, 1], [], []>} : vector<8x2048xbf16>, vector<2048x32xbf16>, vector<8x32xf32> -> vector<8x32xf32>
    %c0_377 = arith.constant 0 : index
    %c0_378 = arith.constant 0 : index
    %584 = vector.load %arg22[%c0_377, %c0_378] : memref<1x32xf32, #tpu.memory_space<vmem>>, vector<1x32xf32>
    %585 = vector.broadcast %584 : vector<1x32xf32> to vector<8x32xf32>
    %586 = arith.addf %583, %585 : vector<8x32xf32>
    %587 = arith.addf %572, %586 : vector<8x32xf32>
    %c0_379 = arith.constant 0 : index
    %c0_380 = arith.constant 0 : index
    %588 = vector.load %arg23[%c0_379, %c0_380] : memref<1x32xf32, #tpu.memory_space<vmem>>, vector<1x32xf32>
    %c0_381 = arith.constant 0 : index
    %c0_382 = arith.constant 0 : index
    %589 = vector.load %arg24[%c0_381, %c0_382] : memref<1x32xf32, #tpu.memory_space<vmem>>, vector<1x32xf32>
    %cst_383 = arith.constant dense<0.000000e+00> : vector<8xf32>
    %590 = vector.multi_reduction <add>, %587, %cst_383 [1] : vector<8x32xf32> to vector<8xf32>
    %591 = vector.shape_cast %590 : vector<8xf32> to vector<8x1xf32>
    %cst_384 = arith.constant 3.200000e+01 : f32
    %592 = vector.broadcast %cst_384 : f32 to vector<8x1xf32>
    %593 = arith.divf %591, %592 : vector<8x1xf32>
    %594 = vector.broadcast %593 : vector<8x1xf32> to vector<8x32xf32>
    %595 = arith.subf %587, %594 : vector<8x32xf32>
    %596 = arith.mulf %595, %595 : vector<8x32xf32>
    %cst_385 = arith.constant dense<0.000000e+00> : vector<8xf32>
    %597 = vector.multi_reduction <add>, %596, %cst_385 [1] : vector<8x32xf32> to vector<8xf32>
    %598 = vector.shape_cast %597 : vector<8xf32> to vector<8x1xf32>
    %cst_386 = arith.constant 3.200000e+01 : f32
    %599 = vector.broadcast %cst_386 : f32 to vector<8x1xf32>
    %600 = arith.divf %598, %599 : vector<8x1xf32>
    %601 = vector.broadcast %593 : vector<8x1xf32> to vector<8x32xf32>
    %602 = arith.subf %587, %601 : vector<8x32xf32>
    %cst_387 = arith.constant 9.99999974E-6 : f32
    %603 = vector.broadcast %cst_387 : f32 to vector<8x1xf32>
    %604 = arith.addf %600, %603 : vector<8x1xf32>
    %605 = math.rsqrt %604 : vector<8x1xf32>
    %606 = vector.broadcast %605 : vector<8x1xf32> to vector<8x32xf32>
    %607 = arith.mulf %602, %606 : vector<8x32xf32>
    %608 = vector.broadcast %588 : vector<1x32xf32> to vector<8x32xf32>
    %609 = arith.mulf %607, %608 : vector<8x32xf32>
    %610 = vector.broadcast %589 : vector<1x32xf32> to vector<8x32xf32>
    %611 = arith.addf %609, %610 : vector<8x32xf32>
    %c0_388 = arith.constant 0 : index
    %c0_389 = arith.constant 0 : index
    %c0_390 = arith.constant 0 : index
    %612 = vector.load %arg3[%c0_388, %c0_389, %c0_390] : memref<1x6x32xf32, #tpu.memory_space<vmem>>, vector<1x6x32xf32>
    %613 = vector.shape_cast %612 : vector<1x6x32xf32> to vector<6x32xf32>
    %c0_391 = arith.constant 0 : index
    %c0_392 = arith.constant 0 : index
    %614 = vector.load %arg25[%c0_391, %c0_392] : memref<32x32xf32, #tpu.memory_space<vmem>>, vector<32x32xf32>
    %cst_393 = arith.constant dense<0.000000e+00> : vector<8x32xf32>
    %615 = tpu.matmul %611, %614, %cst_393 {dimension_numbers = #tpu.dot_dimension_numbers<[1], [0], [0], [1], [0, 0, 1, 1], [], []>} : vector<8x32xf32>, vector<32x32xf32>, vector<8x32xf32> -> vector<8x32xf32>
    %c0_394 = arith.constant 0 : index
    %c0_395 = arith.constant 0 : index
    %616 = vector.load %arg26[%c0_394, %c0_395] : memref<1x32xf32, #tpu.memory_space<vmem>>, vector<1x32xf32>
    %617 = vector.broadcast %616 : vector<1x32xf32> to vector<8x32xf32>
    %618 = arith.addf %615, %617 : vector<8x32xf32>
    %c0_396 = arith.constant 0 : index
    %c0_397 = arith.constant 0 : index
    %619 = vector.load %arg27[%c0_396, %c0_397] : memref<32x32xf32, #tpu.memory_space<vmem>>, vector<32x32xf32>
    %cst_398 = arith.constant dense<0.000000e+00> : vector<6x32xf32>
    %620 = tpu.matmul %613, %619, %cst_398 {dimension_numbers = #tpu.dot_dimension_numbers<[1], [0], [0], [1], [0, 0, 1, 1], [], []>} : vector<6x32xf32>, vector<32x32xf32>, vector<6x32xf32> -> vector<6x32xf32>
    %c0_399 = arith.constant 0 : index
    %c0_400 = arith.constant 0 : index
    %621 = vector.load %arg28[%c0_399, %c0_400] : memref<1x32xf32, #tpu.memory_space<vmem>>, vector<1x32xf32>
    %622 = vector.broadcast %621 : vector<1x32xf32> to vector<6x32xf32>
    %623 = arith.addf %620, %622 : vector<6x32xf32>
    %c0_401 = arith.constant 0 : index
    %c0_402 = arith.constant 0 : index
    %624 = vector.load %arg29[%c0_401, %c0_402] : memref<32x32xf32, #tpu.memory_space<vmem>>, vector<32x32xf32>
    %cst_403 = arith.constant dense<0.000000e+00> : vector<6x32xf32>
    %625 = tpu.matmul %613, %624, %cst_403 {dimension_numbers = #tpu.dot_dimension_numbers<[1], [0], [0], [1], [0, 0, 1, 1], [], []>} : vector<6x32xf32>, vector<32x32xf32>, vector<6x32xf32> -> vector<6x32xf32>
    %c0_404 = arith.constant 0 : index
    %c0_405 = arith.constant 0 : index
    %626 = vector.load %arg30[%c0_404, %c0_405] : memref<1x32xf32, #tpu.memory_space<vmem>>, vector<1x32xf32>
    %627 = vector.broadcast %626 : vector<1x32xf32> to vector<6x32xf32>
    %628 = arith.addf %625, %627 : vector<6x32xf32>
    %cst_406 = arith.constant dense<0.000000e+00> : vector<8x6xf32>
    %629 = tpu.matmul %618, %623, %cst_406 {dimension_numbers = #tpu.dot_dimension_numbers<[1], [1], [0], [0], [0, 0, 1, 0], [], []>} : vector<8x32xf32>, vector<6x32xf32>, vector<8x6xf32> -> vector<8x6xf32>
    %cst_407 = arith.constant 0.176776692 : f32
    %630 = vector.broadcast %cst_407 : f32 to vector<8x6xf32>
    %631 = arith.mulf %629, %630 : vector<8x6xf32>
    %632 = arith.index_cast %arg0 : i32 to index
    %633 = memref.load %arg1[%632] : memref<2xi32, #tpu.memory_space<smem>>
    %634 = tpu.iota {dimensions = array<i32: 1>} : vector<1x6xi32>
    %635 = vector.broadcast %633 : i32 to vector<1x6xi32>
    %636 = arith.cmpi slt, %634, %635 : vector<1x6xi32>
    %cst_408 = arith.constant 0.000000e+00 : f32
    %cst_409 = arith.constant -1.000000e+09 : f32
    %637 = vector.broadcast %cst_408 : f32 to vector<1x6xf32>
    %638 = vector.broadcast %cst_409 : f32 to vector<1x6xf32>
    %639 = arith.select %636, %637, %638 : vector<1x6xi1>, vector<1x6xf32>
    %640 = vector.broadcast %639 : vector<1x6xf32> to vector<8x6xf32>
    %641 = arith.addf %631, %640 : vector<8x6xf32>
    %cst_410 = arith.constant dense<0xFF800000> : vector<8xf32>
    %642 = vector.multi_reduction <maximumf>, %641, %cst_410 [1] : vector<8x6xf32> to vector<8xf32>
    %643 = vector.shape_cast %642 : vector<8xf32> to vector<8x1xf32>
    %644 = vector.broadcast %643 : vector<8x1xf32> to vector<8x6xf32>
    %645 = arith.subf %641, %644 : vector<8x6xf32>
    %646 = math.exp %645 : vector<8x6xf32>
    %cst_411 = arith.constant dense<0.000000e+00> : vector<8xf32>
    %647 = vector.multi_reduction <add>, %646, %cst_411 [1] : vector<8x6xf32> to vector<8xf32>
    %648 = vector.shape_cast %647 : vector<8xf32> to vector<8x1xf32>
    %649 = tpu.reciprocal %648 {approx = true} : vector<8x1xf32> -> vector<8x1xf32>
    %650 = vector.broadcast %649 : vector<8x1xf32> to vector<8x6xf32>
    %651 = arith.mulf %646, %650 : vector<8x6xf32>
    %cst_412 = arith.constant dense<0.000000e+00> : vector<8x32xf32>
    %652 = tpu.matmul %651, %628, %cst_412 {dimension_numbers = #tpu.dot_dimension_numbers<[1], [0], [0], [1], [0, 0, 1, 1], [], []>} : vector<8x6xf32>, vector<6x32xf32>, vector<8x32xf32> -> vector<8x32xf32>
    %c0_413 = arith.constant 0 : index
    %c0_414 = arith.constant 0 : index
    %c0_415 = arith.constant 0 : index
    %653 = vector.load %arg4[%c0_413, %c0_414, %c0_415] : memref<1x8x1xf32, #tpu.memory_space<vmem>>, vector<1x8x1xf32>
    %654 = vector.shape_cast %653 : vector<1x8x1xf32> to vector<8x1xf32>
    %cst_416 = arith.constant 0.000000e+00 : f32
    %655 = vector.broadcast %cst_416 : f32 to vector<8x1xf32>
    %656 = arith.cmpf ogt, %654, %655 : vector<8x1xf32>
    %cst_417 = arith.constant -1.000000e+30 : f32
    %657 = vector.shape_cast %656 : vector<8x1xi1> to vector<8x1xi1>
    %658 = vector.broadcast %657 : vector<8x1xi1> to vector<8x32xi1>
    %659 = vector.broadcast %cst_417 : f32 to vector<8x32xf32>
    %660 = arith.select %658, %652, %659 : vector<8x32xi1>, vector<8x32xf32>
    %cst_418 = arith.constant dense<0xFF800000> : vector<32xf32>
    %661 = vector.multi_reduction <maximumf>, %660, %cst_418 [0] : vector<8x32xf32> to vector<32xf32>
    %662 = vector.shape_cast %661 : vector<32xf32> to vector<1x32xf32>
    %c0_419 = arith.constant 0 : index
    %c0_420 = arith.constant 0 : index
    %663 = vector.load %arg31[%c0_419, %c0_420] : memref<8x32xf32, #tpu.memory_space<vmem>>, vector<8x32xf32>
    %664 = vector.broadcast %662 : vector<1x32xf32> to vector<8x32xf32>
    %665 = arith.addf %664, %663 : vector<8x32xf32>
    %c0_421 = arith.constant 0 : index
    %c0_422 = arith.constant 0 : index
    %666 = vector.load %arg32[%c0_421, %c0_422] : memref<32x2xf32, #tpu.memory_space<vmem>>, vector<32x2xf32>
    %cst_423 = arith.constant dense<0.000000e+00> : vector<8x2xf32>
    %667 = tpu.matmul %665, %666, %cst_423 {dimension_numbers = #tpu.dot_dimension_numbers<[1], [0], [0], [1], [0, 0, 1, 1], [], []>} : vector<8x32xf32>, vector<32x2xf32>, vector<8x2xf32> -> vector<8x2xf32>
    %c0_424 = arith.constant 0 : index
    %c0_425 = arith.constant 0 : index
    %668 = vector.load %arg33[%c0_424, %c0_425] : memref<1x2xf32, #tpu.memory_space<vmem>>, vector<1x2xf32>
    %669 = vector.broadcast %668 : vector<1x2xf32> to vector<8x2xf32>
    %670 = arith.addf %667, %669 : vector<8x2xf32>
    %c0_426 = arith.constant 0 : index
    %c0_427 = arith.constant 0 : index
    %c0_428 = arith.constant 0 : index
    %671 = vector.load %arg34[%c0_426, %c0_427, %c0_428] : memref<1x8x2xf32, #tpu.memory_space<vmem>>, vector<1x8x2xf32>
    %672 = vector.shape_cast %671 : vector<1x8x2xf32> to vector<8x2xf32>
    %673 = vector.shape_cast %670 : vector<8x2xf32> to vector<1x8x2xf32>
    tpu.vector_store %arg34[%c0_426, %c0_427, %c0_428], %673 {strides = array<i32>} : memref<1x8x2xf32, #tpu.memory_space<vmem>>, vector<1x8x2xf32>,
    return
  }
  func.func @transform_0(%arg0: i32, %arg1: memref<2xi32, #tpu.memory_space<smem>>) -> (i32, i32, i32) {
    %c0_i32 = arith.constant 0 : i32
    %c0_i32_0 = arith.constant 0 : i32
    %c0_i32_1 = arith.constant 0 : i32
    return %arg0, %c0_i32, %c0_i32_0 : i32, i32, i32
  }
  func.func @transform_1(%arg0: i32, %arg1: memref<2xi32, #tpu.memory_space<smem>>) -> (i32, i32, i32) {
    %c0_i32 = arith.constant 0 : i32
    %c0_i32_0 = arith.constant 0 : i32
    %c0_i32_1 = arith.constant 0 : i32
    return %arg0, %c0_i32, %c0_i32_0 : i32, i32, i32
  }
  func.func @transform_2(%arg0: i32, %arg1: memref<2xi32, #tpu.memory_space<smem>>) -> (i32, i32, i32) {
    %c0_i32 = arith.constant 0 : i32
    %c0_i32_0 = arith.constant 0 : i32
    %c0_i32_1 = arith.constant 0 : i32
    return %arg0, %c0_i32, %c0_i32_0 : i32, i32, i32
  }
  func.func @transform_3(%arg0: i32, %arg1: memref<2xi32, #tpu.memory_space<smem>>) -> (i32, i32, i32) {
    %c0_i32 = arith.constant 0 : i32
    %c0_i32_0 = arith.constant 0 : i32
    %c0_i32_1 = arith.constant 0 : i32
    %c0_i32_2 = arith.constant 0 : i32
    return %c0_i32, %c0_i32_0, %c0_i32_1 : i32, i32, i32
  }
  func.func @transform_4(%arg0: i32, %arg1: memref<2xi32, #tpu.memory_space<smem>>) -> (i32, i32, i32) {
    %c0_i32 = arith.constant 0 : i32
    %c0_i32_0 = arith.constant 0 : i32
    %c0_i32_1 = arith.constant 0 : i32
    %c0_i32_2 = arith.constant 0 : i32
    return %c0_i32, %c0_i32_0, %c0_i32_1 : i32, i32, i32
  }
  func.func @transform_5(%arg0: i32, %arg1: memref<2xi32, #tpu.memory_space<smem>>) -> (i32, i32, i32) {
    %c0_i32 = arith.constant 0 : i32
    %c0_i32_0 = arith.constant 0 : i32
    %c0_i32_1 = arith.constant 0 : i32
    %c0_i32_2 = arith.constant 0 : i32
    return %c0_i32, %c0_i32_0, %c0_i32_1 : i32, i32, i32
  }
  func.func @transform_6(%arg0: i32, %arg1: memref<2xi32, #tpu.memory_space<smem>>) -> (i32, i32, i32) {
    %c0_i32 = arith.constant 0 : i32
    %c0_i32_0 = arith.constant 0 : i32
    %c0_i32_1 = arith.constant 0 : i32
    %c0_i32_2 = arith.constant 0 : i32
    return %c0_i32, %c0_i32_0, %c0_i32_1 : i32, i32, i32
  }
  func.func @transform_7(%arg0: i32, %arg1: memref<2xi32, #tpu.memory_space<smem>>) -> (i32, i32, i32) {
    %c0_i32 = arith.constant 0 : i32
    %c0_i32_0 = arith.constant 0 : i32
    %c0_i32_1 = arith.constant 0 : i32
    %c0_i32_2 = arith.constant 0 : i32
    return %c0_i32, %c0_i32_0, %c0_i32_1 : i32, i32, i32
  }
  func.func @transform_8(%arg0: i32, %arg1: memref<2xi32, #tpu.memory_space<smem>>) -> (i32, i32, i32) {
    %c0_i32 = arith.constant 0 : i32
    %c0_i32_0 = arith.constant 0 : i32
    %c0_i32_1 = arith.constant 0 : i32
    %c0_i32_2 = arith.constant 0 : i32
    return %c0_i32, %c0_i32_0, %c0_i32_1 : i32, i32, i32
  }
  func.func @transform_9(%arg0: i32, %arg1: memref<2xi32, #tpu.memory_space<smem>>) -> (i32, i32, i32) {
    %c0_i32 = arith.constant 0 : i32
    %c0_i32_0 = arith.constant 0 : i32
    %c0_i32_1 = arith.constant 0 : i32
    %c0_i32_2 = arith.constant 0 : i32
    return %c0_i32, %c0_i32_0, %c0_i32_1 : i32, i32, i32
  }
  func.func @transform_10(%arg0: i32, %arg1: memref<2xi32, #tpu.memory_space<smem>>) -> (i32, i32, i32) {
    %c0_i32 = arith.constant 0 : i32
    %c0_i32_0 = arith.constant 0 : i32
    %c0_i32_1 = arith.constant 0 : i32
    %c0_i32_2 = arith.constant 0 : i32
    return %c0_i32, %c0_i32_0, %c0_i32_1 : i32, i32, i32
  }
  func.func @transform_11(%arg0: i32, %arg1: memref<2xi32, #tpu.memory_space<smem>>) -> (i32, i32, i32) {
    %c0_i32 = arith.constant 0 : i32
    %c0_i32_0 = arith.constant 0 : i32
    %c0_i32_1 = arith.constant 0 : i32
    %c0_i32_2 = arith.constant 0 : i32
    return %c0_i32, %c0_i32_0, %c0_i32_1 : i32, i32, i32
  }
  func.func @transform_12(%arg0: i32, %arg1: memref<2xi32, #tpu.memory_space<smem>>) -> (i32, i32, i32) {
    %c0_i32 = arith.constant 0 : i32
    %c0_i32_0 = arith.constant 0 : i32
    %c0_i32_1 = arith.constant 0 : i32
    %c0_i32_2 = arith.constant 0 : i32
    return %c0_i32, %c0_i32_0, %c0_i32_1 : i32, i32, i32
  }
  func.func @transform_13(%arg0: i32, %arg1: memref<2xi32, #tpu.memory_space<smem>>) -> (i32, i32, i32) {
    %c0_i32 = arith.constant 0 : i32
    %c0_i32_0 = arith.constant 0 : i32
    %c0_i32_1 = arith.constant 0 : i32
    %c0_i32_2 = arith.constant 0 : i32
    return %c0_i32, %c0_i32_0, %c0_i32_1 : i32, i32, i32
  }
  func.func @transform_14(%arg0: i32, %arg1: memref<2xi32, #tpu.memory_space<smem>>) -> (i32, i32) {
    %c0_i32 = arith.constant 0 : i32
    %c0_i32_0 = arith.constant 0 : i32
    %c0_i32_1 = arith.constant 0 : i32
    return %c0_i32, %c0_i32_0 : i32, i32
  }
  func.func @transform_15(%arg0: i32, %arg1: memref<2xi32, #tpu.memory_space<smem>>) -> (i32, i32) {
    %c0_i32 = arith.constant 0 : i32
    %c0_i32_0 = arith.constant 0 : i32
    %c0_i32_1 = arith.constant 0 : i32
    return %c0_i32, %c0_i32_0 : i32, i32
  }
  func.func @transform_16(%arg0: i32, %arg1: memref<2xi32, #tpu.memory_space<smem>>) -> (i32, i32) {
    %c0_i32 = arith.constant 0 : i32
    %c0_i32_0 = arith.constant 0 : i32
    %c0_i32_1 = arith.constant 0 : i32
    return %c0_i32, %c0_i32_0 : i32, i32
  }
  func.func @transform_17(%arg0: i32, %arg1: memref<2xi32, #tpu.memory_space<smem>>) -> (i32, i32) {
    %c0_i32 = arith.constant 0 : i32
    %c0_i32_0 = arith.constant 0 : i32
    %c0_i32_1 = arith.constant 0 : i32
    return %c0_i32, %c0_i32_0 : i32, i32
  }
  func.func @transform_18(%arg0: i32, %arg1: memref<2xi32, #tpu.memory_space<smem>>) -> (i32, i32) {
    %c0_i32 = arith.constant 0 : i32
    %c0_i32_0 = arith.constant 0 : i32
    %c0_i32_1 = arith.constant 0 : i32
    return %c0_i32, %c0_i32_0 : i32, i32
  }
  func.func @transform_19(%arg0: i32, %arg1: memref<2xi32, #tpu.memory_space<smem>>) -> (i32, i32) {
    %c0_i32 = arith.constant 0 : i32
    %c0_i32_0 = arith.constant 0 : i32
    %c0_i32_1 = arith.constant 0 : i32
    return %c0_i32, %c0_i32_0 : i32, i32
  }
  func.func @transform_20(%arg0: i32, %arg1: memref<2xi32, #tpu.memory_space<smem>>) -> (i32, i32) {
    %c0_i32 = arith.constant 0 : i32
    %c0_i32_0 = arith.constant 0 : i32
    %c0_i32_1 = arith.constant 0 : i32
    return %c0_i32, %c0_i32_0 : i32, i32
  }
  func.func @transform_21(%arg0: i32, %arg1: memref<2xi32, #tpu.memory_space<smem>>) -> (i32, i32) {
    %c0_i32 = arith.constant 0 : i32
    %c0_i32_0 = arith.constant 0 : i32
    %c0_i32_1 = arith.constant 0 : i32
    return %c0_i32, %c0_i32_0 : i32, i32
  }
  func.func @transform_22(%arg0: i32, %arg1: memref<2xi32, #tpu.memory_space<smem>>) -> (i32, i32) {
    %c0_i32 = arith.constant 0 : i32
    %c0_i32_0 = arith.constant 0 : i32
    %c0_i32_1 = arith.constant 0 : i32
    return %c0_i32, %c0_i32_0 : i32, i32
  }
  func.func @transform_23(%arg0: i32, %arg1: memref<2xi32, #tpu.memory_space<smem>>) -> (i32, i32) {
    %c0_i32 = arith.constant 0 : i32
    %c0_i32_0 = arith.constant 0 : i32
    %c0_i32_1 = arith.constant 0 : i32
    return %c0_i32, %c0_i32_0 : i32, i32
  }
  func.func @transform_24(%arg0: i32, %arg1: memref<2xi32, #tpu.memory_space<smem>>) -> (i32, i32) {
    %c0_i32 = arith.constant 0 : i32
    %c0_i32_0 = arith.constant 0 : i32
    %c0_i32_1 = arith.constant 0 : i32
    return %c0_i32, %c0_i32_0 : i32, i32
  }
  func.func @transform_25(%arg0: i32, %arg1: memref<2xi32, #tpu.memory_space<smem>>) -> (i32, i32) {
    %c0_i32 = arith.constant 0 : i32
    %c0_i32_0 = arith.constant 0 : i32
    %c0_i32_1 = arith.constant 0 : i32
    return %c0_i32, %c0_i32_0 : i32, i32
  }
  func.func @transform_26(%arg0: i32, %arg1: memref<2xi32, #tpu.memory_space<smem>>) -> (i32, i32) {
    %c0_i32 = arith.constant 0 : i32
    %c0_i32_0 = arith.constant 0 : i32
    %c0_i32_1 = arith.constant 0 : i32
    return %c0_i32, %c0_i32_0 : i32, i32
  }
  func.func @transform_27(%arg0: i32, %arg1: memref<2xi32, #tpu.memory_space<smem>>) -> (i32, i32) {
    %c0_i32 = arith.constant 0 : i32
    %c0_i32_0 = arith.constant 0 : i32
    %c0_i32_1 = arith.constant 0 : i32
    return %c0_i32, %c0_i32_0 : i32, i32
  }
  func.func @transform_28(%arg0: i32, %arg1: memref<2xi32, #tpu.memory_space<smem>>) -> (i32, i32) {
    %c0_i32 = arith.constant 0 : i32
    %c0_i32_0 = arith.constant 0 : i32
    %c0_i32_1 = arith.constant 0 : i32
    return %c0_i32, %c0_i32_0 : i32, i32
  }
  func.func @transform_29(%arg0: i32, %arg1: memref<2xi32, #tpu.memory_space<smem>>) -> (i32, i32) {
    %c0_i32 = arith.constant 0 : i32
    %c0_i32_0 = arith.constant 0 : i32
    %c0_i32_1 = arith.constant 0 : i32
    return %c0_i32, %c0_i32_0 : i32, i32
  }
  func.func @transform_30(%arg0: i32, %arg1: memref<2xi32, #tpu.memory_space<smem>>) -> (i32, i32) {
    %c0_i32 = arith.constant 0 : i32
    %c0_i32_0 = arith.constant 0 : i32
    %c0_i32_1 = arith.constant 0 : i32
    return %c0_i32, %c0_i32_0 : i32, i32
  }
  func.func @transform_31(%arg0: i32, %arg1: memref<2xi32, #tpu.memory_space<smem>>) -> (i32, i32) {
    %c0_i32 = arith.constant 0 : i32
    %c0_i32_0 = arith.constant 0 : i32
    %c0_i32_1 = arith.constant 0 : i32
    return %c0_i32, %c0_i32_0 : i32, i32
  }
  func.func @transform_32(%arg0: i32, %arg1: memref<2xi32, #tpu.memory_space<smem>>) -> (i32, i32, i32) {
    %c0_i32 = arith.constant 0 : i32
    %c0_i32_0 = arith.constant 0 : i32
    %c0_i32_1 = arith.constant 0 : i32
    return %arg0, %c0_i32, %c0_i32_0 : i32, i32, i32
  }
}

</mosaic_0001>

<llo_original>
// kernel: big_model_forward.1
$region0: #{big_model_forward.1}
  #allocation0 [shape = 'u32[]', space=smem, size = 0x4, offset = 0x4, fixed_abs, tag = 'smem constant byte address 0x4 - core index']
  #allocation1 [shape = 'u32[72,128]{1,0:T(1,128)}', space=vmem, size = 0x9000, scoped, tag = 'internal scratch']
  #allocation2 [shape = 's32[1]{0}', space=sflag, size = 0x4, scoped, tag = 'scoped memory for big_model_forward.1']
  #allocation3 [shape = 'u8[512]{0}', space=smem, size = 0x200, scoped, tag = 'prefetched SMEM operand 0']
  %s0 = inlined_call_operand.smem [shape: u32[34], index: -1, kind: input, shape index: {}]
  %s1 = sld [smem:[%s0]]
  %s2 = scalar_lea.smem %s0, 1
  %s3 = sld [smem:[%s2]]
  %s4 = scalar_lea.smem %s0, 2
  %s5 = sld [smem:[%s4]]
  %s6 = scalar_lea.smem %s0, 3
  %s7 = sld [smem:[%s6]]
  %s8 = scalar_lea.smem %s0, 4
  %s9 = sld [smem:[%s8]]
  %s10 = scalar_lea.smem %s0, 5
  %s11 = sld [smem:[%s10]]
  %s12 = scalar_lea.smem %s0, 6
  %s13 = sld [smem:[%s12]]
  %s14 = scalar_lea.smem %s0, 7
  %s15 = sld [smem:[%s14]]
  %s16 = scalar_lea.smem %s0, 8
  %s17 = sld [smem:[%s16]]
  %s18 = scalar_lea.smem %s0, 9
  %s19 = sld [smem:[%s18]]
  %s20 = scalar_lea.smem %s0, 10
  %s21 = sld [smem:[%s20]]
  %s22 = scalar_lea.smem %s0, 11
  %s23 = sld [smem:[%s22]]
  %s24 = scalar_lea.smem %s0, 12
  %s25 = sld [smem:[%s24]]
  %s26 = scalar_lea.smem %s0, 13
  %s27 = sld [smem:[%s26]]
  %s28 = scalar_lea.smem %s0, 14
  %s29 = sld [smem:[%s28]]
  %s30 = scalar_lea.smem %s0, 15
  %s31 = sld [smem:[%s30]]
  %s32 = scalar_lea.smem %s0, 16
  %s33 = sld [smem:[%s32]]
  %s34 = scalar_lea.smem %s0, 17
  %s35 = sld [smem:[%s34]]
  %s36 = scalar_lea.smem %s0, 18
  %s37 = sld [smem:[%s36]]
  %s38 = scalar_lea.smem %s0, 19
  %s39 = sld [smem:[%s38]]
  %s40 = scalar_lea.smem %s0, 20
  %s41 = sld [smem:[%s40]]
  %s42 = scalar_lea.smem %s0, 21
  %s43 = sld [smem:[%s42]]
  %s44 = scalar_lea.smem %s0, 22
  %s45 = sld [smem:[%s44]]
  %s46 = scalar_lea.smem %s0, 23
  %s47 = sld [smem:[%s46]]
  %s48 = scalar_lea.smem %s0, 24
  %s49 = sld [smem:[%s48]]
  %s50 = scalar_lea.smem %s0, 25
  %s51 = sld [smem:[%s50]]
  %s52 = scalar_lea.smem %s0, 26
  %s53 = sld [smem:[%s52]]
  %s54 = scalar_lea.smem %s0, 27
  %s55 = sld [smem:[%s54]]
  %s56 = scalar_lea.smem %s0, 28
  %s57 = sld [smem:[%s56]]
  %s58 = scalar_lea.smem %s0, 29
  %s59 = sld [smem:[%s58]]
  %s60 = scalar_lea.smem %s0, 30
  %s61 = sld [smem:[%s60]]
  %s62 = scalar_lea.smem %s0, 31
  %s63 = sld [smem:[%s62]]
  %s64 = scalar_lea.smem %s0, 32
  %s65 = sld [smem:[%s64]]
  %s66 = scalar_lea.smem %s0, 33
  %s67 = sld [smem:[%s66]]
  %s68 = sld [smem:[#allocation0]]
  $region161: #{big_model_forward.1} parent=0
    _
  %s70 = ssub.s32 1, %s68
  %s71 = scalar_select 0, %s70, %s68
  %s73 = sshll.u32 %s1, 4
  %s74 = int_to_ptr.vmem [resolvable:$true] %s73
  %76 = dma.vmem_to_smem %s74, 16, [#allocation3], [#allocation2]
  %78 = dma.done [#allocation2], 16
  %79 = sfence
  loop: start=0, step=1, limit=4
  $region2: #{big_model_forward.1} parent=0 // loop_pre_header
    _
  $region3: #{big_model_forward.1} parent=0 // loop_header
    %s81 = sphi 0, %s85
    %p82 = scmp.ge.s32.totalorder %s81, 4
    %s91 = sphi 0, %s93
    %s94 = sphi 0, %s91
    %s95 = sphi 0, %s94
    %s111 = sphi 0, %s95
    %s117 = sphi 0, %s119
    %s120 = sphi 0, %s117
    %s121 = sphi 0, %s120
    %s137 = sphi 0, %s121
    %s143 = sphi 0, %s145
    %s146 = sphi 0, %s143
    %s147 = sphi 0, %s146
    %s163 = sphi 0, %s147
    %s167 = sphi 0, %s167
    %s169 = sphi 0, %s167
    %s170 = sphi 0, %s169
    %s184 = sphi 0, %s170
    %s188 = sphi 0, %s188
    %s190 = sphi 0, %s188
    %s191 = sphi 0, %s190
    %s205 = sphi 0, %s191
    %s209 = sphi 0, %s209
    %s211 = sphi 0, %s209
    %s212 = sphi 0, %s211
    %s226 = sphi 0, %s212
    %s230 = sphi 0, %s230
    %s232 = sphi 0, %s230
    %s233 = sphi 0, %s232
    %s247 = sphi 0, %s233
    %s251 = sphi 0, %s251
    %s253 = sphi 0, %s251
    %s254 = sphi 0, %s253
    %s268 = sphi 0, %s254
    %s272 = sphi 0, %s272
    %s274 = sphi 0, %s272
    %s275 = sphi 0, %s274
    %s289 = sphi 0, %s275
    %s293 = sphi 0, %s293
    %s295 = sphi 0, %s293
    %s296 = sphi 0, %s295
    %s310 = sphi 0, %s296
    %s314 = sphi 0, %s314
    %s316 = sphi 0, %s314
    %s317 = sphi 0, %s316
    %s331 = sphi 0, %s317
    %s335 = sphi 0, %s335
    %s337 = sphi 0, %s335
    %s338 = sphi 0, %s337
    %s352 = sphi 0, %s338
    %s356 = sphi 0, %s356
    %s358 = sphi 0, %s356
    %s359 = sphi 0, %s358
    %s373 = sphi 0, %s359
    %s377 = sphi 0, %s377
    %s379 = sphi 0, %s377
    %s380 = sphi 0, %s379
    %s394 = sphi 0, %s380
    %s398 = sphi 0, %s398
    %s400 = sphi 0, %s398
    %s401 = sphi 0, %s400
    %s415 = sphi 0, %s401
    %s419 = sphi 0, %s419
    %s421 = sphi 0, %s419
    %s422 = sphi 0, %s421
    %s436 = sphi 0, %s422
    %s440 = sphi 0, %s440
    %s442 = sphi 0, %s440
    %s443 = sphi 0, %s442
    %s457 = sphi 0, %s443
    %s461 = sphi 0, %s461
    %s463 = sphi 0, %s461
    %s464 = sphi 0, %s463
    %s478 = sphi 0, %s464
    %s482 = sphi 0, %s482
    %s484 = sphi 0, %s482
    %s485 = sphi 0, %s484
    %s499 = sphi 0, %s485
    %s503 = sphi 0, %s503
    %s505 = sphi 0, %s503
    %s506 = sphi 0, %s505
    %s520 = sphi 0, %s506
    %s524 = sphi 0, %s524
    %s526 = sphi 0, %s524
    %s527 = sphi 0, %s526
    %s541 = sphi 0, %s527
    %s545 = sphi 0, %s545
    %s547 = sphi 0, %s545
    %s548 = sphi 0, %s547
    %s562 = sphi 0, %s548
    %s566 = sphi 0, %s566
    %s568 = sphi 0, %s566
    %s569 = sphi 0, %s568
    %s583 = sphi 0, %s569
    %s587 = sphi 0, %s587
    %s589 = sphi 0, %s587
    %s590 = sphi 0, %s589
    %s604 = sphi 0, %s590
    %s608 = sphi 0, %s608
    %s610 = sphi 0, %s608
    %s611 = sphi 0, %s610
    %s625 = sphi 0, %s611
    %s629 = sphi 0, %s629
    %s631 = sphi 0, %s629
    %s632 = sphi 0, %s631
    %s646 = sphi 0, %s632
    %s650 = sphi 0, %s650
    %s652 = sphi 0, %s650
    %s653 = sphi 0, %s652
    %s667 = sphi 0, %s653
    %s671 = sphi 0, %s671
    %s673 = sphi 0, %s671
    %s674 = sphi 0, %s673
    %s688 = sphi 0, %s674
    %s692 = sphi 0, %s692
    %s694 = sphi 0, %s692
    %s695 = sphi 0, %s694
    %s709 = sphi 0, %s695
    %s713 = sphi 0, %s713
    %s715 = sphi 0, %s713
    %s716 = sphi 0, %s715
    %s730 = sphi 0, %s716
    %s734 = sphi 0, %s734
    %s736 = sphi 0, %s734
    %s737 = sphi 0, %s736
    %s751 = sphi 0, %s737
    %s755 = sphi 0, %s755
    %s757 = sphi 0, %s755
    %s758 = sphi 0, %s757
    %s772 = sphi 0, %s758
    %s778 = sphi 0, %s780
    %s781 = sphi 0, %s778
    %s782 = sphi 0, %s781
    %s798 = sphi 0, %s782
  $region4: #{big_model_forward.1} parent=0 // loop_header_branch
    %84 = sbr.rel (%p82) target = $region8
  $region5: #{big_model_forward.1} parent=0 // loop_body
    %s86 = ssub.s32 %s81, 1
    %s87 = ssub.s32 %s81, 2
    %s88 = sadd.s32 %s81, 1
    %s89 = ssub.s32 %s81, %s88
    %p90 = scmp.eq.s32.totalorder %s89, 0
    %s92 = sadd.s32 %s91, 1
    %s93 = scalar_select %p90, %s91, %s92
    %p96 = pneg %p90
    %p97 = scmp.eq.s32.totalorder %s81, 1
    %p98 = por %p96, %p97
    %p99 = scmp.ne.s32.totalorder %s91, %s94
    %p100 = scmp.eq.s32.totalorder %s81, 0
    %p101 = por %p99, %p100
    %p102 = scmp.ne.s32.totalorder %s91, %s94
    %p103 = scmp.eq.s32.totalorder %s86, 1
    %p104 = por %p102, %p103
    %p105 = scmp.ne.s32.totalorder %s94, %s95
    %p106 = scmp.eq.s32.totalorder %s86, 0
    %p107 = por %p105, %p106
    %p108 = scmp.ne.s32.totalorder %s94, %s95
    %p109 = scmp.eq.s32.totalorder %s87, 1
    %p110 = por %p108, %p109
    %p112 = scmp.ne.s32.totalorder %s95, %s111
    %p113 = scmp.eq.s32.totalorder %s87, 0
    %p114 = por %p112, %p113
    %s115 = ssub.s32 %s81, %s88
    %p116 = scmp.eq.s32.totalorder %s115, 0
    %s118 = sadd.s32 %s117, 1
    %s119 = scalar_select %p116, %s117, %s118
    %p122 = pneg %p116
    %p123 = scmp.eq.s32.totalorder %s81, 1
    %p124 = por %p122, %p123
    %p125 = scmp.ne.s32.totalorder %s117, %s120
    %p126 = scmp.eq.s32.totalorder %s81, 0
    %p127 = por %p125, %p126
    %p128 = scmp.ne.s32.totalorder %s117, %s120
    %p129 = scmp.eq.s32.totalorder %s86, 1
    %p130 = por %p128, %p129
    %p131 = scmp.ne.s32.totalorder %s120, %s121
    %p132 = scmp.eq.s32.totalorder %s86, 0
    %p133 = por %p131, %p132
    %p134 = scmp.ne.s32.totalorder %s120, %s121
    %p135 = scmp.eq.s32.totalorder %s87, 1
    %p136 = por %p134, %p135
    %p138 = scmp.ne.s32.totalorder %s121, %s137
    %p139 = scmp.eq.s32.totalorder %s87, 0
    %p140 = por %p138, %p139
    %s141 = ssub.s32 %s81, %s88
    %p142 = scmp.eq.s32.totalorder %s141, 0
    %s144 = sadd.s32 %s143, 1
    %s145 = scalar_select %p142, %s143, %s144
    %p148 = pneg %p142
    %p149 = scmp.eq.s32.totalorder %s81, 1
    %p150 = por %p148, %p149
    %p151 = scmp.ne.s32.totalorder %s143, %s146
    %p152 = scmp.eq.s32.totalorder %s81, 0
    %p153 = por %p151, %p152
    %p154 = scmp.ne.s32.totalorder %s143, %s146
    %p155 = scmp.eq.s32.totalorder %s86, 1
    %p156 = por %p154, %p155
    %p157 = scmp.ne.s32.totalorder %s146, %s147
    %p158 = scmp.eq.s32.totalorder %s86, 0
    %p159 = por %p157, %p158
    %p160 = scmp.ne.s32.totalorder %s146, %s147
    %p161 = scmp.eq.s32.totalorder %s87, 1
    %p162 = por %p160, %p161
    %p164 = scmp.ne.s32.totalorder %s147, %s163
    %p165 = scmp.eq.s32.totalorder %s87, 0
    %p166 = por %p164, %p165
    %s168 = sadd.s32 %s167, 1
    %p171 = scmp.eq.s32.totalorder %s81, 1
    %p172 = scmp.ne.s32.totalorder %s167, %s169
    %p173 = scmp.eq.s32.totalorder %s81, 0
    %p174 = por %p172, %p173
    %p175 = scmp.ne.s32.totalorder %s167, %s169
    %p176 = scmp.eq.s32.totalorder %s86, 1
    %p177 = por %p175, %p176
    %p178 = scmp.ne.s32.totalorder %s169, %s170
    %p179 = scmp.eq.s32.totalorder %s86, 0
    %p180 = por %p178, %p179
    %p181 = scmp.ne.s32.totalorder %s169, %s170
    %p182 = scmp.eq.s32.totalorder %s87, 1
    %p183 = por %p181, %p182
    %p185 = scmp.ne.s32.totalorder %s170, %s184
    %p186 = scmp.eq.s32.totalorder %s87, 0
    %p187 = por %p185, %p186
    %s189 = sadd.s32 %s188, 1
    %p192 = scmp.eq.s32.totalorder %s81, 1
    %p193 = scmp.ne.s32.totalorder %s188, %s190
    %p194 = scmp.eq.s32.totalorder %s81, 0
    %p195 = por %p193, %p194
    %p196 = scmp.ne.s32.totalorder %s188, %s190
    %p197 = scmp.eq.s32.totalorder %s86, 1
    %p198 = por %p196, %p197
    %p199 = scmp.ne.s32.totalorder %s190, %s191
    %p200 = scmp.eq.s32.totalorder %s86, 0
    %p201 = por %p199, %p200
    %p202 = scmp.ne.s32.totalorder %s190, %s191
    %p203 = scmp.eq.s32.totalorder %s87, 1
    %p204 = por %p202, %p203
    %p206 = scmp.ne.s32.totalorder %s191, %s205
    %p207 = scmp.eq.s32.totalorder %s87, 0
    %p208 = por %p206, %p207
    %s210 = sadd.s32 %s209, 1
    %p213 = scmp.eq.s32.totalorder %s81, 1
    %p214 = scmp.ne.s32.totalorder %s209, %s211
    %p215 = scmp.eq.s32.totalorder %s81, 0
    %p216 = por %p214, %p215
    %p217 = scmp.ne.s32.totalorder %s209, %s211
    %p218 = scmp.eq.s32.totalorder %s86, 1
    %p219 = por %p217, %p218
    %p220 = scmp.ne.s32.totalorder %s211, %s212
    %p221 = scmp.eq.s32.totalorder %s86, 0
    %p222 = por %p220, %p221
    %p223 = scmp.ne.s32.totalorder %s211, %s212
    %p224 = scmp.eq.s32.totalorder %s87, 1
    %p225 = por %p223, %p224
    %p227 = scmp.ne.s32.totalorder %s212, %s226
    %p228 = scmp.eq.s32.totalorder %s87, 0
    %p229 = por %p227, %p228
    %s231 = sadd.s32 %s230, 1
    %p234 = scmp.eq.s32.totalorder %s81, 1
    %p235 = scmp.ne.s32.totalorder %s230, %s232
    %p236 = scmp.eq.s32.totalorder %s81, 0
    %p237 = por %p235, %p236
    %p238 = scmp.ne.s32.totalorder %s230, %s232
    %p239 = scmp.eq.s32.totalorder %s86, 1
    %p240 = por %p238, %p239
    %p241 = scmp.ne.s32.totalorder %s232, %s233
    %p242 = scmp.eq.s32.totalorder %s86, 0
    %p243 = por %p241, %p242
    %p244 = scmp.ne.s32.totalorder %s232, %s233
    %p245 = scmp.eq.s32.totalorder %s87, 1
    %p246 = por %p244, %p245
    %p248 = scmp.ne.s32.totalorder %s233, %s247
    %p249 = scmp.eq.s32.totalorder %s87, 0
    %p250 = por %p248, %p249
    %s252 = sadd.s32 %s251, 1
    %p255 = scmp.eq.s32.totalorder %s81, 1
    %p256 = scmp.ne.s32.totalorder %s251, %s253
    %p257 = scmp.eq.s32.totalorder %s81, 0
    %p258 = por %p256, %p257
    %p259 = scmp.ne.s32.totalorder %s251, %s253
    %p260 = scmp.eq.s32.totalorder %s86, 1
    %p261 = por %p259, %p260
    %p262 = scmp.ne.s32.totalorder %s253, %s254
    %p263 = scmp.eq.s32.totalorder %s86, 0
    %p264 = por %p262, %p263
    %p265 = scmp.ne.s32.totalorder %s253, %s254
    %p266 = scmp.eq.s32.totalorder %s87, 1
    %p267 = por %p265, %p266
    %p269 = scmp.ne.s32.totalorder %s254, %s268
    %p270 = scmp.eq.s32.totalorder %s87, 0
    %p271 = por %p269, %p270
    %s273 = sadd.s32 %s272, 1
    %p276 = scmp.eq.s32.totalorder %s81, 1
    %p277 = scmp.ne.s32.totalorder %s272, %s274
    %p278 = scmp.eq.s32.totalorder %s81, 0
    %p279 = por %p277, %p278
    %p280 = scmp.ne.s32.totalorder %s272, %s274
    %p281 = scmp.eq.s32.totalorder %s86, 1
    %p282 = por %p280, %p281
    %p283 = scmp.ne.s32.totalorder %s274, %s275
    %p284 = scmp.eq.s32.totalorder %s86, 0
    %p285 = por %p283, %p284
    %p286 = scmp.ne.s32.totalorder %s274, %s275
    %p287 = scmp.eq.s32.totalorder %s87, 1
    %p288 = por %p286, %p287
    %p290 = scmp.ne.s32.totalorder %s275, %s289
    %p291 = scmp.eq.s32.totalorder %s87, 0
    %p292 = por %p290, %p291
    %s294 = sadd.s32 %s293, 1
    %p297 = scmp.eq.s32.totalorder %s81, 1
    %p298 = scmp.ne.s32.totalorder %s293, %s295
    %p299 = scmp.eq.s32.totalorder %s81, 0
    %p300 = por %p298, %p299
    %p301 = scmp.ne.s32.totalorder %s293, %s295
    %p302 = scmp.eq.s32.totalorder %s86, 1
    %p303 = por %p301, %p302
    %p304 = scmp.ne.s32.totalorder %s295, %s296
    %p305 = scmp.eq.s32.totalorder %s86, 0
    %p306 = por %p304, %p305
    %p307 = scmp.ne.s32.totalorder %s295, %s296
    %p308 = scmp.eq.s32.totalorder %s87, 1
    %p309 = por %p307, %p308
    %p311 = scmp.ne.s32.totalorder %s296, %s310
    %p312 = scmp.eq.s32.totalorder %s87, 0
    %p313 = por %p311, %p312
    %s315 = sadd.s32 %s314, 1
    %p318 = scmp.eq.s32.totalorder %s81, 1
    %p319 = scmp.ne.s32.totalorder %s314, %s316
    %p320 = scmp.eq.s32.totalorder %s81, 0
    %p321 = por %p319, %p320
    %p322 = scmp.ne.s32.totalorder %s314, %s316
    %p323 = scmp.eq.s32.totalorder %s86, 1
    %p324 = por %p322, %p323
    %p325 = scmp.ne.s32.totalorder %s316, %s317
    %p326 = scmp.eq.s32.totalorder %s86, 0
    %p327 = por %p325, %p326
    %p328 = scmp.ne.s32.totalorder %s316, %s317
    %p329 = scmp.eq.s32.totalorder %s87, 1
    %p330 = por %p328, %p329
    %p332 = scmp.ne.s32.totalorder %s317, %s331
    %p333 = scmp.eq.s32.totalorder %s87, 0
    %p334 = por %p332, %p333
    %s336 = sadd.s32 %s335, 1
    %p339 = scmp.eq.s32.totalorder %s81, 1
    %p340 = scmp.ne.s32.totalorder %s335, %s337
    %p341 = scmp.eq.s32.totalorder %s81, 0
    %p342 = por %p340, %p341
    %p343 = scmp.ne.s32.totalorder %s335, %s337
    %p344 = scmp.eq.s32.totalorder %s86, 1
    %p345 = por %p343, %p344
    %p346 = scmp.ne.s32.totalorder %s337, %s338
    %p347 = scmp.eq.s32.totalorder %s86, 0
    %p348 = por %p346, %p347
    %p349 = scmp.ne.s32.totalorder %s337, %s338
    %p350 = scmp.eq.s32.totalorder %s87, 1
    %p351 = por %p349, %p350
    %p353 = scmp.ne.s32.totalorder %s338, %s352
    %p354 = scmp.eq.s32.totalorder %s87, 0
    %p355 = por %p353, %p354
    %s357 = sadd.s32 %s356, 1
    %p360 = scmp.eq.s32.totalorder %s81, 1
    %p361 = scmp.ne.s32.totalorder %s356, %s358
    %p362 = scmp.eq.s32.totalorder %s81, 0
    %p363 = por %p361, %p362
    %p364 = scmp.ne.s32.totalorder %s356, %s358
    %p365 = scmp.eq.s32.totalorder %s86, 1
    %p366 = por %p364, %p365
    %p367 = scmp.ne.s32.totalorder %s358, %s359
    %p368 = scmp.eq.s32.totalorder %s86, 0
    %p369 = por %p367, %p368
    %p370 = scmp.ne.s32.totalorder %s358, %s359
    %p371 = scmp.eq.s32.totalorder %s87, 1
    %p372 = por %p370, %p371
    %p374 = scmp.ne.s32.totalorder %s359, %s373
    %p375 = scmp.eq.s32.totalorder %s87, 0
    %p376 = por %p374, %p375
    %s378 = sadd.s32 %s377, 1
    %p381 = scmp.eq.s32.totalorder %s81, 1
    %p382 = scmp.ne.s32.totalorder %s377, %s379
    %p383 = scmp.eq.s32.totalorder %s81, 0
    %p384 = por %p382, %p383
    %p385 = scmp.ne.s32.totalorder %s377, %s379
    %p386 = scmp.eq.s32.totalorder %s86, 1
    %p387 = por %p385, %p386
    %p388 = scmp.ne.s32.totalorder %s379, %s380
    %p389 = scmp.eq.s32.totalorder %s86, 0
    %p390 = por %p388, %p389
    %p391 = scmp.ne.s32.totalorder %s379, %s380
    %p392 = scmp.eq.s32.totalorder %s87, 1
    %p393 = por %p391, %p392
    %p395 = scmp.ne.s32.totalorder %s380, %s394
    %p396 = scmp.eq.s32.totalorder %s87, 0
    %p397 = por %p395, %p396
    %s399 = sadd.s32 %s398, 1
    %p402 = scmp.eq.s32.totalorder %s81, 1
    %p403 = scmp.ne.s32.totalorder %s398, %s400
    %p404 = scmp.eq.s32.totalorder %s81, 0
    %p405 = por %p403, %p404
    %p406 = scmp.ne.s32.totalorder %s398, %s400
    %p407 = scmp.eq.s32.totalorder %s86, 1
    %p408 = por %p406, %p407
    %p409 = scmp.ne.s32.totalorder %s400, %s401
    %p410 = scmp.eq.s32.totalorder %s86, 0
    %p411 = por %p409, %p410
    %p412 = scmp.ne.s32.totalorder %s400, %s401
    %p413 = scmp.eq.s32.totalorder %s87, 1
    %p414 = por %p412, %p413
    %p416 = scmp.ne.s32.totalorder %s401, %s415
    %p417 = scmp.eq.s32.totalorder %s87, 0
    %p418 = por %p416, %p417
    %s420 = sadd.s32 %s419, 1
    %p423 = scmp.eq.s32.totalorder %s81, 1
    %p424 = scmp.ne.s32.totalorder %s419, %s421
    %p425 = scmp.eq.s32.totalorder %s81, 0
    %p426 = por %p424, %p425
    %p427 = scmp.ne.s32.totalorder %s419, %s421
    %p428 = scmp.eq.s32.totalorder %s86, 1
    %p429 = por %p427, %p428
    %p430 = scmp.ne.s32.totalorder %s421, %s422
    %p431 = scmp.eq.s32.totalorder %s86, 0
    %p432 = por %p430, %p431
    %p433 = scmp.ne.s32.totalorder %s421, %s422
    %p434 = scmp.eq.s32.totalorder %s87, 1
    %p435 = por %p433, %p434
    %p437 = scmp.ne.s32.totalorder %s422, %s436
    %p438 = scmp.eq.s32.totalorder %s87, 0
    %p439 = por %p437, %p438
    %s441 = sadd.s32 %s440, 1
    %p444 = scmp.eq.s32.totalorder %s81, 1
    %p445 = scmp.ne.s32.totalorder %s440, %s442
    %p446 = scmp.eq.s32.totalorder %s81, 0
    %p447 = por %p445, %p446
    %p448 = scmp.ne.s32.totalorder %s440, %s442
    %p449 = scmp.eq.s32.totalorder %s86, 1
    %p450 = por %p448, %p449
    %p451 = scmp.ne.s32.totalorder %s442, %s443
    %p452 = scmp.eq.s32.totalorder %s86, 0
    %p453 = por %p451, %p452
    %p454 = scmp.ne.s32.totalorder %s442, %s443
    %p455 = scmp.eq.s32.totalorder %s87, 1
    %p456 = por %p454, %p455
    %p458 = scmp.ne.s32.totalorder %s443, %s457
    %p459 = scmp.eq.s32.totalorder %s87, 0
    %p460 = por %p458, %p459
    %s462 = sadd.s32 %s461, 1
    %p465 = scmp.eq.s32.totalorder %s81, 1
    %p466 = scmp.ne.s32.totalorder %s461, %s463
    %p467 = scmp.eq.s32.totalorder %s81, 0
    %p468 = por %p466, %p467
    %p469 = scmp.ne.s32.totalorder %s461, %s463
    %p470 = scmp.eq.s32.totalorder %s86, 1
    %p471 = por %p469, %p470
    %p472 = scmp.ne.s32.totalorder %s463, %s464
    %p473 = scmp.eq.s32.totalorder %s86, 0
    %p474 = por %p472, %p473
    %p475 = scmp.ne.s32.totalorder %s463, %s464
    %p476 = scmp.eq.s32.totalorder %s87, 1
    %p477 = por %p475, %p476
    %p479 = scmp.ne.s32.totalorder %s464, %s478
    %p480 = scmp.eq.s32.totalorder %s87, 0
    %p481 = por %p479, %p480
    %s483 = sadd.s32 %s482, 1
    %p486 = scmp.eq.s32.totalorder %s81, 1
    %p487 = scmp.ne.s32.totalorder %s482, %s484
    %p488 = scmp.eq.s32.totalorder %s81, 0
    %p489 = por %p487, %p488
    %p490 = scmp.ne.s32.totalorder %s482, %s484
    %p491 = scmp.eq.s32.totalorder %s86, 1
    %p492 = por %p490, %p491
    %p493 = scmp.ne.s32.totalorder %s484, %s485
    %p494 = scmp.eq.s32.totalorder %s86, 0
    %p495 = por %p493, %p494
    %p496 = scmp.ne.s32.totalorder %s484, %s485
    %p497 = scmp.eq.s32.totalorder %s87, 1
    %p498 = por %p496, %p497
    %p500 = scmp.ne.s32.totalorder %s485, %s499
    %p501 = scmp.eq.s32.totalorder %s87, 0
    %p502 = por %p500, %p501
    %s504 = sadd.s32 %s503, 1
    %p507 = scmp.eq.s32.totalorder %s81, 1
    %p508 = scmp.ne.s32.totalorder %s503, %s505
    %p509 = scmp.eq.s32.totalorder %s81, 0
    %p510 = por %p508, %p509
    %p511 = scmp.ne.s32.totalorder %s503, %s505
    %p512 = scmp.eq.s32.totalorder %s86, 1
    %p513 = por %p511, %p512
    %p514 = scmp.ne.s32.totalorder %s505, %s506
    %p515 = scmp.eq.s32.totalorder %s86, 0
    %p516 = por %p514, %p515
    %p517 = scmp.ne.s32.totalorder %s505, %s506
    %p518 = scmp.eq.s32.totalorder %s87, 1
    %p519 = por %p517, %p518
    %p521 = scmp.ne.s32.totalorder %s506, %s520
    %p522 = scmp.eq.s32.totalorder %s87, 0
    %p523 = por %p521, %p522
    %s525 = sadd.s32 %s524, 1
    %p528 = scmp.eq.s32.totalorder %s81, 1
    %p529 = scmp.ne.s32.totalorder %s524, %s526
    %p530 = scmp.eq.s32.totalorder %s81, 0
    %p531 = por %p529, %p530
    %p532 = scmp.ne.s32.totalorder %s524, %s526
    %p533 = scmp.eq.s32.totalorder %s86, 1
    %p534 = por %p532, %p533
    %p535 = scmp.ne.s32.totalorder %s526, %s527
    %p536 = scmp.eq.s32.totalorder %s86, 0
    %p537 = por %p535, %p536
    %p538 = scmp.ne.s32.totalorder %s526, %s527
    %p539 = scmp.eq.s32.totalorder %s87, 1
    %p540 = por %p538, %p539
    %p542 = scmp.ne.s32.totalorder %s527, %s541
    %p543 = scmp.eq.s32.totalorder %s87, 0
    %p544 = por %p542, %p543
    %s546 = sadd.s32 %s545, 1
    %p549 = scmp.eq.s32.totalorder %s81, 1
    %p550 = scmp.ne.s32.totalorder %s545, %s547
    %p551 = scmp.eq.s32.totalorder %s81, 0
    %p552 = por %p550, %p551
    %p553 = scmp.ne.s32.totalorder %s545, %s547
    %p554 = scmp.eq.s32.totalorder %s86, 1
    %p555 = por %p553, %p554
    %p556 = scmp.ne.s32.totalorder %s547, %s548
    %p557 = scmp.eq.s32.totalorder %s86, 0
    %p558 = por %p556, %p557
    %p559 = scmp.ne.s32.totalorder %s547, %s548
    %p560 = scmp.eq.s32.totalorder %s87, 1
    %p561 = por %p559, %p560
    %p563 = scmp.ne.s32.totalorder %s548, %s562
    %p564 = scmp.eq.s32.totalorder %s87, 0
    %p565 = por %p563, %p564
    %s567 = sadd.s32 %s566, 1
    %p570 = scmp.eq.s32.totalorder %s81, 1
    %p571 = scmp.ne.s32.totalorder %s566, %s568
    %p572 = scmp.eq.s32.totalorder %s81, 0
    %p573 = por %p571, %p572
    %p574 = scmp.ne.s32.totalorder %s566, %s568
    %p575 = scmp.eq.s32.totalorder %s86, 1
    %p576 = por %p574, %p575
    %p577 = scmp.ne.s32.totalorder %s568, %s569
    %p578 = scmp.eq.s32.totalorder %s86, 0
    %p579 = por %p577, %p578
    %p580 = scmp.ne.s32.totalorder %s568, %s569
    %p581 = scmp.eq.s32.totalorder %s87, 1
    %p582 = por %p580, %p581
    %p584 = scmp.ne.s32.totalorder %s569, %s583
    %p585 = scmp.eq.s32.totalorder %s87, 0
    %p586 = por %p584, %p585
    %s588 = sadd.s32 %s587, 1
    %p591 = scmp.eq.s32.totalorder %s81, 1
    %p592 = scmp.ne.s32.totalorder %s587, %s589
    %p593 = scmp.eq.s32.totalorder %s81, 0
    %p594 = por %p592, %p593
    %p595 = scmp.ne.s32.totalorder %s587, %s589
    %p596 = scmp.eq.s32.totalorder %s86, 1
    %p597 = por %p595, %p596
    %p598 = scmp.ne.s32.totalorder %s589, %s590
    %p599 = scmp.eq.s32.totalorder %s86, 0
    %p600 = por %p598, %p599
    %p601 = scmp.ne.s32.totalorder %s589, %s590
    %p602 = scmp.eq.s32.totalorder %s87, 1
    %p603 = por %p601, %p602
    %p605 = scmp.ne.s32.totalorder %s590, %s604
    %p606 = scmp.eq.s32.totalorder %s87, 0
    %p607 = por %p605, %p606
    %s609 = sadd.s32 %s608, 1
    %p612 = scmp.eq.s32.totalorder %s81, 1
    %p613 = scmp.ne.s32.totalorder %s608, %s610
    %p614 = scmp.eq.s32.totalorder %s81, 0
    %p615 = por %p613, %p614
    %p616 = scmp.ne.s32.totalorder %s608, %s610
    %p617 = scmp.eq.s32.totalorder %s86, 1
    %p618 = por %p616, %p617
    %p619 = scmp.ne.s32.totalorder %s610, %s611
    %p620 = scmp.eq.s32.totalorder %s86, 0
    %p621 = por %p619, %p620
    %p622 = scmp.ne.s32.totalorder %s610, %s611
    %p623 = scmp.eq.s32.totalorder %s87, 1
    %p624 = por %p622, %p623
    %p626 = scmp.ne.s32.totalorder %s611, %s625
    %p627 = scmp.eq.s32.totalorder %s87, 0
    %p628 = por %p626, %p627
    %s630 = sadd.s32 %s629, 1
    %p633 = scmp.eq.s32.totalorder %s81, 1
    %p634 = scmp.ne.s32.totalorder %s629, %s631
    %p635 = scmp.eq.s32.totalorder %s81, 0
    %p636 = por %p634, %p635
    %p637 = scmp.ne.s32.totalorder %s629, %s631
    %p638 = scmp.eq.s32.totalorder %s86, 1
    %p639 = por %p637, %p638
    %p640 = scmp.ne.s32.totalorder %s631, %s632
    %p641 = scmp.eq.s32.totalorder %s86, 0
    %p642 = por %p640, %p641
    %p643 = scmp.ne.s32.totalorder %s631, %s632
    %p644 = scmp.eq.s32.totalorder %s87, 1
    %p645 = por %p643, %p644
    %p647 = scmp.ne.s32.totalorder %s632, %s646
    %p648 = scmp.eq.s32.totalorder %s87, 0
    %p649 = por %p647, %p648
    %s651 = sadd.s32 %s650, 1
    %p654 = scmp.eq.s32.totalorder %s81, 1
    %p655 = scmp.ne.s32.totalorder %s650, %s652
    %p656 = scmp.eq.s32.totalorder %s81, 0
    %p657 = por %p655, %p656
    %p658 = scmp.ne.s32.totalorder %s650, %s652
    %p659 = scmp.eq.s32.totalorder %s86, 1
    %p660 = por %p658, %p659
    %p661 = scmp.ne.s32.totalorder %s652, %s653
    %p662 = scmp.eq.s32.totalorder %s86, 0
    %p663 = por %p661, %p662
    %p664 = scmp.ne.s32.totalorder %s652, %s653
    %p665 = scmp.eq.s32.totalorder %s87, 1
    %p666 = por %p664, %p665
    %p668 = scmp.ne.s32.totalorder %s653, %s667
    %p669 = scmp.eq.s32.totalorder %s87, 0
    %p670 = por %p668, %p669
    %s672 = sadd.s32 %s671, 1
    %p675 = scmp.eq.s32.totalorder %s81, 1
    %p676 = scmp.ne.s32.totalorder %s671, %s673
    %p677 = scmp.eq.s32.totalorder %s81, 0
    %p678 = por %p676, %p677
    %p679 = scmp.ne.s32.totalorder %s671, %s673
    %p680 = scmp.eq.s32.totalorder %s86, 1
    %p681 = por %p679, %p680
    %p682 = scmp.ne.s32.totalorder %s673, %s674
    %p683 = scmp.eq.s32.totalorder %s86, 0
    %p684 = por %p682, %p683
    %p685 = scmp.ne.s32.totalorder %s673, %s674
    %p686 = scmp.eq.s32.totalorder %s87, 1
    %p687 = por %p685, %p686
    %p689 = scmp.ne.s32.totalorder %s674, %s688
    %p690 = scmp.eq.s32.totalorder %s87, 0
    %p691 = por %p689, %p690
    %s693 = sadd.s32 %s692, 1
    %p696 = scmp.eq.s32.totalorder %s81, 1
    %p697 = scmp.ne.s32.totalorder %s692, %s694
    %p698 = scmp.eq.s32.totalorder %s81, 0
    %p699 = por %p697, %p698
    %p700 = scmp.ne.s32.totalorder %s692, %s694
    %p701 = scmp.eq.s32.totalorder %s86, 1
    %p702 = por %p700, %p701
    %p703 = scmp.ne.s32.totalorder %s694, %s695
    %p704 = scmp.eq.s32.totalorder %s86, 0
    %p705 = por %p703, %p704
    %p706 = scmp.ne.s32.totalorder %s694, %s695
    %p707 = scmp.eq.s32.totalorder %s87, 1
    %p708 = por %p706, %p707
    %p710 = scmp.ne.s32.totalorder %s695, %s709
    %p711 = scmp.eq.s32.totalorder %s87, 0
    %p712 = por %p710, %p711
    %s714 = sadd.s32 %s713, 1
    %p717 = scmp.eq.s32.totalorder %s81, 1
    %p718 = scmp.ne.s32.totalorder %s713, %s715
    %p719 = scmp.eq.s32.totalorder %s81, 0
    %p720 = por %p718, %p719
    %p721 = scmp.ne.s32.totalorder %s713, %s715
    %p722 = scmp.eq.s32.totalorder %s86, 1
    %p723 = por %p721, %p722
    %p724 = scmp.ne.s32.totalorder %s715, %s716
    %p725 = scmp.eq.s32.totalorder %s86, 0
    %p726 = por %p724, %p725
    %p727 = scmp.ne.s32.totalorder %s715, %s716
    %p728 = scmp.eq.s32.totalorder %s87, 1
    %p729 = por %p727, %p728
    %p731 = scmp.ne.s32.totalorder %s716, %s730
    %p732 = scmp.eq.s32.totalorder %s87, 0
    %p733 = por %p731, %p732
    %s735 = sadd.s32 %s734, 1
    %p738 = scmp.eq.s32.totalorder %s81, 1
    %p739 = scmp.ne.s32.totalorder %s734, %s736
    %p740 = scmp.eq.s32.totalorder %s81, 0
    %p741 = por %p739, %p740
    %p742 = scmp.ne.s32.totalorder %s734, %s736
    %p743 = scmp.eq.s32.totalorder %s86, 1
    %p744 = por %p742, %p743
    %p745 = scmp.ne.s32.totalorder %s736, %s737
    %p746 = scmp.eq.s32.totalorder %s86, 0
    %p747 = por %p745, %p746
    %p748 = scmp.ne.s32.totalorder %s736, %s737
    %p749 = scmp.eq.s32.totalorder %s87, 1
    %p750 = por %p748, %p749
    %p752 = scmp.ne.s32.totalorder %s737, %s751
    %p753 = scmp.eq.s32.totalorder %s87, 0
    %p754 = por %p752, %p753
    %s756 = sadd.s32 %s755, 1
    %p759 = scmp.eq.s32.totalorder %s81, 1
    %p760 = scmp.ne.s32.totalorder %s755, %s757
    %p761 = scmp.eq.s32.totalorder %s81, 0
    %p762 = por %p760, %p761
    %p763 = scmp.ne.s32.totalorder %s755, %s757
    %p764 = scmp.eq.s32.totalorder %s86, 1
    %p765 = por %p763, %p764
    %p766 = scmp.ne.s32.totalorder %s757, %s758
    %p767 = scmp.eq.s32.totalorder %s86, 0
    %p768 = por %p766, %p767
    %p769 = scmp.ne.s32.totalorder %s757, %s758
    %p770 = scmp.eq.s32.totalorder %s87, 1
    %p771 = por %p769, %p770
    %p773 = scmp.ne.s32.totalorder %s758, %s772
    %p774 = scmp.eq.s32.totalorder %s87, 0
    %p775 = por %p773, %p774
    %s776 = ssub.s32 %s81, %s88
    %p777 = scmp.eq.s32.totalorder %s776, 0
    %s779 = sadd.s32 %s778, 1
    %s780 = scalar_select %p777, %s778, %s779
    %p783 = pneg %p777
    %p784 = scmp.eq.s32.totalorder %s81, 1
    %p785 = por %p783, %p784
    %p786 = scmp.ne.s32.totalorder %s778, %s781
    %p787 = scmp.eq.s32.totalorder %s81, 0
    %p788 = por %p786, %p787
    %p789 = scmp.ne.s32.totalorder %s778, %s781
    %p790 = scmp.eq.s32.totalorder %s86, 1
    %p791 = por %p789, %p790
    %p792 = scmp.ne.s32.totalorder %s781, %s782
    %p793 = scmp.eq.s32.totalorder %s86, 0
    %p794 = por %p792, %p793
    %p795 = scmp.ne.s32.totalorder %s781, %s782
    %p796 = scmp.eq.s32.totalorder %s87, 1
    %p797 = por %p795, %p796
    %p799 = scmp.ne.s32.totalorder %s782, %s798
    %p800 = scmp.eq.s32.totalorder %s87, 0
    %p801 = por %p799, %p800
    %p802 = scmp.le.s32.totalorder 1, %s81
    %p803 = scmp.lt.s32.totalorder %s81, 3
    %p804 = pnand %p802, %p803
    %p805 = pneg %p804
    // Predicated region
    $region9: #{big_model_forward.1} parent=5 // pred_check
      _
    $region10: #{big_model_forward.1} parent=5 // pred_check_branch
      %807 = sbr.rel (%p804) target = $region12
    $region11: #{big_model_forward.1} parent=5 // pred_region
      %s808 = ssub.s32 %s81, 1
      // Predicated region
      $region13: #{big_model_forward.1} parent=11 // pred_check
        %p809 = pneg %p180
      $region14: #{big_model_forward.1} parent=11 // pred_check_branch
        %811 = sbr.rel (%p809) target = $region16
      $region15: #{big_model_forward.1} parent=11 // pred_region
        _
      $region16: #{big_model_forward.1} parent=11 // pred_fallthru
        _
      // Predicated region
      $region17: #{big_model_forward.1} parent=11 // pred_check
        %p812 = pneg %p201
      $region18: #{big_model_forward.1} parent=11 // pred_check_branch
        %814 = sbr.rel (%p812) target = $region20
      $region19: #{big_model_forward.1} parent=11 // pred_region
        _
      $region20: #{big_model_forward.1} parent=11 // pred_fallthru
        _
      // Predicated region
      $region21: #{big_model_forward.1} parent=11 // pred_check
        %p815 = pneg %p222
      $region22: #{big_model_forward.1} parent=11 // pred_check_branch
        %817 = sbr.rel (%p815) target = $region24
      $region23: #{big_model_forward.1} parent=11 // pred_region
        _
      $region24: #{big_model_forward.1} parent=11 // pred_fallthru
        _
      // Predicated region
      $region25: #{big_model_forward.1} parent=11 // pred_check
        %p818 = pneg %p243
      $region26: #{big_model_forward.1} parent=11 // pred_check_branch
        %820 = sbr.rel (%p818) target = $region28
      $region27: #{big_model_forward.1} parent=11 // pred_region
        _
      $region28: #{big_model_forward.1} parent=11 // pred_fallthru
        _
      // Predicated region
      $region29: #{big_model_forward.1} parent=11 // pred_check
        %p821 = pneg %p264
      $region30: #{big_model_forward.1} parent=11 // pred_check_branch
        %823 = sbr.rel (%p821) target = $region32
      $region31: #{big_model_forward.1} parent=11 // pred_region
        _
      $region32: #{big_model_forward.1} parent=11 // pred_fallthru
        _
      // Predicated region
      $region33: #{big_model_forward.1} parent=11 // pred_check
        %p824 = pneg %p285
      $region34: #{big_model_forward.1} parent=11 // pred_check_branch
        %826 = sbr.rel (%p824) target = $region36
      $region35: #{big_model_forward.1} parent=11 // pred_region
        _
      $region36: #{big_model_forward.1} parent=11 // pred_fallthru
        _
      // Predicated region
      $region37: #{big_model_forward.1} parent=11 // pred_check
        %p827 = pneg %p306
      $region38: #{big_model_forward.1} parent=11 // pred_check_branch
        %829 = sbr.rel (%p827) target = $region40
      $region39: #{big_model_forward.1} parent=11 // pred_region
        _
      $region40: #{big_model_forward.1} parent=11 // pred_fallthru
        _
      // Predicated region
      $region41: #{big_model_forward.1} parent=11 // pred_check
        %p830 = pneg %p327
      $region42: #{big_model_forward.1} parent=11 // pred_check_branch
        %832 = sbr.rel (%p830) target = $region44
      $region43: #{big_model_forward.1} parent=11 // pred_region
        _
      $region44: #{big_model_forward.1} parent=11 // pred_fallthru
        _
      // Predicated region
      $region45: #{big_model_forward.1} parent=11 // pred_check
        %p833 = pneg %p348
      $region46: #{big_model_forward.1} parent=11 // pred_check_branch
        %835 = sbr.rel (%p833) target = $region48
      $region47: #{big_model_forward.1} parent=11 // pred_region
        _
      $region48: #{big_model_forward.1} parent=11 // pred_fallthru
        _
      // Predicated region
      $region49: #{big_model_forward.1} parent=11 // pred_check
        %p836 = pneg %p369
      $region50: #{big_model_forward.1} parent=11 // pred_check_branch
        %838 = sbr.rel (%p836) target = $region52
      $region51: #{big_model_forward.1} parent=11 // pred_region
        _
      $region52: #{big_model_forward.1} parent=11 // pred_fallthru
        _
      // Predicated region
      $region53: #{big_model_forward.1} parent=11 // pred_check
        %p839 = pneg %p390
      $region54: #{big_model_forward.1} parent=11 // pred_check_branch
        %841 = sbr.rel (%p839) target = $region56
      $region55: #{big_model_forward.1} parent=11 // pred_region
        _
      $region56: #{big_model_forward.1} parent=11 // pred_fallthru
        _
      // Predicated region
      $region57: #{big_model_forward.1} parent=11 // pred_check
        %p842 = pneg %p411
      $region58: #{big_model_forward.1} parent=11 // pred_check_branch
        %844 = sbr.rel (%p842) target = $region60
      $region59: #{big_model_forward.1} parent=11 // pred_region
        _
      $region60: #{big_model_forward.1} parent=11 // pred_fallthru
        _
      // Predicated region
      $region61: #{big_model_forward.1} parent=11 // pred_check
        %p845 = pneg %p432
      $region62: #{big_model_forward.1} parent=11 // pred_check_branch
        %847 = sbr.rel (%p845) target = $region64
      $region63: #{big_model_forward.1} parent=11 // pred_region
        _
      $region64: #{big_model_forward.1} parent=11 // pred_fallthru
        _
      // Predicated region
      $region65: #{big_model_forward.1} parent=11 // pred_check
        %p848 = pneg %p453
      $region66: #{big_model_forward.1} parent=11 // pred_check_branch
        %850 = sbr.rel (%p848) target = $region68
      $region67: #{big_model_forward.1} parent=11 // pred_region
        _
      $region68: #{big_model_forward.1} parent=11 // pred_fallthru
        _
      // Predicated region
      $region69: #{big_model_forward.1} parent=11 // pred_check
        %p851 = pneg %p474
      $region70: #{big_model_forward.1} parent=11 // pred_check_branch
        %853 = sbr.rel (%p851) target = $region72
      $region71: #{big_model_forward.1} parent=11 // pred_region
        _
      $region72: #{big_model_forward.1} parent=11 // pred_fallthru
        _
      // Predicated region
      $region73: #{big_model_forward.1} parent=11 // pred_check
        %p854 = pneg %p495
      $region74: #{big_model_forward.1} parent=11 // pred_check_branch
        %856 = sbr.rel (%p854) target = $region76
      $region75: #{big_model_forward.1} parent=11 // pred_region
        _
      $region76: #{big_model_forward.1} parent=11 // pred_fallthru
        _
      // Predicated region
      $region77: #{big_model_forward.1} parent=11 // pred_check
        %p857 = pneg %p516
      $region78: #{big_model_forward.1} parent=11 // pred_check_branch
        %859 = sbr.rel (%p857) target = $region80
      $region79: #{big_model_forward.1} parent=11 // pred_region
        _
      $region80: #{big_model_forward.1} parent=11 // pred_fallthru
        _
      // Predicated region
      $region81: #{big_model_forward.1} parent=11 // pred_check
        %p860 = pneg %p537
      $region82: #{big_model_forward.1} parent=11 // pred_check_branch
        %862 = sbr.rel (%p860) target = $region84
      $region83: #{big_model_forward.1} parent=11 // pred_region
        _
      $region84: #{big_model_forward.1} parent=11 // pred_fallthru
        _
      // Predicated region
      $region85: #{big_model_forward.1} parent=11 // pred_check
        %p863 = pneg %p558
      $region86: #{big_model_forward.1} parent=11 // pred_check_branch
        %865 = sbr.rel (%p863) target = $region88
      $region87: #{big_model_forward.1} parent=11 // pred_region
        _
      $region88: #{big_model_forward.1} parent=11 // pred_fallthru
        _
      // Predicated region
      $region89: #{big_model_forward.1} parent=11 // pred_check
        %p866 = pneg %p579
      $region90: #{big_model_forward.1} parent=11 // pred_check_branch
        %868 = sbr.rel (%p866) target = $region92
      $region91: #{big_model_forward.1} parent=11 // pred_region
        _
      $region92: #{big_model_forward.1} parent=11 // pred_fallthru
        _
      // Predicated region
      $region93: #{big_model_forward.1} parent=11 // pred_check
        %p869 = pneg %p600
      $region94: #{big_model_forward.1} parent=11 // pred_check_branch
        %871 = sbr.rel (%p869) target = $region96
      $region95: #{big_model_forward.1} parent=11 // pred_region
        _
      $region96: #{big_model_forward.1} parent=11 // pred_fallthru
        _
      // Predicated region
      $region97: #{big_model_forward.1} parent=11 // pred_check
        %p872 = pneg %p621
      $region98: #{big_model_forward.1} parent=11 // pred_check_branch
        %874 = sbr.rel (%p872) target = $region100
      $region99: #{big_model_forward.1} parent=11 // pred_region
        _
      $region100: #{big_model_forward.1} parent=11 // pred_fallthru
        _
      // Predicated region
      $region101: #{big_model_forward.1} parent=11 // pred_check
        %p875 = pneg %p642
      $region102: #{big_model_forward.1} parent=11 // pred_check_branch
        %877 = sbr.rel (%p875) target = $region104
      $region103: #{big_model_forward.1} parent=11 // pred_region
        _
      $region104: #{big_model_forward.1} parent=11 // pred_fallthru
        _
      // Predicated region
      $region105: #{big_model_forward.1} parent=11 // pred_check
        %p878 = pneg %p663
      $region106: #{big_model_forward.1} parent=11 // pred_check_branch
        %880 = sbr.rel (%p878) target = $region108
      $region107: #{big_model_forward.1} parent=11 // pred_region
        _
      $region108: #{big_model_forward.1} parent=11 // pred_fallthru
        _
      // Predicated region
      $region109: #{big_model_forward.1} parent=11 // pred_check
        %p881 = pneg %p684
      $region110: #{big_model_forward.1} parent=11 // pred_check_branch
        %883 = sbr.rel (%p881) target = $region112
      $region111: #{big_model_forward.1} parent=11 // pred_region
        _
      $region112: #{big_model_forward.1} parent=11 // pred_fallthru
        _
      // Predicated region
      $region113: #{big_model_forward.1} parent=11 // pred_check
        %p884 = pneg %p705
      $region114: #{big_model_forward.1} parent=11 // pred_check_branch
        %886 = sbr.rel (%p884) target = $region116
      $region115: #{big_model_forward.1} parent=11 // pred_region
        _
      $region116: #{big_model_forward.1} parent=11 // pred_fallthru
        _
      // Predicated region
      $region117: #{big_model_forward.1} parent=11 // pred_check
        %p887 = pneg %p726
      $region118: #{big_model_forward.1} parent=11 // pred_check_branch
        %889 = sbr.rel (%p887) target = $region120
      $region119: #{big_model_forward.1} parent=11 // pred_region
        _
      $region120: #{big_model_forward.1} parent=11 // pred_fallthru
        _
      // Predicated region
      $region121: #{big_model_forward.1} parent=11 // pred_check
        %p890 = pneg %p747
      $region122: #{big_model_forward.1} parent=11 // pred_check_branch
        %892 = sbr.rel (%p890) target = $region124
      $region123: #{big_model_forward.1} parent=11 // pred_region
        _
      $region124: #{big_model_forward.1} parent=11 // pred_fallthru
        _
      // Predicated region
      $region125: #{big_model_forward.1} parent=11 // pred_check
        %p893 = pneg %p768
      $region126: #{big_model_forward.1} parent=11 // pred_check_branch
        %895 = sbr.rel (%p893) target = $region128
      $region127: #{big_model_forward.1} parent=11 // pred_region
        _
      $region128: #{big_model_forward.1} parent=11 // pred_fallthru
        _
    $region12: #{big_model_forward.1} parent=5 // pred_fallthru
      _
    %p896 = scmp.lt.s32.totalorder %s81, 2
    // Predicated region
    $region129: #{big_model_forward.1} parent=5 // pred_check
      %p897 = pneg %p896
    $region130: #{big_model_forward.1} parent=5 // pred_check_branch
      %899 = sbr.rel (%p897) target = $region132
    $region131: #{big_model_forward.1} parent=5 // pred_region
      // Predicated region
      $region133: #{big_model_forward.1} parent=131 // pred_check
        %p900 = pneg %p101
      $region134: #{big_model_forward.1} parent=131 // pred_check_branch
        %902 = sbr.rel (%p900) target = $region136
      $region135: #{big_model_forward.1} parent=131 // pred_region
        %p903 = scmp.lt.s32.totalorder %s81, 1
        %s904 = scalar_select %p903, %s81, 1
        %s905 = smul.addr %s904, 8
        %s906 = scalar_lea.vmem %s3, %s905
      $region136: #{big_model_forward.1} parent=131 // pred_fallthru
        _
      // Predicated region
      $region137: #{big_model_forward.1} parent=131 // pred_check
        %p907 = pneg %p127
      $region138: #{big_model_forward.1} parent=131 // pred_check_branch
        %909 = sbr.rel (%p907) target = $region140
      $region139: #{big_model_forward.1} parent=131 // pred_region
        %p910 = scmp.lt.s32.totalorder %s81, 1
        %s911 = scalar_select %p910, %s81, 1
        %s912 = smul.addr %s911, 8
        %s913 = scalar_lea.vmem %s5, %s912
      $region140: #{big_model_forward.1} parent=131 // pred_fallthru
        _
      // Predicated region
      $region141: #{big_model_forward.1} parent=131 // pred_check
        %p914 = pneg %p153
      $region142: #{big_model_forward.1} parent=131 // pred_check_branch
        %916 = sbr.rel (%p914) target = $region144
      $region143: #{big_model_forward.1} parent=131 // pred_region
        %p917 = scmp.lt.s32.totalorder %s81, 1
        %s918 = scalar_select %p917, %s81, 1
        %s919 = smul.addr %s918, 8
        %s920 = scalar_lea.vmem %s7, %s919
      $region144: #{big_model_forward.1} parent=131 // pred_fallthru
        _
    $region132: #{big_model_forward.1} parent=5 // pred_fallthru
      _
    %p921 = scmp.le.s32.totalorder 1, %s81
    %p922 = scmp.lt.s32.totalorder %s81, 3
    %p923 = pnand %p921, %p922
    %p924 = pneg %p923
    // Predicated region
    $region145: #{big_model_forward.1} parent=5 // pred_check
      _
    $region146: #{big_model_forward.1} parent=5 // pred_check_branch
      %926 = sbr.rel (%p923) target = $region148
    $region147: #{big_model_forward.1} parent=5 // pred_region
      %s927 = ssub.s32 %s81, 1
      %p928 = scmp.lt.s32.totalorder %s86, 1
      %s929 = scalar_select %p928, %s86, 1
      %s930 = smul.addr %s929, 8
      %s931 = scalar_lea.vmem %s3, %s930
      %p932 = pneg %p107
      %p933 = pneg %p104
      %p934 = scmp.lt.s32.totalorder %s86, 1
      %s935 = scalar_select %p934, %s86, 1
      %s936 = smul.addr %s935, 8
      %s937 = scalar_lea.vmem %s5, %s936
      %p938 = pneg %p133
      %p939 = pneg %p130
      %p940 = scmp.lt.s32.totalorder %s86, 1
      %s941 = scalar_select %p940, %s86, 1
      %s942 = smul.addr %s941, 8
      %s943 = scalar_lea.vmem %s7, %s942
      %p944 = pneg %p159
      %p945 = pneg %p156
      %p946 = pneg %p180
      %p947 = pneg %p177
      %p948 = pneg %p201
      %p949 = pneg %p198
      %p950 = pneg %p222
      %p951 = pneg %p219
      %p952 = pneg %p243
      %p953 = pneg %p240
      %p954 = pneg %p264
      %p955 = pneg %p261
      %p956 = pneg %p285
      %p957 = pneg %p282
      %p958 = pneg %p306
      %p959 = pneg %p303
      %p960 = pneg %p327
      %p961 = pneg %p324
      %p962 = pneg %p348
      %p963 = pneg %p345
      %p964 = pneg %p369
      %p965 = pneg %p366
      %p966 = pneg %p390
      %p967 = pneg %p387
      %p968 = pneg %p411
      %p969 = pneg %p408
      %p970 = pneg %p432
      %p971 = pneg %p429
      %p972 = pneg %p453
      %p973 = pneg %p450
      %p974 = pneg %p474
      %p975 = pneg %p471
      %p976 = pneg %p495
      %p977 = pneg %p492
      %p978 = pneg %p516
      %p979 = pneg %p513
      %p980 = pneg %p537
      %p981 = pneg %p534
      %p982 = pneg %p558
      %p983 = pneg %p555
      %p984 = pneg %p579
      %p985 = pneg %p576
      %p986 = pneg %p600
      %p987 = pneg %p597
      %p988 = pneg %p621
      %p989 = pneg %p618
      %p990 = pneg %p642
      %p991 = pneg %p639
      %p992 = pneg %p663
      %p993 = pneg %p660
      %p994 = pneg %p684
      %p995 = pneg %p681
      %p996 = pneg %p705
      %p997 = pneg %p702
      %p998 = pneg %p726
      %p999 = pneg %p723
      %p1000 = pneg %p747
      %p1001 = pneg %p744
      %p1002 = pneg %p768
      %p1003 = pneg %p765
      %p1004 = pneg %p794
      %p1005 = pneg %p791
      %p1006 = scmp.lt.s32.totalorder %s86, 1
      %s1007 = scalar_select %p1006, %s86, 1
      %s1008 = smul.addr %s1007, 8
      %s1009 = scalar_lea.vmem %s67, %s1008
      %p1010 = scmp.lt.s32.totalorder %s86, 1
      %s1011 = scalar_select %p1010, %s86, 1
      %s1012 = smul.addr %s1011, 8
      %s1013 = scalar_lea.vmem %s3, %s1012
      %p1014 = scmp.lt.s32.totalorder %s86, 1
      %s1015 = scalar_select %p1014, %s86, 1
      %s1016 = smul.addr %s1015, 8
      %s1017 = scalar_lea.vmem %s5, %s1016
      %p1018 = scmp.lt.s32.totalorder %s86, 1
      %s1019 = scalar_select %p1018, %s86, 1
      %s1020 = smul.addr %s1019, 8
      %s1021 = scalar_lea.vmem %s7, %s1020
      %p1022 = scmp.lt.s32.totalorder %s86, 1
      %s1023 = scalar_select %p1022, %s86, 1
      %s1024 = smul.addr %s1023, 8
      %s1025 = scalar_lea.vmem %s67, %s1024
      %v1027 = vld [vmem:[%s1013] sm:$0xff]
      %v1028 = vld [vmem:[%s9] sm:$0xff]
      %v1029 = vld [vmem:[%s9 + $0x8] sm:$0xff]
      %v1030 = vld [vmem:[%s9 + $0x10] sm:$0xff]
      %v1031 = vld [vmem:[%s9 + $0x18] sm:$0xff]
      %v1032 = vld [vmem:[%s11] sm:$0x1]
      %v1034 = vperm.slane %v1032, 0
      %vm1036 = vcmask 261120
      %v1038 = vsel %vm1036, %v1027, 0
      %1040 = vmatpush.msra.mxu0 0.0
      %1041 = vmatpush.msra.mxu0 0.0
      %1042 = vmatpush.msra.mxu0 0.0
      %1043 = vmatpush.msra.mxu0 0.0
      %1044 = vmatpush.msra.mxu0 0.0
      %1045 = vmatpush.msra.mxu0 0.0
      %1046 = vmatpush.msra.mxu0 0.0
      %1047 = vmatpush.msra.mxu0 0.0
      %1048 = vmatpush.msra.mxu0 0.0
      %1049 = vmatpush.msra.mxu0 0.0
      %1050 = vmatpush.msra.mxu0 0.0
      %1051 = vmatpush.msra.mxu0 0.0
      %1052 = vmatpush.msra.mxu0 %v1031
      %1053 = vmatpush.msra.mxu0 %v1030
      %1054 = vmatpush.msra.mxu0 %v1029
      %1055 = vmatpush.msra.mxu0 %v1028
      %1056 = vmatmul.f32.gmra.mxu0 %v1038
      %v1057 = vpop.f32.mrf.mxu0
      %v1058 = vadd.f32 %v1034, %v1057
      %1059 = vdwg.mxu0
      %v1060 = vld [vmem:[%s13] sm:$0x1]
      %v1061 = vld [vmem:[%s15] sm:$0x1]
      %v1062 = vsel %vm1036, %v1058, 0.0
      %1063 = vadd.xlane.f32.xlu0 %v1062
      %v1064 = vpop.xlane.xlu0 %1063
      %v1065 = vrcp.pop 32.0
      %v1066 = vmul.f32 32.0, %v1065
      %v1067 = vsub.f32 1.0, %v1066
      %v1068 = vmul.f32 %v1065, %v1067
      %v1069 = vadd.f32 %v1065, %v1068
      %vm1070 = vweird.f32 %v1065
      %v1071 = vsel %vm1070, %v1065, %v1069
      %v1072 = vmul.f32 %v1064, %v1071
      %v1073 = vsub.f32 %v1058, %v1072
      %v1074 = vmul.f32 %v1073, %v1073
      %v1075 = vsel %vm1036, %v1074, 0.0
      %1076 = vadd.xlane.f32.xlu0 %v1075
      %v1077 = vpop.xlane.xlu0 %1076
      %v1078 = vmul.f32 %v1077, %v1071
      %v1079 = vadd.f32 %v1078, 1e-05
      %v1080 = vrsqrt.pop %v1079
      %v1081 = vmul.f32 %v1080, %v1079
      %v1082 = vmul.f32 %v1081, %v1080
      %v1083 = vmul.f32 0.5, %v1082
      %v1084 = vsub.f32 1.5, %v1083
      %v1085 = vmul.f32 %v1080, %v1084
      %vm1086 = vweird.f32 %v1079
      %vm1087 = vweird.f32 %v1080
      %vm1088 = vmor %vm1086, %vm1087
      %v1089 = vsel %vm1088, %v1080, %v1085
      %v1090 = vmul.f32 %v1073, %v1089
      %v1092 = vperm.slane %v1060, 0
      %v1094 = vmul.f32 %v1090, %v1092
      %v1096 = vperm.slane %v1061, 0
      %v1098 = vadd.f32 %v1094, %v1096
      %vm1099 = vcmp.ge.f32.partialorder %v1098, 0.0
      %v1100 = vmul.f32 %v1098, 0.01
      %v1101 = vsel %vm1099, %v1098, %v1100
      %s1102 = scalar_lea.vmem %s9, 32
      %v1103 = vld [vmem:[%s1102] sm:$0xff]
      %v1104 = vld [vmem:[%s1102 + $0x8] sm:$0xff]
      %v1105 = vld [vmem:[%s1102 + $0x10] sm:$0xff]
      %v1106 = vld [vmem:[%s1102 + $0x18] sm:$0xff]
      %s1107 = scalar_lea.vmem %s11, 1
      %v1108 = vld [vmem:[%s1107] sm:$0x1]
      %v1110 = vperm.slane %v1108, 0
      %v1113 = vsel %vm1036, %v1101, 0
      %1115 = vmatpush.msra.mxu0 0.0
      %1116 = vmatpush.msra.mxu0 0.0
      %1117 = vmatpush.msra.mxu0 0.0
      %1118 = vmatpush.msra.mxu0 0.0
      %1119 = vmatpush.msra.mxu0 0.0
      %1120 = vmatpush.msra.mxu0 0.0
      %1121 = vmatpush.msra.mxu0 0.0
      %1122 = vmatpush.msra.mxu0 0.0
      %1123 = vmatpush.msra.mxu0 0.0
      %1124 = vmatpush.msra.mxu0 0.0
      %1125 = vmatpush.msra.mxu0 0.0
      %1126 = vmatpush.msra.mxu0 0.0
      %1127 = vmatpush.msra.mxu0 %v1106
      %1128 = vmatpush.msra.mxu0 %v1105
      %1129 = vmatpush.msra.mxu0 %v1104
      %1130 = vmatpush.msra.mxu0 %v1103
      %1131 = vmatmul.f32.gmra.mxu0 %v1113
      %v1132 = vpop.f32.mrf.mxu0
      %v1133 = vadd.f32 %v1110, %v1132
      %1134 = vdwg.mxu0
      %s1135 = scalar_lea.vmem %s13, 1
      %v1136 = vld [vmem:[%s1135] sm:$0x1]
      %s1137 = scalar_lea.vmem %s15, 1
      %v1138 = vld [vmem:[%s1137] sm:$0x1]
      %v1139 = vsel %vm1036, %v1133, 0.0
      %1140 = vadd.xlane.f32.xlu0 %v1139
      %v1141 = vpop.xlane.xlu0 %1140
      %v1142 = vmul.f32 %v1141, %v1071
      %v1143 = vsub.f32 %v1133, %v1142
      %v1144 = vmul.f32 %v1143, %v1143
      %v1145 = vsel %vm1036, %v1144, 0.0
      %1146 = vadd.xlane.f32.xlu0 %v1145
      %v1147 = vpop.xlane.xlu0 %1146
      %v1148 = vmul.f32 %v1147, %v1071
      %v1149 = vadd.f32 %v1148, 1e-05
      %v1150 = vrsqrt.pop %v1149
      %v1151 = vmul.f32 %v1150, %v1149
      %v1152 = vmul.f32 %v1151, %v1150
      %v1153 = vmul.f32 0.5, %v1152
      %v1154 = vsub.f32 1.5, %v1153
      %v1155 = vmul.f32 %v1150, %v1154
      %vm1156 = vweird.f32 %v1149
      %vm1157 = vweird.f32 %v1150
      %vm1158 = vmor %vm1156, %vm1157
      %v1159 = vsel %vm1158, %v1150, %v1155
      %v1160 = vmul.f32 %v1143, %v1159
      %v1162 = vperm.slane %v1136, 0
      %v1164 = vmul.f32 %v1160, %v1162
      %v1166 = vperm.slane %v1138, 0
      %v1168 = vadd.f32 %v1164, %v1166
      %vm1169 = vcmp.ge.f32.partialorder %v1168, 0.0
      %v1170 = vmul.f32 %v1168, 0.01
      %v1171 = vsel %vm1169, %v1168, %v1170
      %s1172 = scalar_lea.vmem %s9, 64
      %v1173 = vld [vmem:[%s1172] sm:$0xff]
      %v1174 = vld [vmem:[%s1172 + $0x8] sm:$0xff]
      %v1175 = vld [vmem:[%s1172 + $0x10] sm:$0xff]
      %v1176 = vld [vmem:[%s1172 + $0x18] sm:$0xff]
      %s1177 = scalar_lea.vmem %s11, 2
      %v1178 = vld [vmem:[%s1177] sm:$0x1]
      %v1180 = vperm.slane %v1178, 0
      %v1183 = vsel %vm1036, %v1171, 0
      %1185 = vmatpush.msra.mxu0 0.0
      %1186 = vmatpush.msra.mxu0 0.0
      %1187 = vmatpush.msra.mxu0 0.0
      %1188 = vmatpush.msra.mxu0 0.0
      %1189 = vmatpush.msra.mxu0 0.0
      %1190 = vmatpush.msra.mxu0 0.0
      %1191 = vmatpush.msra.mxu0 0.0
      %1192 = vmatpush.msra.mxu0 0.0
      %1193 = vmatpush.msra.mxu0 0.0
      %1194 = vmatpush.msra.mxu0 0.0
      %1195 = vmatpush.msra.mxu0 0.0
      %1196 = vmatpush.msra.mxu0 0.0
      %1197 = vmatpush.msra.mxu0 %v1176
      %1198 = vmatpush.msra.mxu0 %v1175
      %1199 = vmatpush.msra.mxu0 %v1174
      %1200 = vmatpush.msra.mxu0 %v1173
      %1201 = vmatmul.f32.gmra.mxu0 %v1183
      %v1202 = vpop.f32.mrf.mxu0
      %v1203 = vadd.f32 %v1180, %v1202
      %1204 = vdwg.mxu0
      %s1205 = scalar_lea.vmem %s13, 2
      %v1206 = vld [vmem:[%s1205] sm:$0x1]
      %s1207 = scalar_lea.vmem %s15, 2
      %v1208 = vld [vmem:[%s1207] sm:$0x1]
      %v1209 = vsel %vm1036, %v1203, 0.0
      %1210 = vadd.xlane.f32.xlu0 %v1209
      %v1211 = vpop.xlane.xlu0 %1210
      %v1212 = vmul.f32 %v1211, %v1071
      %v1213 = vsub.f32 %v1203, %v1212
      %v1214 = vmul.f32 %v1213, %v1213
      %v1215 = vsel %vm1036, %v1214, 0.0
      %1216 = vadd.xlane.f32.xlu0 %v1215
      %v1217 = vpop.xlane.xlu0 %1216
      %v1218 = vmul.f32 %v1217, %v1071
      %v1219 = vadd.f32 %v1218, 1e-05
      %v1220 = vrsqrt.pop %v1219
      %v1221 = vmul.f32 %v1220, %v1219
      %v1222 = vmul.f32 %v1221, %v1220
      %v1223 = vmul.f32 0.5, %v1222
      %v1224 = vsub.f32 1.5, %v1223
      %v1225 = vmul.f32 %v1220, %v1224
      %vm1226 = vweird.f32 %v1219
      %vm1227 = vweird.f32 %v1220
      %vm1228 = vmor %vm1226, %vm1227
      %v1229 = vsel %vm1228, %v1220, %v1225
      %v1230 = vmul.f32 %v1213, %v1229
      %v1232 = vperm.slane %v1206, 0
      %v1234 = vmul.f32 %v1230, %v1232
      %v1236 = vperm.slane %v1208, 0
      %v1238 = vadd.f32 %v1234, %v1236
      %vm1239 = vcmp.ge.f32.partialorder %v1238, 0.0
      %v1240 = vmul.f32 %v1238, 0.01
      %v1241 = vsel %vm1239, %v1238, %v1240
      %s1242 = scalar_lea.vmem %s9, 96
      %v1243 = vld [vmem:[%s1242] sm:$0xff]
      %v1244 = vld [vmem:[%s1242 + $0x8] sm:$0xff]
      %v1245 = vld [vmem:[%s1242 + $0x10] sm:$0xff]
      %v1246 = vld [vmem:[%s1242 + $0x18] sm:$0xff]
      %s1247 = scalar_lea.vmem %s11, 3
      %v1248 = vld [vmem:[%s1247] sm:$0x1]
      %v1250 = vperm.slane %v1248, 0
      %v1253 = vsel %vm1036, %v1241, 0
      %1255 = vmatpush.msra.mxu0 0.0
      %1256 = vmatpush.msra.mxu0 0.0
      %1257 = vmatpush.msra.mxu0 0.0
      %1258 = vmatpush.msra.mxu0 0.0
      %1259 = vmatpush.msra.mxu0 0.0
      %1260 = vmatpush.msra.mxu0 0.0
      %1261 = vmatpush.msra.mxu0 0.0
      %1262 = vmatpush.msra.mxu0 0.0
      %1263 = vmatpush.msra.mxu0 0.0
      %1264 = vmatpush.msra.mxu0 0.0
      %1265 = vmatpush.msra.mxu0 0.0
      %1266 = vmatpush.msra.mxu0 0.0
      %1267 = vmatpush.msra.mxu0 %v1246
      %1268 = vmatpush.msra.mxu0 %v1245
      %1269 = vmatpush.msra.mxu0 %v1244
      %1270 = vmatpush.msra.mxu0 %v1243
      %1271 = vmatmul.f32.gmra.mxu0 %v1253
      %v1272 = vpop.f32.mrf.mxu0
      %v1273 = vadd.f32 %v1250, %v1272
      %1274 = vdwg.mxu0
      %s1275 = scalar_lea.vmem %s13, 3
      %v1276 = vld [vmem:[%s1275] sm:$0x1]
      %s1277 = scalar_lea.vmem %s15, 3
      %v1278 = vld [vmem:[%s1277] sm:$0x1]
      %v1279 = vsel %vm1036, %v1273, 0.0
      %1280 = vadd.xlane.f32.xlu0 %v1279
      %v1281 = vpop.xlane.xlu0 %1280
      %v1282 = vmul.f32 %v1281, %v1071
      %v1283 = vsub.f32 %v1273, %v1282
      %v1284 = vmul.f32 %v1283, %v1283
      %v1285 = vsel %vm1036, %v1284, 0.0
      %1286 = vadd.xlane.f32.xlu0 %v1285
      %v1287 = vpop.xlane.xlu0 %1286
      %v1288 = vmul.f32 %v1287, %v1071
      %v1289 = vadd.f32 %v1288, 1e-05
      %v1290 = vrsqrt.pop %v1289
      %v1291 = vmul.f32 %v1290, %v1289
      %v1292 = vmul.f32 %v1291, %v1290
      %v1293 = vmul.f32 0.5, %v1292
      %v1294 = vsub.f32 1.5, %v1293
      %v1295 = vmul.f32 %v1290, %v1294
      %vm1296 = vweird.f32 %v1289
      %vm1297 = vweird.f32 %v1290
      %vm1298 = vmor %vm1296, %vm1297
      %v1299 = vsel %vm1298, %v1290, %v1295
      %v1300 = vmul.f32 %v1283, %v1299
      %v1302 = vperm.slane %v1276, 0
      %v1304 = vmul.f32 %v1300, %v1302
      %v1306 = vperm.slane %v1278, 0
      %v1308 = vadd.f32 %v1304, %v1306
      %vm1309 = vcmp.ge.f32.partialorder %v1308, 0.0
      %v1310 = vmul.f32 %v1308, 0.01
      %v1311 = vsel %vm1309, %v1308, %v1310
      %s1312 = scalar_lea.vmem %s9, 128
      %v1313 = vld [vmem:[%s1312] sm:$0xff]
      %v1314 = vld [vmem:[%s1312 + $0x8] sm:$0xff]
      %v1315 = vld [vmem:[%s1312 + $0x10] sm:$0xff]
      %v1316 = vld [vmem:[%s1312 + $0x18] sm:$0xff]
      %s1317 = scalar_lea.vmem %s11, 4
      %v1318 = vld [vmem:[%s1317] sm:$0x1]
      %v1320 = vperm.slane %v1318, 0
      %v1323 = vsel %vm1036, %v1311, 0
      %1325 = vmatpush.msra.mxu0 0.0
      %1326 = vmatpush.msra.mxu0 0.0
      %1327 = vmatpush.msra.mxu0 0.0
      %1328 = vmatpush.msra.mxu0 0.0
      %1329 = vmatpush.msra.mxu0 0.0
      %1330 = vmatpush.msra.mxu0 0.0
      %1331 = vmatpush.msra.mxu0 0.0
      %1332 = vmatpush.msra.mxu0 0.0
      %1333 = vmatpush.msra.mxu0 0.0
      %1334 = vmatpush.msra.mxu0 0.0
      %1335 = vmatpush.msra.mxu0 0.0
      %1336 = vmatpush.msra.mxu0 0.0
      %1337 = vmatpush.msra.mxu0 %v1316
      %1338 = vmatpush.msra.mxu0 %v1315
      %1339 = vmatpush.msra.mxu0 %v1314
      %1340 = vmatpush.msra.mxu0 %v1313
      %1341 = vmatmul.f32.gmra.mxu0 %v1323
      %v1342 = vpop.f32.mrf.mxu0
      %v1343 = vadd.f32 %v1320, %v1342
      %1344 = vdwg.mxu0
      %s1345 = scalar_lea.vmem %s13, 4
      %v1346 = vld [vmem:[%s1345] sm:$0x1]
      %s1347 = scalar_lea.vmem %s15, 4
      %v1348 = vld [vmem:[%s1347] sm:$0x1]
      %v1349 = vsel %vm1036, %v1343, 0.0
      %1350 = vadd.xlane.f32.xlu0 %v1349
      %v1351 = vpop.xlane.xlu0 %1350
      %v1352 = vmul.f32 %v1351, %v1071
      %v1353 = vsub.f32 %v1343, %v1352
      %v1354 = vmul.f32 %v1353, %v1353
      %v1355 = vsel %vm1036, %v1354, 0.0
      %1356 = vadd.xlane.f32.xlu0 %v1355
      %v1357 = vpop.xlane.xlu0 %1356
      %v1358 = vmul.f32 %v1357, %v1071
      %v1359 = vadd.f32 %v1358, 1e-05
      %v1360 = vrsqrt.pop %v1359
      %v1361 = vmul.f32 %v1360, %v1359
      %v1362 = vmul.f32 %v1361, %v1360
      %v1363 = vmul.f32 0.5, %v1362
      %v1364 = vsub.f32 1.5, %v1363
      %v1365 = vmul.f32 %v1360, %v1364
      %vm1366 = vweird.f32 %v1359
      %vm1367 = vweird.f32 %v1360
      %vm1368 = vmor %vm1366, %vm1367
      %v1369 = vsel %vm1368, %v1360, %v1365
      %v1370 = vmul.f32 %v1353, %v1369
      %v1372 = vperm.slane %v1346, 0
      %v1374 = vmul.f32 %v1370, %v1372
      %v1376 = vperm.slane %v1348, 0
      %v1378 = vadd.f32 %v1374, %v1376
      %vm1379 = vcmp.ge.f32.partialorder %v1378, 0.0
      %v1380 = vmul.f32 %v1378, 0.01
      %v1381 = vsel %vm1379, %v1378, %v1380
      %s1382 = scalar_lea.vmem %s9, 160
      %v1383 = vld [vmem:[%s1382] sm:$0xff]
      %v1384 = vld [vmem:[%s1382 + $0x8] sm:$0xff]
      %v1385 = vld [vmem:[%s1382 + $0x10] sm:$0xff]
      %v1386 = vld [vmem:[%s1382 + $0x18] sm:$0xff]
      %s1387 = scalar_lea.vmem %s11, 5
      %v1388 = vld [vmem:[%s1387] sm:$0x1]
      %v1390 = vperm.slane %v1388, 0
      %v1393 = vsel %vm1036, %v1381, 0
      %1395 = vmatpush.msra.mxu0 0.0
      %1396 = vmatpush.msra.mxu0 0.0
      %1397 = vmatpush.msra.mxu0 0.0
      %1398 = vmatpush.msra.mxu0 0.0
      %1399 = vmatpush.msra.mxu0 0.0
      %1400 = vmatpush.msra.mxu0 0.0
      %1401 = vmatpush.msra.mxu0 0.0
      %1402 = vmatpush.msra.mxu0 0.0
      %1403 = vmatpush.msra.mxu0 0.0
      %1404 = vmatpush.msra.mxu0 0.0
      %1405 = vmatpush.msra.mxu0 0.0
      %1406 = vmatpush.msra.mxu0 0.0
      %1407 = vmatpush.msra.mxu0 %v1386
      %1408 = vmatpush.msra.mxu0 %v1385
      %1409 = vmatpush.msra.mxu0 %v1384
      %1410 = vmatpush.msra.mxu0 %v1383
      %1411 = vmatmul.f32.gmra.mxu0 %v1393
      %v1412 = vpop.f32.mrf.mxu0
      %v1413 = vadd.f32 %v1390, %v1412
      %1414 = vdwg.mxu0
      %s1415 = scalar_lea.vmem %s13, 5
      %v1416 = vld [vmem:[%s1415] sm:$0x1]
      %s1417 = scalar_lea.vmem %s15, 5
      %v1418 = vld [vmem:[%s1417] sm:$0x1]
      %v1419 = vsel %vm1036, %v1413, 0.0
      %1420 = vadd.xlane.f32.xlu0 %v1419
      %v1421 = vpop.xlane.xlu0 %1420
      %v1422 = vmul.f32 %v1421, %v1071
      %v1423 = vsub.f32 %v1413, %v1422
      %v1424 = vmul.f32 %v1423, %v1423
      %v1425 = vsel %vm1036, %v1424, 0.0
      %1426 = vadd.xlane.f32.xlu0 %v1425
      %v1427 = vpop.xlane.xlu0 %1426
      %v1428 = vmul.f32 %v1427, %v1071
      %v1429 = vadd.f32 %v1428, 1e-05
      %v1430 = vrsqrt.pop %v1429
      %v1431 = vmul.f32 %v1430, %v1429
      %v1432 = vmul.f32 %v1431, %v1430
      %v1433 = vmul.f32 0.5, %v1432
      %v1434 = vsub.f32 1.5, %v1433
      %v1435 = vmul.f32 %v1430, %v1434
      %vm1436 = vweird.f32 %v1429
      %vm1437 = vweird.f32 %v1430
      %vm1438 = vmor %vm1436, %vm1437
      %v1439 = vsel %vm1438, %v1430, %v1435
      %v1440 = vmul.f32 %v1423, %v1439
      %v1442 = vperm.slane %v1416, 0
      %v1444 = vmul.f32 %v1440, %v1442
      %v1446 = vperm.slane %v1418, 0
      %v1448 = vadd.f32 %v1444, %v1446
      %vm1449 = vcmp.ge.f32.partialorder %v1448, 0.0
      %v1450 = vmul.f32 %v1448, 0.01
      %v1451 = vsel %vm1449, %v1448, %v1450
      %v1452 = vld [vmem:[%s61] sm:$0xff]
      %v1453 = vadd.f32 %v1451, %v1452
      %v1454 = vld [vmem:[%s17] sm:$0xff]
      %v1455 = vld [vmem:[%s17 + $0x8] sm:$0xff]
      %v1456 = vld [vmem:[%s17 + $0x10] sm:$0xff]
      %v1457 = vld [vmem:[%s17 + $0x18] sm:$0xff]
      %v1458 = vld [vmem:[%s19] sm:$0x1]
      %v1460 = vperm.slane %v1458, 0
      %v1463 = vsel %vm1036, %v1453, 0
      %1465 = vmatpush.msra.mxu0 0.0
      %1466 = vmatpush.msra.mxu0 0.0
      %1467 = vmatpush.msra.mxu0 0.0
      %1468 = vmatpush.msra.mxu0 0.0
      %1469 = vmatpush.msra.mxu0 0.0
      %1470 = vmatpush.msra.mxu0 0.0
      %1471 = vmatpush.msra.mxu0 0.0
      %1472 = vmatpush.msra.mxu0 0.0
      %1473 = vmatpush.msra.mxu0 0.0
      %1474 = vmatpush.msra.mxu0 0.0
      %1475 = vmatpush.msra.mxu0 0.0
      %1476 = vmatpush.msra.mxu0 0.0
      %1477 = vmatpush.msra.mxu0 %v1457
      %1478 = vmatpush.msra.mxu0 %v1456
      %1479 = vmatpush.msra.mxu0 %v1455
      %1480 = vmatpush.msra.mxu0 %v1454
      %1481 = vmatmul.f32.gmra.mxu0 %v1463
      %v1482 = vpop.f32.mrf.mxu0
      %v1483 = vadd.f32 %v1460, %v1482
      %1484 = vdwg.mxu0
      %v1485 = vld [vmem:[%s21] sm:$0xff]
      %v1486 = vld [vmem:[%s21 + $0x8] sm:$0xff]
      %v1487 = vld [vmem:[%s21 + $0x10] sm:$0xff]
      %v1488 = vld [vmem:[%s21 + $0x18] sm:$0xff]
      %v1489 = vld [vmem:[%s23] sm:$0x1]
      %v1491 = vperm.slane %v1489, 0
      %1493 = vmatpush.msra.mxu0 0.0
      %1494 = vmatpush.msra.mxu0 0.0
      %1495 = vmatpush.msra.mxu0 0.0
      %1496 = vmatpush.msra.mxu0 0.0
      %1497 = vmatpush.msra.mxu0 0.0
      %1498 = vmatpush.msra.mxu0 0.0
      %1499 = vmatpush.msra.mxu0 0.0
      %1500 = vmatpush.msra.mxu0 0.0
      %1501 = vmatpush.msra.mxu0 0.0
      %1502 = vmatpush.msra.mxu0 0.0
      %1503 = vmatpush.msra.mxu0 0.0
      %1504 = vmatpush.msra.mxu0 0.0
      %1505 = vmatpush.msra.mxu0 %v1488
      %1506 = vmatpush.msra.mxu0 %v1487
      %1507 = vmatpush.msra.mxu0 %v1486
      %1508 = vmatpush.msra.mxu0 %v1485
      %1509 = vmatmul.f32.gmra.mxu0 %v1463
      %v1510 = vpop.f32.mrf.mxu0
      %v1511 = vadd.f32 %v1491, %v1510
      %1512 = vdwg.mxu0
      %v1513 = vld [vmem:[%s25] sm:$0xff]
      %v1514 = vld [vmem:[%s25 + $0x8] sm:$0xff]
      %v1515 = vld [vmem:[%s25 + $0x10] sm:$0xff]
      %v1516 = vld [vmem:[%s25 + $0x18] sm:$0xff]
      %v1517 = vld [vmem:[%s27] sm:$0x1]
      %v1519 = vperm.slane %v1517, 0
      %1521 = vmatpush.msra.mxu0 0.0
      %1522 = vmatpush.msra.mxu0 0.0
      %1523 = vmatpush.msra.mxu0 0.0
      %1524 = vmatpush.msra.mxu0 0.0
      %1525 = vmatpush.msra.mxu0 0.0
      %1526 = vmatpush.msra.mxu0 0.0
      %1527 = vmatpush.msra.mxu0 0.0
      %1528 = vmatpush.msra.mxu0 0.0
      %1529 = vmatpush.msra.mxu0 0.0
      %1530 = vmatpush.msra.mxu0 0.0
      %1531 = vmatpush.msra.mxu0 0.0
      %1532 = vmatpush.msra.mxu0 0.0
      %1533 = vmatpush.msra.mxu0 %v1516
      %1534 = vmatpush.msra.mxu0 %v1515
      %1535 = vmatpush.msra.mxu0 %v1514
      %1536 = vmatpush.msra.mxu0 %v1513
      %1537 = vmatmul.f32.gmra.mxu0 %v1463
      %v1538 = vpop.f32.mrf.mxu0
      %v1539 = vadd.f32 %v1519, %v1538
      %1540 = vdwg.mxu0
      %vm1541 = vcmask 31744
      %v1543 = vsel %vm1541, %v1483, 0
      %v1546 = vsel %vm1541, %v1511, 0
      %1548 = vmatpush.xpose.msra.mxu0 0.0
      %1549 = vmatpush.xpose.msra.mxu0 0.0
      %1550 = vmatpush.xpose.msra.mxu0 0.0
      %1551 = vmatpush.xpose.msra.mxu0 0.0
      %1552 = vmatpush.xpose.msra.mxu0 0.0
      %1553 = vmatpush.xpose.msra.mxu0 0.0
      %1554 = vmatpush.xpose.msra.mxu0 0.0
      %1555 = vmatpush.xpose.msra.mxu0 0.0
      %1556 = vmatpush.xpose.msra.mxu0 0.0
      %1557 = vmatpush.xpose.msra.mxu0 0.0
      %1558 = vmatpush.xpose.msra.mxu0 0.0
      %1559 = vmatpush.xpose.msra.mxu0 0.0
      %1560 = vmatpush.xpose.msra.mxu0 0.0
      %1561 = vmatpush.xpose.msra.mxu0 0.0
      %1562 = vmatpush.xpose.msra.mxu0 0.0
      %1563 = vmatpush.xpose.msra.mxu0 %v1546
      %1564 = vmatmul.f32.gmra.mxu0 %v1543
      %v1565 = vpop.f32.mrf.mxu0
      %v1566 = vadd.f32 0.0, %v1565
      %1567 = vdwg.mxu0
      %v1568 = vmul.f32 %v1566, 0.5
      %vm1569 = vcmask 64512
      %v1570 = vsel %vm1569, %v1568, -inf
      %1571 = vmax.xlane.f32.xlu0 %v1570
      %v1572 = vpop.xlane.xlu0 %1571
      %v1573 = vsub.f32 %v1568, %v1572
      %v1574 = vmul.f32 %v1573, 1.442695
      %v1575 = vpow.pop %v1574
      %v1576 = vsel %vm1569, %v1575, 0.0
      %1577 = vadd.xlane.f32.xlu0 %v1576
      %v1578 = vpop.xlane.xlu0 %1577
      %v1579 = vrcp.pop %v1578
      %v1580 = vmul.f32 %v1575, %v1579
      %v1582 = vsel %vm1569, %v1580, 0
      %1584 = vmatpush.msra.mxu0 0.0
      %1585 = vmatpush.msra.mxu0 0.0
      %1586 = vmatpush.msra.mxu0 0.0
      %1587 = vmatpush.msra.mxu0 0.0
      %1588 = vmatpush.msra.mxu0 0.0
      %1589 = vmatpush.msra.mxu0 0.0
      %1590 = vmatpush.msra.mxu0 0.0
      %1591 = vmatpush.msra.mxu0 0.0
      %1592 = vmatpush.msra.mxu0 0.0
      %1593 = vmatpush.msra.mxu0 0.0
      %1594 = vmatpush.msra.mxu0 0.0
      %1595 = vmatpush.msra.mxu0 0.0
      %1596 = vmatpush.msra.mxu0 0.0
      %1597 = vmatpush.msra.mxu0 0.0
      %1598 = vmatpush.msra.mxu0 0.0
      %1599 = vmatpush.msra.mxu0 %v1539
      %1600 = vmatmul.f32.gmra.mxu0 %v1582
      %v1601 = vpop.f32.mrf.mxu0
      %v1602 = vadd.f32 0.0, %v1601
      %1603 = vdwg.mxu0
      %v1604 = vld [vmem:[%s29] sm:$0xf]
      %s1605 = scalar_lea.vmem %s17, 32
      %v1606 = vld [vmem:[%s1605] sm:$0xff]
      %v1607 = vld [vmem:[%s1605 + $0x8] sm:$0xff]
      %v1608 = vld [vmem:[%s1605 + $0x10] sm:$0xff]
      %v1609 = vld [vmem:[%s1605 + $0x18] sm:$0xff]
      %s1610 = scalar_lea.vmem %s19, 1
      %v1611 = vld [vmem:[%s1610] sm:$0x1]
      %v1613 = vperm.slane %v1611, 0
      %1615 = vmatpush.msra.mxu0 0.0
      %1616 = vmatpush.msra.mxu0 0.0
      %1617 = vmatpush.msra.mxu0 0.0
      %1618 = vmatpush.msra.mxu0 0.0
      %1619 = vmatpush.msra.mxu0 0.0
      %1620 = vmatpush.msra.mxu0 0.0
      %1621 = vmatpush.msra.mxu0 0.0
      %1622 = vmatpush.msra.mxu0 0.0
      %1623 = vmatpush.msra.mxu0 0.0
      %1624 = vmatpush.msra.mxu0 0.0
      %1625 = vmatpush.msra.mxu0 0.0
      %1626 = vmatpush.msra.mxu0 0.0
      %1627 = vmatpush.msra.mxu0 %v1609
      %1628 = vmatpush.msra.mxu0 %v1608
      %1629 = vmatpush.msra.mxu0 %v1607
      %1630 = vmatpush.msra.mxu0 %v1606
      %1631 = vmatmul.f32.gmra.mxu0 %v1463
      %v1632 = vpop.f32.mrf.mxu0
      %v1633 = vadd.f32 %v1613, %v1632
      %1634 = vdwg.mxu0
      %s1635 = scalar_lea.vmem %s21, 32
      %v1636 = vld [vmem:[%s1635] sm:$0xff]
      %v1637 = vld [vmem:[%s1635 + $0x8] sm:$0xff]
      %v1638 = vld [vmem:[%s1635 + $0x10] sm:$0xff]
      %v1639 = vld [vmem:[%s1635 + $0x18] sm:$0xff]
      %s1640 = scalar_lea.vmem %s23, 1
      %v1641 = vld [vmem:[%s1640] sm:$0x1]
      %v1643 = vperm.slane %v1641, 0
      %1645 = vmatpush.msra.mxu0 0.0
      %1646 = vmatpush.msra.mxu0 0.0
      %1647 = vmatpush.msra.mxu0 0.0
      %1648 = vmatpush.msra.mxu0 0.0
      %1649 = vmatpush.msra.mxu0 0.0
      %1650 = vmatpush.msra.mxu0 0.0
      %1651 = vmatpush.msra.mxu0 0.0
      %1652 = vmatpush.msra.mxu0 0.0
      %1653 = vmatpush.msra.mxu0 0.0
      %1654 = vmatpush.msra.mxu0 0.0
      %1655 = vmatpush.msra.mxu0 0.0
      %1656 = vmatpush.msra.mxu0 0.0
      %1657 = vmatpush.msra.mxu0 %v1639
      %1658 = vmatpush.msra.mxu0 %v1638
      %1659 = vmatpush.msra.mxu0 %v1637
      %1660 = vmatpush.msra.mxu0 %v1636
      %1661 = vmatmul.f32.gmra.mxu0 %v1463
      %v1662 = vpop.f32.mrf.mxu0
      %v1663 = vadd.f32 %v1643, %v1662
      %1664 = vdwg.mxu0
      %s1665 = scalar_lea.vmem %s25, 32
      %v1666 = vld [vmem:[%s1665] sm:$0xff]
      %v1667 = vld [vmem:[%s1665 + $0x8] sm:$0xff]
      %v1668 = vld [vmem:[%s1665 + $0x10] sm:$0xff]
      %v1669 = vld [vmem:[%s1665 + $0x18] sm:$0xff]
      %s1670 = scalar_lea.vmem %s27, 1
      %v1671 = vld [vmem:[%s1670] sm:$0x1]
      %v1673 = vperm.slane %v1671, 0
      %1675 = vmatpush.msra.mxu0 0.0
      %1676 = vmatpush.msra.mxu0 0.0
      %1677 = vmatpush.msra.mxu0 0.0
      %1678 = vmatpush.msra.mxu0 0.0
      %1679 = vmatpush.msra.mxu0 0.0
      %1680 = vmatpush.msra.mxu0 0.0
      %1681 = vmatpush.msra.mxu0 0.0
      %1682 = vmatpush.msra.mxu0 0.0
      %1683 = vmatpush.msra.mxu0 0.0
      %1684 = vmatpush.msra.mxu0 0.0
      %1685 = vmatpush.msra.mxu0 0.0
      %1686 = vmatpush.msra.mxu0 0.0
      %1687 = vmatpush.msra.mxu0 %v1669
      %1688 = vmatpush.msra.mxu0 %v1668
      %1689 = vmatpush.msra.mxu0 %v1667
      %1690 = vmatpush.msra.mxu0 %v1666
      %1691 = vmatmul.f32.gmra.mxu0 %v1463
      %v1692 = vpop.f32.mrf.mxu0
      %v1693 = vadd.f32 %v1673, %v1692
      %1694 = vdwg.mxu0
      %v1696 = vsel %vm1541, %v1633, 0
      %v1699 = vsel %vm1541, %v1663, 0
      %1701 = vmatpush.xpose.msra.mxu0 0.0
      %1702 = vmatpush.xpose.msra.mxu0 0.0
      %1703 = vmatpush.xpose.msra.mxu0 0.0
      %1704 = vmatpush.xpose.msra.mxu0 0.0
      %1705 = vmatpush.xpose.msra.mxu0 0.0
      %1706 = vmatpush.xpose.msra.mxu0 0.0
      %1707 = vmatpush.xpose.msra.mxu0 0.0
      %1708 = vmatpush.xpose.msra.mxu0 0.0
      %1709 = vmatpush.xpose.msra.mxu0 0.0
      %1710 = vmatpush.xpose.msra.mxu0 0.0
      %1711 = vmatpush.xpose.msra.mxu0 0.0
      %1712 = vmatpush.xpose.msra.mxu0 0.0
      %1713 = vmatpush.xpose.msra.mxu0 0.0
      %1714 = vmatpush.xpose.msra.mxu0 0.0
      %1715 = vmatpush.xpose.msra.mxu0 0.0
      %1716 = vmatpush.xpose.msra.mxu0 %v1699
      %1717 = vmatmul.f32.gmra.mxu0 %v1696
      %v1718 = vpop.f32.mrf.mxu0
      %v1719 = vadd.f32 0.0, %v1718
      %1720 = vdwg.mxu0
      %v1721 = vmul.f32 %v1719, 0.5
      %v1722 = vsel %vm1569, %v1721, -inf
      %1723 = vmax.xlane.f32.xlu0 %v1722
      %v1724 = vpop.xlane.xlu0 %1723
      %v1725 = vsub.f32 %v1721, %v1724
      %v1726 = vmul.f32 %v1725, 1.442695
      %v1727 = vpow.pop %v1726
      %v1728 = vsel %vm1569, %v1727, 0.0
      %1729 = vadd.xlane.f32.xlu0 %v1728
      %v1730 = vpop.xlane.xlu0 %1729
      %v1731 = vrcp.pop %v1730
      %v1732 = vmul.f32 %v1727, %v1731
      %v1734 = vsel %vm1569, %v1732, 0
      %1736 = vmatpush.msra.mxu0 0.0
      %1737 = vmatpush.msra.mxu0 0.0
      %1738 = vmatpush.msra.mxu0 0.0
      %1739 = vmatpush.msra.mxu0 0.0
      %1740 = vmatpush.msra.mxu0 0.0
      %1741 = vmatpush.msra.mxu0 0.0
      %1742 = vmatpush.msra.mxu0 0.0
      %1743 = vmatpush.msra.mxu0 0.0
      %1744 = vmatpush.msra.mxu0 0.0
      %1745 = vmatpush.msra.mxu0 0.0
      %1746 = vmatpush.msra.mxu0 0.0
      %1747 = vmatpush.msra.mxu0 0.0
      %1748 = vmatpush.msra.mxu0 0.0
      %1749 = vmatpush.msra.mxu0 0.0
      %1750 = vmatpush.msra.mxu0 0.0
      %1751 = vmatpush.msra.mxu0 %v1693
      %1752 = vmatmul.f32.gmra.mxu0 %v1734
      %v1753 = vpop.f32.mrf.mxu0
      %v1754 = vadd.f32 0.0, %v1753
      %1755 = vdwg.mxu0
      %s1756 = scalar_lea.vmem %s29, 4
      %v1757 = vld [vmem:[%s1756] sm:$0xf]
      %v1759 = vsel %vm1541, %v1754, 0
      %vm1761 = vcmask 1043456
      %v1763 = vsel %vm1761, %v1757, 0
      %1765 = vmatpush.msra.mxu0 0.0
      %1766 = vmatpush.msra.mxu0 0.0
      %1767 = vmatpush.msra.mxu0 0.0
      %1768 = vmatpush.msra.mxu0 0.0
      %1769 = vmatpush.msra.mxu0 0.0
      %1770 = vmatpush.msra.mxu0 0.0
      %1771 = vmatpush.msra.mxu0 0.0
      %1772 = vmatpush.msra.mxu0 0.0
      %1773 = vmatpush.msra.mxu0 0.0
      %1774 = vmatpush.msra.mxu0 0.0
      %1775 = vmatpush.msra.mxu0 0.0
      %1776 = vmatpush.msra.mxu0 0.0
      %1777 = vmatpush.msra.mxu0 0.0
      %1778 = vmatpush.msra.mxu0 0.0
      %1779 = vmatpush.msra.mxu0 0.0
      %1780 = vmatpush.msra.mxu0 %v1763
      %1781 = vmatmul.f32.gmra.mxu0 %v1759
      %v1782 = vpop.f32.mrf.mxu0
      %v1783 = vadd.f32 0.0, %v1782
      %1784 = vdwg.mxu0
      %v1786 = vsel %vm1541, %v1602, 0
      %v1789 = vsel %vm1761, %v1604, 0
      %1791 = vmatpush.msra.mxu0 0.0
      %1792 = vmatpush.msra.mxu0 0.0
      %1793 = vmatpush.msra.mxu0 0.0
      %1794 = vmatpush.msra.mxu0 0.0
      %1795 = vmatpush.msra.mxu0 0.0
      %1796 = vmatpush.msra.mxu0 0.0
      %1797 = vmatpush.msra.mxu0 0.0
      %1798 = vmatpush.msra.mxu0 0.0
      %1799 = vmatpush.msra.mxu0 0.0
      %1800 = vmatpush.msra.mxu0 0.0
      %1801 = vmatpush.msra.mxu0 0.0
      %1802 = vmatpush.msra.mxu0 0.0
      %1803 = vmatpush.msra.mxu0 0.0
      %1804 = vmatpush.msra.mxu0 0.0
      %1805 = vmatpush.msra.mxu0 0.0
      %1806 = vmatpush.msra.mxu0 %v1789
      %1807 = vmatmul.f32.gmra.mxu0 %v1786
      %v1808 = vpop.f32.mrf.mxu0
      %v1809 = vadd.f32 %v1783, %v1808
      %1810 = vdwg.mxu0
      %s1811 = scalar_lea.vmem %s17, 64
      %v1812 = vld [vmem:[%s1811] sm:$0xff]
      %v1813 = vld [vmem:[%s1811 + $0x8] sm:$0xff]
      %v1814 = vld [vmem:[%s1811 + $0x10] sm:$0xff]
      %v1815 = vld [vmem:[%s1811 + $0x18] sm:$0xff]
      %s1816 = scalar_lea.vmem %s19, 2
      %v1817 = vld [vmem:[%s1816] sm:$0x1]
      %v1819 = vperm.slane %v1817, 0
      %1821 = vmatpush.msra.mxu0 0.0
      %1822 = vmatpush.msra.mxu0 0.0
      %1823 = vmatpush.msra.mxu0 0.0
      %1824 = vmatpush.msra.mxu0 0.0
      %1825 = vmatpush.msra.mxu0 0.0
      %1826 = vmatpush.msra.mxu0 0.0
      %1827 = vmatpush.msra.mxu0 0.0
      %1828 = vmatpush.msra.mxu0 0.0
      %1829 = vmatpush.msra.mxu0 0.0
      %1830 = vmatpush.msra.mxu0 0.0
      %1831 = vmatpush.msra.mxu0 0.0
      %1832 = vmatpush.msra.mxu0 0.0
      %1833 = vmatpush.msra.mxu0 %v1815
      %1834 = vmatpush.msra.mxu0 %v1814
      %1835 = vmatpush.msra.mxu0 %v1813
      %1836 = vmatpush.msra.mxu0 %v1812
      %1837 = vmatmul.f32.gmra.mxu0 %v1463
      %v1838 = vpop.f32.mrf.mxu0
      %v1839 = vadd.f32 %v1819, %v1838
      %1840 = vdwg.mxu0
      %s1841 = scalar_lea.vmem %s21, 64
      %v1842 = vld [vmem:[%s1841] sm:$0xff]
      %v1843 = vld [vmem:[%s1841 + $0x8] sm:$0xff]
      %v1844 = vld [vmem:[%s1841 + $0x10] sm:$0xff]
      %v1845 = vld [vmem:[%s1841 + $0x18] sm:$0xff]
      %s1846 = scalar_lea.vmem %s23, 2
      %v1847 = vld [vmem:[%s1846] sm:$0x1]
      %v1849 = vperm.slane %v1847, 0
      %1851 = vmatpush.msra.mxu0 0.0
      %1852 = vmatpush.msra.mxu0 0.0
      %1853 = vmatpush.msra.mxu0 0.0
      %1854 = vmatpush.msra.mxu0 0.0
      %1855 = vmatpush.msra.mxu0 0.0
      %1856 = vmatpush.msra.mxu0 0.0
      %1857 = vmatpush.msra.mxu0 0.0
      %1858 = vmatpush.msra.mxu0 0.0
      %1859 = vmatpush.msra.mxu0 0.0
      %1860 = vmatpush.msra.mxu0 0.0
      %1861 = vmatpush.msra.mxu0 0.0
      %1862 = vmatpush.msra.mxu0 0.0
      %1863 = vmatpush.msra.mxu0 %v1845
      %1864 = vmatpush.msra.mxu0 %v1844
      %1865 = vmatpush.msra.mxu0 %v1843
      %1866 = vmatpush.msra.mxu0 %v1842
      %1867 = vmatmul.f32.gmra.mxu0 %v1463
      %v1868 = vpop.f32.mrf.mxu0
      %v1869 = vadd.f32 %v1849, %v1868
      %1870 = vdwg.mxu0
      %s1871 = scalar_lea.vmem %s25, 64
      %v1872 = vld [vmem:[%s1871] sm:$0xff]
      %v1873 = vld [vmem:[%s1871 + $0x8] sm:$0xff]
      %v1874 = vld [vmem:[%s1871 + $0x10] sm:$0xff]
      %v1875 = vld [vmem:[%s1871 + $0x18] sm:$0xff]
      %s1876 = scalar_lea.vmem %s27, 2
      %v1877 = vld [vmem:[%s1876] sm:$0x1]
      %v1879 = vperm.slane %v1877, 0
      %1881 = vmatpush.msra.mxu0 0.0
      %1882 = vmatpush.msra.mxu0 0.0
      %1883 = vmatpush.msra.mxu0 0.0
      %1884 = vmatpush.msra.mxu0 0.0
      %1885 = vmatpush.msra.mxu0 0.0
      %1886 = vmatpush.msra.mxu0 0.0
      %1887 = vmatpush.msra.mxu0 0.0
      %1888 = vmatpush.msra.mxu0 0.0
      %1889 = vmatpush.msra.mxu0 0.0
      %1890 = vmatpush.msra.mxu0 0.0
      %1891 = vmatpush.msra.mxu0 0.0
      %1892 = vmatpush.msra.mxu0 0.0
      %1893 = vmatpush.msra.mxu0 %v1875
      %1894 = vmatpush.msra.mxu0 %v1874
      %1895 = vmatpush.msra.mxu0 %v1873
      %1896 = vmatpush.msra.mxu0 %v1872
      %1897 = vmatmul.f32.gmra.mxu0 %v1463
      %v1898 = vpop.f32.mrf.mxu0
      %v1899 = vadd.f32 %v1879, %v1898
      %1900 = vdwg.mxu0
      %v1902 = vsel %vm1541, %v1839, 0
      %v1905 = vsel %vm1541, %v1869, 0
      %1907 = vmatpush.xpose.msra.mxu0 0.0
      %1908 = vmatpush.xpose.msra.mxu0 0.0
      %1909 = vmatpush.xpose.msra.mxu0 0.0
      %1910 = vmatpush.xpose.msra.mxu0 0.0
      %1911 = vmatpush.xpose.msra.mxu0 0.0
      %1912 = vmatpush.xpose.msra.mxu0 0.0
      %1913 = vmatpush.xpose.msra.mxu0 0.0
      %1914 = vmatpush.xpose.msra.mxu0 0.0
      %1915 = vmatpush.xpose.msra.mxu0 0.0
      %1916 = vmatpush.xpose.msra.mxu0 0.0
      %1917 = vmatpush.xpose.msra.mxu0 0.0
      %1918 = vmatpush.xpose.msra.mxu0 0.0
      %1919 = vmatpush.xpose.msra.mxu0 0.0
      %1920 = vmatpush.xpose.msra.mxu0 0.0
      %1921 = vmatpush.xpose.msra.mxu0 0.0
      %1922 = vmatpush.xpose.msra.mxu0 %v1905
      %1923 = vmatmul.f32.gmra.mxu0 %v1902
      %v1924 = vpop.f32.mrf.mxu0
      %v1925 = vadd.f32 0.0, %v1924
      %1926 = vdwg.mxu0
      %v1927 = vmul.f32 %v1925, 0.5
      %v1928 = vsel %vm1569, %v1927, -inf
      %1929 = vmax.xlane.f32.xlu0 %v1928
      %v1930 = vpop.xlane.xlu0 %1929
      %v1931 = vsub.f32 %v1927, %v1930
      %v1932 = vmul.f32 %v1931, 1.442695
      %v1933 = vpow.pop %v1932
      %v1934 = vsel %vm1569, %v1933, 0.0
      %1935 = vadd.xlane.f32.xlu0 %v1934
      %v1936 = vpop.xlane.xlu0 %1935
      %v1937 = vrcp.pop %v1936
      %v1938 = vmul.f32 %v1933, %v1937
      %v1940 = vsel %vm1569, %v1938, 0
      %1942 = vmatpush.msra.mxu0 0.0
      %1943 = vmatpush.msra.mxu0 0.0
      %1944 = vmatpush.msra.mxu0 0.0
      %1945 = vmatpush.msra.mxu0 0.0
      %1946 = vmatpush.msra.mxu0 0.0
      %1947 = vmatpush.msra.mxu0 0.0
      %1948 = vmatpush.msra.mxu0 0.0
      %1949 = vmatpush.msra.mxu0 0.0
      %1950 = vmatpush.msra.mxu0 0.0
      %1951 = vmatpush.msra.mxu0 0.0
      %1952 = vmatpush.msra.mxu0 0.0
      %1953 = vmatpush.msra.mxu0 0.0
      %1954 = vmatpush.msra.mxu0 0.0
      %1955 = vmatpush.msra.mxu0 0.0
      %1956 = vmatpush.msra.mxu0 0.0
      %1957 = vmatpush.msra.mxu0 %v1899
      %1958 = vmatmul.f32.gmra.mxu0 %v1940
      %v1959 = vpop.f32.mrf.mxu0
      %v1960 = vadd.f32 0.0, %v1959
      %1961 = vdwg.mxu0
      %s1962 = scalar_lea.vmem %s29, 8
      %v1963 = vld [vmem:[%s1962] sm:$0xf]
      %v1965 = vsel %vm1541, %v1960, 0
      %v1968 = vsel %vm1761, %v1963, 0
      %1970 = vmatpush.msra.mxu0 0.0
      %1971 = vmatpush.msra.mxu0 0.0
      %1972 = vmatpush.msra.mxu0 0.0
      %1973 = vmatpush.msra.mxu0 0.0
      %1974 = vmatpush.msra.mxu0 0.0
      %1975 = vmatpush.msra.mxu0 0.0
      %1976 = vmatpush.msra.mxu0 0.0
      %1977 = vmatpush.msra.mxu0 0.0
      %1978 = vmatpush.msra.mxu0 0.0
      %1979 = vmatpush.msra.mxu0 0.0
      %1980 = vmatpush.msra.mxu0 0.0
      %1981 = vmatpush.msra.mxu0 0.0
      %1982 = vmatpush.msra.mxu0 0.0
      %1983 = vmatpush.msra.mxu0 0.0
      %1984 = vmatpush.msra.mxu0 0.0
      %1985 = vmatpush.msra.mxu0 %v1968
      %1986 = vmatmul.f32.gmra.mxu0 %v1965
      %v1987 = vpop.f32.mrf.mxu0
      %v1988 = vadd.f32 0.0, %v1987
      %1989 = vdwg.mxu0
      %v1990 = vadd.f32 %v1809, %v1988
      %s1991 = scalar_lea.vmem %s17, 96
      %v1992 = vld [vmem:[%s1991] sm:$0xff]
      %v1993 = vld [vmem:[%s1991 + $0x8] sm:$0xff]
      %v1994 = vld [vmem:[%s1991 + $0x10] sm:$0xff]
      %v1995 = vld [vmem:[%s1991 + $0x18] sm:$0xff]
      %s1996 = scalar_lea.vmem %s19, 3
      %v1997 = vld [vmem:[%s1996] sm:$0x1]
      %v1999 = vperm.slane %v1997, 0
      %2001 = vmatpush.msra.mxu0 0.0
      %2002 = vmatpush.msra.mxu0 0.0
      %2003 = vmatpush.msra.mxu0 0.0
      %2004 = vmatpush.msra.mxu0 0.0
      %2005 = vmatpush.msra.mxu0 0.0
      %2006 = vmatpush.msra.mxu0 0.0
      %2007 = vmatpush.msra.mxu0 0.0
      %2008 = vmatpush.msra.mxu0 0.0
      %2009 = vmatpush.msra.mxu0 0.0
      %2010 = vmatpush.msra.mxu0 0.0
      %2011 = vmatpush.msra.mxu0 0.0
      %2012 = vmatpush.msra.mxu0 0.0
      %2013 = vmatpush.msra.mxu0 %v1995
      %2014 = vmatpush.msra.mxu0 %v1994
      %2015 = vmatpush.msra.mxu0 %v1993
      %2016 = vmatpush.msra.mxu0 %v1992
      %2017 = vmatmul.f32.gmra.mxu0 %v1463
      %v2018 = vpop.f32.mrf.mxu0
      %v2019 = vadd.f32 %v1999, %v2018
      %2020 = vdwg.mxu0
      %s2021 = scalar_lea.vmem %s21, 96
      %v2022 = vld [vmem:[%s2021] sm:$0xff]
      %v2023 = vld [vmem:[%s2021 + $0x8] sm:$0xff]
      %v2024 = vld [vmem:[%s2021 + $0x10] sm:$0xff]
      %v2025 = vld [vmem:[%s2021 + $0x18] sm:$0xff]
      %s2026 = scalar_lea.vmem %s23, 3
      %v2027 = vld [vmem:[%s2026] sm:$0x1]
      %v2029 = vperm.slane %v2027, 0
      %2031 = vmatpush.msra.mxu0 0.0
      %2032 = vmatpush.msra.mxu0 0.0
      %2033 = vmatpush.msra.mxu0 0.0
      %2034 = vmatpush.msra.mxu0 0.0
      %2035 = vmatpush.msra.mxu0 0.0
      %2036 = vmatpush.msra.mxu0 0.0
      %2037 = vmatpush.msra.mxu0 0.0
      %2038 = vmatpush.msra.mxu0 0.0
      %2039 = vmatpush.msra.mxu0 0.0
      %2040 = vmatpush.msra.mxu0 0.0
      %2041 = vmatpush.msra.mxu0 0.0
      %2042 = vmatpush.msra.mxu0 0.0
      %2043 = vmatpush.msra.mxu0 %v2025
      %2044 = vmatpush.msra.mxu0 %v2024
      %2045 = vmatpush.msra.mxu0 %v2023
      %2046 = vmatpush.msra.mxu0 %v2022
      %2047 = vmatmul.f32.gmra.mxu0 %v1463
      %v2048 = vpop.f32.mrf.mxu0
      %v2049 = vadd.f32 %v2029, %v2048
      %2050 = vdwg.mxu0
      %s2051 = scalar_lea.vmem %s25, 96
      %v2052 = vld [vmem:[%s2051] sm:$0xff]
      %v2053 = vld [vmem:[%s2051 + $0x8] sm:$0xff]
      %v2054 = vld [vmem:[%s2051 + $0x10] sm:$0xff]
      %v2055 = vld [vmem:[%s2051 + $0x18] sm:$0xff]
      %s2056 = scalar_lea.vmem %s27, 3
      %v2057 = vld [vmem:[%s2056] sm:$0x1]
      %v2059 = vperm.slane %v2057, 0
      %2061 = vmatpush.msra.mxu0 0.0
      %2062 = vmatpush.msra.mxu0 0.0
      %2063 = vmatpush.msra.mxu0 0.0
      %2064 = vmatpush.msra.mxu0 0.0
      %2065 = vmatpush.msra.mxu0 0.0
      %2066 = vmatpush.msra.mxu0 0.0
      %2067 = vmatpush.msra.mxu0 0.0
      %2068 = vmatpush.msra.mxu0 0.0
      %2069 = vmatpush.msra.mxu0 0.0
      %2070 = vmatpush.msra.mxu0 0.0
      %2071 = vmatpush.msra.mxu0 0.0
      %2072 = vmatpush.msra.mxu0 0.0
      %2073 = vmatpush.msra.mxu0 %v2055
      %2074 = vmatpush.msra.mxu0 %v2054
      %2075 = vmatpush.msra.mxu0 %v2053
      %2076 = vmatpush.msra.mxu0 %v2052
      %2077 = vmatmul.f32.gmra.mxu0 %v1463
      %v2078 = vpop.f32.mrf.mxu0
      %v2079 = vadd.f32 %v2059, %v2078
      %2080 = vdwg.mxu0
      %v2082 = vsel %vm1541, %v2019, 0
      %v2085 = vsel %vm1541, %v2049, 0
      %2087 = vmatpush.xpose.msra.mxu0 0.0
      %2088 = vmatpush.xpose.msra.mxu0 0.0
      %2089 = vmatpush.xpose.msra.mxu0 0.0
      %2090 = vmatpush.xpose.msra.mxu0 0.0
      %2091 = vmatpush.xpose.msra.mxu0 0.0
      %2092 = vmatpush.xpose.msra.mxu0 0.0
      %2093 = vmatpush.xpose.msra.mxu0 0.0
      %2094 = vmatpush.xpose.msra.mxu0 0.0
      %2095 = vmatpush.xpose.msra.mxu0 0.0
      %2096 = vmatpush.xpose.msra.mxu0 0.0
      %2097 = vmatpush.xpose.msra.mxu0 0.0
      %2098 = vmatpush.xpose.msra.mxu0 0.0
      %2099 = vmatpush.xpose.msra.mxu0 0.0
      %2100 = vmatpush.xpose.msra.mxu0 0.0
      %2101 = vmatpush.xpose.msra.mxu0 0.0
      %2102 = vmatpush.xpose.msra.mxu0 %v2085
      %2103 = vmatmul.f32.gmra.mxu0 %v2082
      %v2104 = vpop.f32.mrf.mxu0
      %v2105 = vadd.f32 0.0, %v2104
      %2106 = vdwg.mxu0
      %v2107 = vmul.f32 %v2105, 0.5
      %v2108 = vsel %vm1569, %v2107, -inf
      %2109 = vmax.xlane.f32.xlu0 %v2108
      %v2110 = vpop.xlane.xlu0 %2109
      %v2111 = vsub.f32 %v2107, %v2110
      %v2112 = vmul.f32 %v2111, 1.442695
      %v2113 = vpow.pop %v2112
      %v2114 = vsel %vm1569, %v2113, 0.0
      %2115 = vadd.xlane.f32.xlu0 %v2114
      %v2116 = vpop.xlane.xlu0 %2115
      %v2117 = vrcp.pop %v2116
      %v2118 = vmul.f32 %v2113, %v2117
      %v2120 = vsel %vm1569, %v2118, 0
      %2122 = vmatpush.msra.mxu0 0.0
      %2123 = vmatpush.msra.mxu0 0.0
      %2124 = vmatpush.msra.mxu0 0.0
      %2125 = vmatpush.msra.mxu0 0.0
      %2126 = vmatpush.msra.mxu0 0.0
      %2127 = vmatpush.msra.mxu0 0.0
      %2128 = vmatpush.msra.mxu0 0.0
      %2129 = vmatpush.msra.mxu0 0.0
      %2130 = vmatpush.msra.mxu0 0.0
      %2131 = vmatpush.msra.mxu0 0.0
      %2132 = vmatpush.msra.mxu0 0.0
      %2133 = vmatpush.msra.mxu0 0.0
      %2134 = vmatpush.msra.mxu0 0.0
      %2135 = vmatpush.msra.mxu0 0.0
      %2136 = vmatpush.msra.mxu0 0.0
      %2137 = vmatpush.msra.mxu0 %v2079
      %2138 = vmatmul.f32.gmra.mxu0 %v2120
      %v2139 = vpop.f32.mrf.mxu0
      %v2140 = vadd.f32 0.0, %v2139
      %2141 = vdwg.mxu0
      %s2142 = scalar_lea.vmem %s29, 12
      %v2143 = vld [vmem:[%s2142] sm:$0xf]
      %v2145 = vsel %vm1541, %v2140, 0
      %v2148 = vsel %vm1761, %v2143, 0
      %2150 = vmatpush.msra.mxu0 0.0
      %2151 = vmatpush.msra.mxu0 0.0
      %2152 = vmatpush.msra.mxu0 0.0
      %2153 = vmatpush.msra.mxu0 0.0
      %2154 = vmatpush.msra.mxu0 0.0
      %2155 = vmatpush.msra.mxu0 0.0
      %2156 = vmatpush.msra.mxu0 0.0
      %2157 = vmatpush.msra.mxu0 0.0
      %2158 = vmatpush.msra.mxu0 0.0
      %2159 = vmatpush.msra.mxu0 0.0
      %2160 = vmatpush.msra.mxu0 0.0
      %2161 = vmatpush.msra.mxu0 0.0
      %2162 = vmatpush.msra.mxu0 0.0
      %2163 = vmatpush.msra.mxu0 0.0
      %2164 = vmatpush.msra.mxu0 0.0
      %2165 = vmatpush.msra.mxu0 %v2148
      %2166 = vmatmul.f32.gmra.mxu0 %v2145
      %v2167 = vpop.f32.mrf.mxu0
      %v2168 = vadd.f32 0.0, %v2167
      %2169 = vdwg.mxu0
      %v2170 = vadd.f32 %v1990, %v2168
      %s2171 = scalar_lea.vmem %s17, 128
      %v2172 = vld [vmem:[%s2171] sm:$0xff]
      %v2173 = vld [vmem:[%s2171 + $0x8] sm:$0xff]
      %v2174 = vld [vmem:[%s2171 + $0x10] sm:$0xff]
      %v2175 = vld [vmem:[%s2171 + $0x18] sm:$0xff]
      %s2176 = scalar_lea.vmem %s19, 4
      %v2177 = vld [vmem:[%s2176] sm:$0x1]
      %v2179 = vperm.slane %v2177, 0
      %2181 = vmatpush.msra.mxu0 0.0
      %2182 = vmatpush.msra.mxu0 0.0
      %2183 = vmatpush.msra.mxu0 0.0
      %2184 = vmatpush.msra.mxu0 0.0
      %2185 = vmatpush.msra.mxu0 0.0
      %2186 = vmatpush.msra.mxu0 0.0
      %2187 = vmatpush.msra.mxu0 0.0
      %2188 = vmatpush.msra.mxu0 0.0
      %2189 = vmatpush.msra.mxu0 0.0
      %2190 = vmatpush.msra.mxu0 0.0
      %2191 = vmatpush.msra.mxu0 0.0
      %2192 = vmatpush.msra.mxu0 0.0
      %2193 = vmatpush.msra.mxu0 %v2175
      %2194 = vmatpush.msra.mxu0 %v2174
      %2195 = vmatpush.msra.mxu0 %v2173
      %2196 = vmatpush.msra.mxu0 %v2172
      %2197 = vmatmul.f32.gmra.mxu0 %v1463
      %v2198 = vpop.f32.mrf.mxu0
      %v2199 = vadd.f32 %v2179, %v2198
      %2200 = vdwg.mxu0
      %s2201 = scalar_lea.vmem %s21, 128
      %v2202 = vld [vmem:[%s2201] sm:$0xff]
      %v2203 = vld [vmem:[%s2201 + $0x8] sm:$0xff]
      %v2204 = vld [vmem:[%s2201 + $0x10] sm:$0xff]
      %v2205 = vld [vmem:[%s2201 + $0x18] sm:$0xff]
      %s2206 = scalar_lea.vmem %s23, 4
      %v2207 = vld [vmem:[%s2206] sm:$0x1]
      %v2209 = vperm.slane %v2207, 0
      %2211 = vmatpush.msra.mxu0 0.0
      %2212 = vmatpush.msra.mxu0 0.0
      %2213 = vmatpush.msra.mxu0 0.0
      %2214 = vmatpush.msra.mxu0 0.0
      %2215 = vmatpush.msra.mxu0 0.0
      %2216 = vmatpush.msra.mxu0 0.0
      %2217 = vmatpush.msra.mxu0 0.0
      %2218 = vmatpush.msra.mxu0 0.0
      %2219 = vmatpush.msra.mxu0 0.0
      %2220 = vmatpush.msra.mxu0 0.0
      %2221 = vmatpush.msra.mxu0 0.0
      %2222 = vmatpush.msra.mxu0 0.0
      %2223 = vmatpush.msra.mxu0 %v2205
      %2224 = vmatpush.msra.mxu0 %v2204
      %2225 = vmatpush.msra.mxu0 %v2203
      %2226 = vmatpush.msra.mxu0 %v2202
      %2227 = vmatmul.f32.gmra.mxu0 %v1463
      %v2228 = vpop.f32.mrf.mxu0
      %v2229 = vadd.f32 %v2209, %v2228
      %2230 = vdwg.mxu0
      %s2231 = scalar_lea.vmem %s25, 128
      %v2232 = vld [vmem:[%s2231] sm:$0xff]
      %v2233 = vld [vmem:[%s2231 + $0x8] sm:$0xff]
      %v2234 = vld [vmem:[%s2231 + $0x10] sm:$0xff]
      %v2235 = vld [vmem:[%s2231 + $0x18] sm:$0xff]
      %s2236 = scalar_lea.vmem %s27, 4
      %v2237 = vld [vmem:[%s2236] sm:$0x1]
      %v2239 = vperm.slane %v2237, 0
      %2241 = vmatpush.msra.mxu0 0.0
      %2242 = vmatpush.msra.mxu0 0.0
      %2243 = vmatpush.msra.mxu0 0.0
      %2244 = vmatpush.msra.mxu0 0.0
      %2245 = vmatpush.msra.mxu0 0.0
      %2246 = vmatpush.msra.mxu0 0.0
      %2247 = vmatpush.msra.mxu0 0.0
      %2248 = vmatpush.msra.mxu0 0.0
      %2249 = vmatpush.msra.mxu0 0.0
      %2250 = vmatpush.msra.mxu0 0.0
      %2251 = vmatpush.msra.mxu0 0.0
      %2252 = vmatpush.msra.mxu0 0.0
      %2253 = vmatpush.msra.mxu0 %v2235
      %2254 = vmatpush.msra.mxu0 %v2234
      %2255 = vmatpush.msra.mxu0 %v2233
      %2256 = vmatpush.msra.mxu0 %v2232
      %2257 = vmatmul.f32.gmra.mxu0 %v1463
      %v2258 = vpop.f32.mrf.mxu0
      %v2259 = vadd.f32 %v2239, %v2258
      %2260 = vdwg.mxu0
      %v2262 = vsel %vm1541, %v2199, 0
      %v2265 = vsel %vm1541, %v2229, 0
      %2267 = vmatpush.xpose.msra.mxu0 0.0
      %2268 = vmatpush.xpose.msra.mxu0 0.0
      %2269 = vmatpush.xpose.msra.mxu0 0.0
      %2270 = vmatpush.xpose.msra.mxu0 0.0
      %2271 = vmatpush.xpose.msra.mxu0 0.0
      %2272 = vmatpush.xpose.msra.mxu0 0.0
      %2273 = vmatpush.xpose.msra.mxu0 0.0
      %2274 = vmatpush.xpose.msra.mxu0 0.0
      %2275 = vmatpush.xpose.msra.mxu0 0.0
      %2276 = vmatpush.xpose.msra.mxu0 0.0
      %2277 = vmatpush.xpose.msra.mxu0 0.0
      %2278 = vmatpush.xpose.msra.mxu0 0.0
      %2279 = vmatpush.xpose.msra.mxu0 0.0
      %2280 = vmatpush.xpose.msra.mxu0 0.0
      %2281 = vmatpush.xpose.msra.mxu0 0.0
      %2282 = vmatpush.xpose.msra.mxu0 %v2265
      %2283 = vmatmul.f32.gmra.mxu0 %v2262
      %v2284 = vpop.f32.mrf.mxu0
      %v2285 = vadd.f32 0.0, %v2284
      %2286 = vdwg.mxu0
      %v2287 = vmul.f32 %v2285, 0.5
      %v2288 = vsel %vm1569, %v2287, -inf
      %2289 = vmax.xlane.f32.xlu0 %v2288
      %v2290 = vpop.xlane.xlu0 %2289
      %v2291 = vsub.f32 %v2287, %v2290
      %v2292 = vmul.f32 %v2291, 1.442695
      %v2293 = vpow.pop %v2292
      %v2294 = vsel %vm1569, %v2293, 0.0
      %2295 = vadd.xlane.f32.xlu0 %v2294
      %v2296 = vpop.xlane.xlu0 %2295
      %v2297 = vrcp.pop %v2296
      %v2298 = vmul.f32 %v2293, %v2297
      %v2300 = vsel %vm1569, %v2298, 0
      %2302 = vmatpush.msra.mxu0 0.0
      %2303 = vmatpush.msra.mxu0 0.0
      %2304 = vmatpush.msra.mxu0 0.0
      %2305 = vmatpush.msra.mxu0 0.0
      %2306 = vmatpush.msra.mxu0 0.0
      %2307 = vmatpush.msra.mxu0 0.0
      %2308 = vmatpush.msra.mxu0 0.0
      %2309 = vmatpush.msra.mxu0 0.0
      %2310 = vmatpush.msra.mxu0 0.0
      %2311 = vmatpush.msra.mxu0 0.0
      %2312 = vmatpush.msra.mxu0 0.0
      %2313 = vmatpush.msra.mxu0 0.0
      %2314 = vmatpush.msra.mxu0 0.0
      %2315 = vmatpush.msra.mxu0 0.0
      %2316 = vmatpush.msra.mxu0 0.0
      %2317 = vmatpush.msra.mxu0 %v2259
      %2318 = vmatmul.f32.gmra.mxu0 %v2300
      %v2319 = vpop.f32.mrf.mxu0
      %v2320 = vadd.f32 0.0, %v2319
      %2321 = vdwg.mxu0
      %s2322 = scalar_lea.vmem %s29, 16
      %v2323 = vld [vmem:[%s2322] sm:$0xf]
      %v2325 = vsel %vm1541, %v2320, 0
      %v2328 = vsel %vm1761, %v2323, 0
      %2330 = vmatpush.msra.mxu0 0.0
      %2331 = vmatpush.msra.mxu0 0.0
      %2332 = vmatpush.msra.mxu0 0.0
      %2333 = vmatpush.msra.mxu0 0.0
      %2334 = vmatpush.msra.mxu0 0.0
      %2335 = vmatpush.msra.mxu0 0.0
      %2336 = vmatpush.msra.mxu0 0.0
      %2337 = vmatpush.msra.mxu0 0.0
      %2338 = vmatpush.msra.mxu0 0.0
      %2339 = vmatpush.msra.mxu0 0.0
      %2340 = vmatpush.msra.mxu0 0.0
      %2341 = vmatpush.msra.mxu0 0.0
      %2342 = vmatpush.msra.mxu0 0.0
      %2343 = vmatpush.msra.mxu0 0.0
      %2344 = vmatpush.msra.mxu0 0.0
      %2345 = vmatpush.msra.mxu0 %v2328
      %2346 = vmatmul.f32.gmra.mxu0 %v2325
      %v2347 = vpop.f32.mrf.mxu0
      %v2348 = vadd.f32 0.0, %v2347
      %2349 = vdwg.mxu0
      %v2350 = vadd.f32 %v2170, %v2348
      %s2351 = scalar_lea.vmem %s17, 160
      %v2352 = vld [vmem:[%s2351] sm:$0xff]
      %v2353 = vld [vmem:[%s2351 + $0x8] sm:$0xff]
      %v2354 = vld [vmem:[%s2351 + $0x10] sm:$0xff]
      %v2355 = vld [vmem:[%s2351 + $0x18] sm:$0xff]
      %s2356 = scalar_lea.vmem %s19, 5
      %v2357 = vld [vmem:[%s2356] sm:$0x1]
      %v2359 = vperm.slane %v2357, 0
      %2361 = vmatpush.msra.mxu0 0.0
      %2362 = vmatpush.msra.mxu0 0.0
      %2363 = vmatpush.msra.mxu0 0.0
      %2364 = vmatpush.msra.mxu0 0.0
      %2365 = vmatpush.msra.mxu0 0.0
      %2366 = vmatpush.msra.mxu0 0.0
      %2367 = vmatpush.msra.mxu0 0.0
      %2368 = vmatpush.msra.mxu0 0.0
      %2369 = vmatpush.msra.mxu0 0.0
      %2370 = vmatpush.msra.mxu0 0.0
      %2371 = vmatpush.msra.mxu0 0.0
      %2372 = vmatpush.msra.mxu0 0.0
      %2373 = vmatpush.msra.mxu0 %v2355
      %2374 = vmatpush.msra.mxu0 %v2354
      %2375 = vmatpush.msra.mxu0 %v2353
      %2376 = vmatpush.msra.mxu0 %v2352
      %2377 = vmatmul.f32.gmra.mxu0 %v1463
      %v2378 = vpop.f32.mrf.mxu0
      %v2379 = vadd.f32 %v2359, %v2378
      %2380 = vdwg.mxu0
      %s2381 = scalar_lea.vmem %s21, 160
      %v2382 = vld [vmem:[%s2381] sm:$0xff]
      %v2383 = vld [vmem:[%s2381 + $0x8] sm:$0xff]
      %v2384 = vld [vmem:[%s2381 + $0x10] sm:$0xff]
      %v2385 = vld [vmem:[%s2381 + $0x18] sm:$0xff]
      %s2386 = scalar_lea.vmem %s23, 5
      %v2387 = vld [vmem:[%s2386] sm:$0x1]
      %v2389 = vperm.slane %v2387, 0
      %2391 = vmatpush.msra.mxu0 0.0
      %2392 = vmatpush.msra.mxu0 0.0
      %2393 = vmatpush.msra.mxu0 0.0
      %2394 = vmatpush.msra.mxu0 0.0
      %2395 = vmatpush.msra.mxu0 0.0
      %2396 = vmatpush.msra.mxu0 0.0
      %2397 = vmatpush.msra.mxu0 0.0
      %2398 = vmatpush.msra.mxu0 0.0
      %2399 = vmatpush.msra.mxu0 0.0
      %2400 = vmatpush.msra.mxu0 0.0
      %2401 = vmatpush.msra.mxu0 0.0
      %2402 = vmatpush.msra.mxu0 0.0
      %2403 = vmatpush.msra.mxu0 %v2385
      %2404 = vmatpush.msra.mxu0 %v2384
      %2405 = vmatpush.msra.mxu0 %v2383
      %2406 = vmatpush.msra.mxu0 %v2382
      %2407 = vmatmul.f32.gmra.mxu0 %v1463
      %v2408 = vpop.f32.mrf.mxu0
      %v2409 = vadd.f32 %v2389, %v2408
      %2410 = vdwg.mxu0
      %s2411 = scalar_lea.vmem %s25, 160
      %v2412 = vld [vmem:[%s2411] sm:$0xff]
      %v2413 = vld [vmem:[%s2411 + $0x8] sm:$0xff]
      %v2414 = vld [vmem:[%s2411 + $0x10] sm:$0xff]
      %v2415 = vld [vmem:[%s2411 + $0x18] sm:$0xff]
      %s2416 = scalar_lea.vmem %s27, 5
      %v2417 = vld [vmem:[%s2416] sm:$0x1]
      %v2419 = vperm.slane %v2417, 0
      %2421 = vmatpush.msra.mxu0 0.0
      %2422 = vmatpush.msra.mxu0 0.0
      %2423 = vmatpush.msra.mxu0 0.0
      %2424 = vmatpush.msra.mxu0 0.0
      %2425 = vmatpush.msra.mxu0 0.0
      %2426 = vmatpush.msra.mxu0 0.0
      %2427 = vmatpush.msra.mxu0 0.0
      %2428 = vmatpush.msra.mxu0 0.0
      %2429 = vmatpush.msra.mxu0 0.0
      %2430 = vmatpush.msra.mxu0 0.0
      %2431 = vmatpush.msra.mxu0 0.0
      %2432 = vmatpush.msra.mxu0 0.0
      %2433 = vmatpush.msra.mxu0 %v2415
      %2434 = vmatpush.msra.mxu0 %v2414
      %2435 = vmatpush.msra.mxu0 %v2413
      %2436 = vmatpush.msra.mxu0 %v2412
      %2437 = vmatmul.f32.gmra.mxu0 %v1463
      %v2438 = vpop.f32.mrf.mxu0
      %v2439 = vadd.f32 %v2419, %v2438
      %2440 = vdwg.mxu0
      %v2442 = vsel %vm1541, %v2379, 0
      %v2445 = vsel %vm1541, %v2409, 0
      %2447 = vmatpush.xpose.msra.mxu0 0.0
      %2448 = vmatpush.xpose.msra.mxu0 0.0
      %2449 = vmatpush.xpose.msra.mxu0 0.0
      %2450 = vmatpush.xpose.msra.mxu0 0.0
      %2451 = vmatpush.xpose.msra.mxu0 0.0
      %2452 = vmatpush.xpose.msra.mxu0 0.0
      %2453 = vmatpush.xpose.msra.mxu0 0.0
      %2454 = vmatpush.xpose.msra.mxu0 0.0
      %2455 = vmatpush.xpose.msra.mxu0 0.0
      %2456 = vmatpush.xpose.msra.mxu0 0.0
      %2457 = vmatpush.xpose.msra.mxu0 0.0
      %2458 = vmatpush.xpose.msra.mxu0 0.0
      %2459 = vmatpush.xpose.msra.mxu0 0.0
      %2460 = vmatpush.xpose.msra.mxu0 0.0
      %2461 = vmatpush.xpose.msra.mxu0 0.0
      %2462 = vmatpush.xpose.msra.mxu0 %v2445
      %2463 = vmatmul.f32.gmra.mxu0 %v2442
      %v2464 = vpop.f32.mrf.mxu0
      %v2465 = vadd.f32 0.0, %v2464
      %2466 = vdwg.mxu0
      %v2467 = vmul.f32 %v2465, 0.5
      %v2468 = vsel %vm1569, %v2467, -inf
      %2469 = vmax.xlane.f32.xlu0 %v2468
      %v2470 = vpop.xlane.xlu0 %2469
      %v2471 = vsub.f32 %v2467, %v2470
      %v2472 = vmul.f32 %v2471, 1.442695
      %v2473 = vpow.pop %v2472
      %v2474 = vsel %vm1569, %v2473, 0.0
      %2475 = vadd.xlane.f32.xlu0 %v2474
      %v2476 = vpop.xlane.xlu0 %2475
      %v2477 = vrcp.pop %v2476
      %v2478 = vmul.f32 %v2473, %v2477
      %v2480 = vsel %vm1569, %v2478, 0
      %2482 = vmatpush.msra.mxu0 0.0
      %2483 = vmatpush.msra.mxu0 0.0
      %2484 = vmatpush.msra.mxu0 0.0
      %2485 = vmatpush.msra.mxu0 0.0
      %2486 = vmatpush.msra.mxu0 0.0
      %2487 = vmatpush.msra.mxu0 0.0
      %2488 = vmatpush.msra.mxu0 0.0
      %2489 = vmatpush.msra.mxu0 0.0
      %2490 = vmatpush.msra.mxu0 0.0
      %2491 = vmatpush.msra.mxu0 0.0
      %2492 = vmatpush.msra.mxu0 0.0
      %2493 = vmatpush.msra.mxu0 0.0
      %2494 = vmatpush.msra.mxu0 0.0
      %2495 = vmatpush.msra.mxu0 0.0
      %2496 = vmatpush.msra.mxu0 0.0
      %2497 = vmatpush.msra.mxu0 %v2439
      %2498 = vmatmul.f32.gmra.mxu0 %v2480
      %v2499 = vpop.f32.mrf.mxu0
      %v2500 = vadd.f32 0.0, %v2499
      %2501 = vdwg.mxu0
      %s2502 = scalar_lea.vmem %s29, 20
      %v2503 = vld [vmem:[%s2502] sm:$0xf]
      %v2505 = vsel %vm1541, %v2500, 0
      %v2508 = vsel %vm1761, %v2503, 0
      %2510 = vmatpush.msra.mxu0 0.0
      %2511 = vmatpush.msra.mxu0 0.0
      %2512 = vmatpush.msra.mxu0 0.0
      %2513 = vmatpush.msra.mxu0 0.0
      %2514 = vmatpush.msra.mxu0 0.0
      %2515 = vmatpush.msra.mxu0 0.0
      %2516 = vmatpush.msra.mxu0 0.0
      %2517 = vmatpush.msra.mxu0 0.0
      %2518 = vmatpush.msra.mxu0 0.0
      %2519 = vmatpush.msra.mxu0 0.0
      %2520 = vmatpush.msra.mxu0 0.0
      %2521 = vmatpush.msra.mxu0 0.0
      %2522 = vmatpush.msra.mxu0 0.0
      %2523 = vmatpush.msra.mxu0 0.0
      %2524 = vmatpush.msra.mxu0 0.0
      %2525 = vmatpush.msra.mxu0 %v2508
      %2526 = vmatmul.f32.gmra.mxu0 %v2505
      %v2527 = vpop.f32.mrf.mxu0
      %v2528 = vadd.f32 0.0, %v2527
      %2529 = vdwg.mxu0
      %v2530 = vadd.f32 %v2350, %v2528
      %s2531 = scalar_lea.vmem %s17, 192
      %v2532 = vld [vmem:[%s2531] sm:$0xff]
      %v2533 = vld [vmem:[%s2531 + $0x8] sm:$0xff]
      %v2534 = vld [vmem:[%s2531 + $0x10] sm:$0xff]
      %v2535 = vld [vmem:[%s2531 + $0x18] sm:$0xff]
      %s2536 = scalar_lea.vmem %s19, 6
      %v2537 = vld [vmem:[%s2536] sm:$0x1]
      %v2539 = vperm.slane %v2537, 0
      %2541 = vmatpush.msra.mxu0 0.0
      %2542 = vmatpush.msra.mxu0 0.0
      %2543 = vmatpush.msra.mxu0 0.0
      %2544 = vmatpush.msra.mxu0 0.0
      %2545 = vmatpush.msra.mxu0 0.0
      %2546 = vmatpush.msra.mxu0 0.0
      %2547 = vmatpush.msra.mxu0 0.0
      %2548 = vmatpush.msra.mxu0 0.0
      %2549 = vmatpush.msra.mxu0 0.0
      %2550 = vmatpush.msra.mxu0 0.0
      %2551 = vmatpush.msra.mxu0 0.0
      %2552 = vmatpush.msra.mxu0 0.0
      %2553 = vmatpush.msra.mxu0 %v2535
      %2554 = vmatpush.msra.mxu0 %v2534
      %2555 = vmatpush.msra.mxu0 %v2533
      %2556 = vmatpush.msra.mxu0 %v2532
      %2557 = vmatmul.f32.gmra.mxu0 %v1463
      %v2558 = vpop.f32.mrf.mxu0
      %v2559 = vadd.f32 %v2539, %v2558
      %2560 = vdwg.mxu0
      %s2561 = scalar_lea.vmem %s21, 192
      %v2562 = vld [vmem:[%s2561] sm:$0xff]
      %v2563 = vld [vmem:[%s2561 + $0x8] sm:$0xff]
      %v2564 = vld [vmem:[%s2561 + $0x10] sm:$0xff]
      %v2565 = vld [vmem:[%s2561 + $0x18] sm:$0xff]
      %s2566 = scalar_lea.vmem %s23, 6
      %v2567 = vld [vmem:[%s2566] sm:$0x1]
      %v2569 = vperm.slane %v2567, 0
      %2571 = vmatpush.msra.mxu0 0.0
      %2572 = vmatpush.msra.mxu0 0.0
      %2573 = vmatpush.msra.mxu0 0.0
      %2574 = vmatpush.msra.mxu0 0.0
      %2575 = vmatpush.msra.mxu0 0.0
      %2576 = vmatpush.msra.mxu0 0.0
      %2577 = vmatpush.msra.mxu0 0.0
      %2578 = vmatpush.msra.mxu0 0.0
      %2579 = vmatpush.msra.mxu0 0.0
      %2580 = vmatpush.msra.mxu0 0.0
      %2581 = vmatpush.msra.mxu0 0.0
      %2582 = vmatpush.msra.mxu0 0.0
      %2583 = vmatpush.msra.mxu0 %v2565
      %2584 = vmatpush.msra.mxu0 %v2564
      %2585 = vmatpush.msra.mxu0 %v2563
      %2586 = vmatpush.msra.mxu0 %v2562
      %2587 = vmatmul.f32.gmra.mxu0 %v1463
      %v2588 = vpop.f32.mrf.mxu0
      %v2589 = vadd.f32 %v2569, %v2588
      %2590 = vdwg.mxu0
      %s2591 = scalar_lea.vmem %s25, 192
      %v2592 = vld [vmem:[%s2591] sm:$0xff]
      %v2593 = vld [vmem:[%s2591 + $0x8] sm:$0xff]
      %v2594 = vld [vmem:[%s2591 + $0x10] sm:$0xff]
      %v2595 = vld [vmem:[%s2591 + $0x18] sm:$0xff]
      %s2596 = scalar_lea.vmem %s27, 6
      %v2597 = vld [vmem:[%s2596] sm:$0x1]
      %v2599 = vperm.slane %v2597, 0
      %2601 = vmatpush.msra.mxu0 0.0
      %2602 = vmatpush.msra.mxu0 0.0
      %2603 = vmatpush.msra.mxu0 0.0
      %2604 = vmatpush.msra.mxu0 0.0
      %2605 = vmatpush.msra.mxu0 0.0
      %2606 = vmatpush.msra.mxu0 0.0
      %2607 = vmatpush.msra.mxu0 0.0
      %2608 = vmatpush.msra.mxu0 0.0
      %2609 = vmatpush.msra.mxu0 0.0
      %2610 = vmatpush.msra.mxu0 0.0
      %2611 = vmatpush.msra.mxu0 0.0
      %2612 = vmatpush.msra.mxu0 0.0
      %2613 = vmatpush.msra.mxu0 %v2595
      %2614 = vmatpush.msra.mxu0 %v2594
      %2615 = vmatpush.msra.mxu0 %v2593
      %2616 = vmatpush.msra.mxu0 %v2592
      %2617 = vmatmul.f32.gmra.mxu0 %v1463
      %v2618 = vpop.f32.mrf.mxu0
      %v2619 = vadd.f32 %v2599, %v2618
      %2620 = vdwg.mxu0
      %v2622 = vsel %vm1541, %v2559, 0
      %v2625 = vsel %vm1541, %v2589, 0
      %2627 = vmatpush.xpose.msra.mxu0 0.0
      %2628 = vmatpush.xpose.msra.mxu0 0.0
      %2629 = vmatpush.xpose.msra.mxu0 0.0
      %2630 = vmatpush.xpose.msra.mxu0 0.0
      %2631 = vmatpush.xpose.msra.mxu0 0.0
      %2632 = vmatpush.xpose.msra.mxu0 0.0
      %2633 = vmatpush.xpose.msra.mxu0 0.0
      %2634 = vmatpush.xpose.msra.mxu0 0.0
      %2635 = vmatpush.xpose.msra.mxu0 0.0
      %2636 = vmatpush.xpose.msra.mxu0 0.0
      %2637 = vmatpush.xpose.msra.mxu0 0.0
      %2638 = vmatpush.xpose.msra.mxu0 0.0
      %2639 = vmatpush.xpose.msra.mxu0 0.0
      %2640 = vmatpush.xpose.msra.mxu0 0.0
      %2641 = vmatpush.xpose.msra.mxu0 0.0
      %2642 = vmatpush.xpose.msra.mxu0 %v2625
      %2643 = vmatmul.f32.gmra.mxu0 %v2622
      %v2644 = vpop.f32.mrf.mxu0
      %v2645 = vadd.f32 0.0, %v2644
      %2646 = vdwg.mxu0
      %v2647 = vmul.f32 %v2645, 0.5
      %v2648 = vsel %vm1569, %v2647, -inf
      %2649 = vmax.xlane.f32.xlu0 %v2648
      %v2650 = vpop.xlane.xlu0 %2649
      %v2651 = vsub.f32 %v2647, %v2650
      %v2652 = vmul.f32 %v2651, 1.442695
      %v2653 = vpow.pop %v2652
      %v2654 = vsel %vm1569, %v2653, 0.0
      %2655 = vadd.xlane.f32.xlu0 %v2654
      %v2656 = vpop.xlane.xlu0 %2655
      %v2657 = vrcp.pop %v2656
      %v2658 = vmul.f32 %v2653, %v2657
      %v2660 = vsel %vm1569, %v2658, 0
      %2662 = vmatpush.msra.mxu0 0.0
      %2663 = vmatpush.msra.mxu0 0.0
      %2664 = vmatpush.msra.mxu0 0.0
      %2665 = vmatpush.msra.mxu0 0.0
      %2666 = vmatpush.msra.mxu0 0.0
      %2667 = vmatpush.msra.mxu0 0.0
      %2668 = vmatpush.msra.mxu0 0.0
      %2669 = vmatpush.msra.mxu0 0.0
      %2670 = vmatpush.msra.mxu0 0.0
      %2671 = vmatpush.msra.mxu0 0.0
      %2672 = vmatpush.msra.mxu0 0.0
      %2673 = vmatpush.msra.mxu0 0.0
      %2674 = vmatpush.msra.mxu0 0.0
      %2675 = vmatpush.msra.mxu0 0.0
      %2676 = vmatpush.msra.mxu0 0.0
      %2677 = vmatpush.msra.mxu0 %v2619
      %2678 = vmatmul.f32.gmra.mxu0 %v2660
      %v2679 = vpop.f32.mrf.mxu0
      %v2680 = vadd.f32 0.0, %v2679
      %2681 = vdwg.mxu0
      %s2682 = scalar_lea.vmem %s29, 24
      %v2683 = vld [vmem:[%s2682] sm:$0xf]
      %v2685 = vsel %vm1541, %v2680, 0
      %v2688 = vsel %vm1761, %v2683, 0
      %2690 = vmatpush.msra.mxu0 0.0
      %2691 = vmatpush.msra.mxu0 0.0
      %2692 = vmatpush.msra.mxu0 0.0
      %2693 = vmatpush.msra.mxu0 0.0
      %2694 = vmatpush.msra.mxu0 0.0
      %2695 = vmatpush.msra.mxu0 0.0
      %2696 = vmatpush.msra.mxu0 0.0
      %2697 = vmatpush.msra.mxu0 0.0
      %2698 = vmatpush.msra.mxu0 0.0
      %2699 = vmatpush.msra.mxu0 0.0
      %2700 = vmatpush.msra.mxu0 0.0
      %2701 = vmatpush.msra.mxu0 0.0
      %2702 = vmatpush.msra.mxu0 0.0
      %2703 = vmatpush.msra.mxu0 0.0
      %2704 = vmatpush.msra.mxu0 0.0
      %2705 = vmatpush.msra.mxu0 %v2688
      %2706 = vmatmul.f32.gmra.mxu0 %v2685
      %v2707 = vpop.f32.mrf.mxu0
      %v2708 = vadd.f32 0.0, %v2707
      %2709 = vdwg.mxu0
      %v2710 = vadd.f32 %v2530, %v2708
      %s2711 = scalar_lea.vmem %s17, 224
      %v2712 = vld [vmem:[%s2711] sm:$0xff]
      %v2713 = vld [vmem:[%s2711 + $0x8] sm:$0xff]
      %v2714 = vld [vmem:[%s2711 + $0x10] sm:$0xff]
      %v2715 = vld [vmem:[%s2711 + $0x18] sm:$0xff]
      %s2716 = scalar_lea.vmem %s19, 7
      %v2717 = vld [vmem:[%s2716] sm:$0x1]
      %v2719 = vperm.slane %v2717, 0
      %2721 = vmatpush.msra.mxu0 0.0
      %2722 = vmatpush.msra.mxu0 0.0
      %2723 = vmatpush.msra.mxu0 0.0
      %2724 = vmatpush.msra.mxu0 0.0
      %2725 = vmatpush.msra.mxu0 0.0
      %2726 = vmatpush.msra.mxu0 0.0
      %2727 = vmatpush.msra.mxu0 0.0
      %2728 = vmatpush.msra.mxu0 0.0
      %2729 = vmatpush.msra.mxu0 0.0
      %2730 = vmatpush.msra.mxu0 0.0
      %2731 = vmatpush.msra.mxu0 0.0
      %2732 = vmatpush.msra.mxu0 0.0
      %2733 = vmatpush.msra.mxu0 %v2715
      %2734 = vmatpush.msra.mxu0 %v2714
      %2735 = vmatpush.msra.mxu0 %v2713
      %2736 = vmatpush.msra.mxu0 %v2712
      %2737 = vmatmul.f32.gmra.mxu0 %v1463
      %v2738 = vpop.f32.mrf.mxu0
      %v2739 = vadd.f32 %v2719, %v2738
      %2740 = vdwg.mxu0
      %s2741 = scalar_lea.vmem %s21, 224
      %v2742 = vld [vmem:[%s2741] sm:$0xff]
      %v2743 = vld [vmem:[%s2741 + $0x8] sm:$0xff]
      %v2744 = vld [vmem:[%s2741 + $0x10] sm:$0xff]
      %v2745 = vld [vmem:[%s2741 + $0x18] sm:$0xff]
      %s2746 = scalar_lea.vmem %s23, 7
      %v2747 = vld [vmem:[%s2746] sm:$0x1]
      %v2749 = vperm.slane %v2747, 0
      %2751 = vmatpush.msra.mxu0 0.0
      %2752 = vmatpush.msra.mxu0 0.0
      %2753 = vmatpush.msra.mxu0 0.0
      %2754 = vmatpush.msra.mxu0 0.0
      %2755 = vmatpush.msra.mxu0 0.0
      %2756 = vmatpush.msra.mxu0 0.0
      %2757 = vmatpush.msra.mxu0 0.0
      %2758 = vmatpush.msra.mxu0 0.0
      %2759 = vmatpush.msra.mxu0 0.0
      %2760 = vmatpush.msra.mxu0 0.0
      %2761 = vmatpush.msra.mxu0 0.0
      %2762 = vmatpush.msra.mxu0 0.0
      %2763 = vmatpush.msra.mxu0 %v2745
      %2764 = vmatpush.msra.mxu0 %v2744
      %2765 = vmatpush.msra.mxu0 %v2743
      %2766 = vmatpush.msra.mxu0 %v2742
      %2767 = vmatmul.f32.gmra.mxu0 %v1463
      %v2768 = vpop.f32.mrf.mxu0
      %v2769 = vadd.f32 %v2749, %v2768
      %2770 = vdwg.mxu0
      %s2771 = scalar_lea.vmem %s25, 224
      %v2772 = vld [vmem:[%s2771] sm:$0xff]
      %v2773 = vld [vmem:[%s2771 + $0x8] sm:$0xff]
      %v2774 = vld [vmem:[%s2771 + $0x10] sm:$0xff]
      %v2775 = vld [vmem:[%s2771 + $0x18] sm:$0xff]
      %s2776 = scalar_lea.vmem %s27, 7
      %v2777 = vld [vmem:[%s2776] sm:$0x1]
      %v2779 = vperm.slane %v2777, 0
      %2781 = vmatpush.msra.mxu0 0.0
      %2782 = vmatpush.msra.mxu0 0.0
      %2783 = vmatpush.msra.mxu0 0.0
      %2784 = vmatpush.msra.mxu0 0.0
      %2785 = vmatpush.msra.mxu0 0.0
      %2786 = vmatpush.msra.mxu0 0.0
      %2787 = vmatpush.msra.mxu0 0.0
      %2788 = vmatpush.msra.mxu0 0.0
      %2789 = vmatpush.msra.mxu0 0.0
      %2790 = vmatpush.msra.mxu0 0.0
      %2791 = vmatpush.msra.mxu0 0.0
      %2792 = vmatpush.msra.mxu0 0.0
      %2793 = vmatpush.msra.mxu0 %v2775
      %2794 = vmatpush.msra.mxu0 %v2774
      %2795 = vmatpush.msra.mxu0 %v2773
      %2796 = vmatpush.msra.mxu0 %v2772
      %2797 = vmatmul.f32.gmra.mxu0 %v1463
      %v2798 = vpop.f32.mrf.mxu0
      %v2799 = vadd.f32 %v2779, %v2798
      %2800 = vdwg.mxu0
      %v2802 = vsel %vm1541, %v2739, 0
      %v2805 = vsel %vm1541, %v2769, 0
      %2807 = vmatpush.xpose.msra.mxu0 0.0
      %2808 = vmatpush.xpose.msra.mxu0 0.0
      %2809 = vmatpush.xpose.msra.mxu0 0.0
      %2810 = vmatpush.xpose.msra.mxu0 0.0
      %2811 = vmatpush.xpose.msra.mxu0 0.0
      %2812 = vmatpush.xpose.msra.mxu0 0.0
      %2813 = vmatpush.xpose.msra.mxu0 0.0
      %2814 = vmatpush.xpose.msra.mxu0 0.0
      %2815 = vmatpush.xpose.msra.mxu0 0.0
      %2816 = vmatpush.xpose.msra.mxu0 0.0
      %2817 = vmatpush.xpose.msra.mxu0 0.0
      %2818 = vmatpush.xpose.msra.mxu0 0.0
      %2819 = vmatpush.xpose.msra.mxu0 0.0
      %2820 = vmatpush.xpose.msra.mxu0 0.0
      %2821 = vmatpush.xpose.msra.mxu0 0.0
      %2822 = vmatpush.xpose.msra.mxu0 %v2805
      %2823 = vmatmul.f32.gmra.mxu0 %v2802
      %v2824 = vpop.f32.mrf.mxu0
      %v2825 = vadd.f32 0.0, %v2824
      %2826 = vdwg.mxu0
      %v2827 = vmul.f32 %v2825, 0.5
      %v2828 = vsel %vm1569, %v2827, -inf
      %2829 = vmax.xlane.f32.xlu0 %v2828
      %v2830 = vpop.xlane.xlu0 %2829
      %v2831 = vsub.f32 %v2827, %v2830
      %v2832 = vmul.f32 %v2831, 1.442695
      %v2833 = vpow.pop %v2832
      %v2834 = vsel %vm1569, %v2833, 0.0
      %2835 = vadd.xlane.f32.xlu0 %v2834
      %v2836 = vpop.xlane.xlu0 %2835
      %v2837 = vrcp.pop %v2836
      %v2838 = vmul.f32 %v2833, %v2837
      %v2840 = vsel %vm1569, %v2838, 0
      %2842 = vmatpush.msra.mxu0 0.0
      %2843 = vmatpush.msra.mxu0 0.0
      %2844 = vmatpush.msra.mxu0 0.0
      %2845 = vmatpush.msra.mxu0 0.0
      %2846 = vmatpush.msra.mxu0 0.0
      %2847 = vmatpush.msra.mxu0 0.0
      %2848 = vmatpush.msra.mxu0 0.0
      %2849 = vmatpush.msra.mxu0 0.0
      %2850 = vmatpush.msra.mxu0 0.0
      %2851 = vmatpush.msra.mxu0 0.0
      %2852 = vmatpush.msra.mxu0 0.0
      %2853 = vmatpush.msra.mxu0 0.0
      %2854 = vmatpush.msra.mxu0 0.0
      %2855 = vmatpush.msra.mxu0 0.0
      %2856 = vmatpush.msra.mxu0 0.0
      %2857 = vmatpush.msra.mxu0 %v2799
      %2858 = vmatmul.f32.gmra.mxu0 %v2840
      %v2859 = vpop.f32.mrf.mxu0
      %v2860 = vadd.f32 0.0, %v2859
      %2861 = vdwg.mxu0
      %s2862 = scalar_lea.vmem %s29, 28
      %v2863 = vld [vmem:[%s2862] sm:$0xf]
      %v2865 = vsel %vm1541, %v2860, 0
      %v2868 = vsel %vm1761, %v2863, 0
      %2870 = vmatpush.msra.mxu0 0.0
      %2871 = vmatpush.msra.mxu0 0.0
      %2872 = vmatpush.msra.mxu0 0.0
      %2873 = vmatpush.msra.mxu0 0.0
      %2874 = vmatpush.msra.mxu0 0.0
      %2875 = vmatpush.msra.mxu0 0.0
      %2876 = vmatpush.msra.mxu0 0.0
      %2877 = vmatpush.msra.mxu0 0.0
      %2878 = vmatpush.msra.mxu0 0.0
      %2879 = vmatpush.msra.mxu0 0.0
      %2880 = vmatpush.msra.mxu0 0.0
      %2881 = vmatpush.msra.mxu0 0.0
      %2882 = vmatpush.msra.mxu0 0.0
      %2883 = vmatpush.msra.mxu0 0.0
      %2884 = vmatpush.msra.mxu0 0.0
      %2885 = vmatpush.msra.mxu0 %v2868
      %2886 = vmatmul.f32.gmra.mxu0 %v2865
      %v2887 = vpop.f32.mrf.mxu0
      %v2888 = vadd.f32 0.0, %v2887
      %2889 = vdwg.mxu0
      %v2890 = vadd.f32 %v2710, %v2888
      %v2891 = vld [vmem:[%s31] sm:$0x1]
      %v2893 = vperm.slane %v2891, 0
      %v2895 = vadd.f32 %v2890, %v2893
      %v2896 = vadd.f32 %v1453, %v2895
      %v2897 = vld [vmem:[%s33] sm:$0x1]
      %v2898 = vld [vmem:[%s35] sm:$0x1]
      %v2899 = vsel %vm1036, %v2896, 0.0
      %2900 = vadd.xlane.f32.xlu0 %v2899
      %v2901 = vpop.xlane.xlu0 %2900
      %v2902 = vmul.f32 %v2901, %v1071
      %v2903 = vsub.f32 %v2896, %v2902
      %v2904 = vmul.f32 %v2903, %v2903
      %v2905 = vsel %vm1036, %v2904, 0.0
      %2906 = vadd.xlane.f32.xlu0 %v2905
      %v2907 = vpop.xlane.xlu0 %2906
      %v2908 = vmul.f32 %v2907, %v1071
      %v2909 = vadd.f32 %v2908, 1e-05
      %v2910 = vrsqrt.pop %v2909
      %v2911 = vmul.f32 %v2910, %v2909
      %v2912 = vmul.f32 %v2911, %v2910
      %v2913 = vmul.f32 0.5, %v2912
      %v2914 = vsub.f32 1.5, %v2913
      %v2915 = vmul.f32 %v2910, %v2914
      %vm2916 = vweird.f32 %v2909
      %vm2917 = vweird.f32 %v2910
      %vm2918 = vmor %vm2916, %vm2917
      %v2919 = vsel %vm2918, %v2910, %v2915
      %v2920 = vmul.f32 %v2903, %v2919
      %v2922 = vperm.slane %v2897, 0
      %v2924 = vmul.f32 %v2920, %v2922
      %v2926 = vperm.slane %v2898, 0
      %v2928 = vadd.f32 %v2924, %v2926
      %v2929 = vpack.c.bf16 %v2928, %v2928
      %v2930 = vld [vmem:[%s37] sm:$0xff]
      %v2931 = vld [vmem:[%s37 + $0x8] sm:$0xff]
      %v2932 = vld [vmem:[%s37 + $0x10] sm:$0xff]
      %v2933 = vld [vmem:[%s37 + $0x18] sm:$0xff]
      %v2934 = vld [vmem:[%s37 + $0x20] sm:$0xff]
      %v2935 = vld [vmem:[%s37 + $0x28] sm:$0xff]
      %v2936 = vld [vmem:[%s37 + $0x30] sm:$0xff]
      %v2937 = vld [vmem:[%s37 + $0x38] sm:$0xff]
      %v2938 = vld [vmem:[%s37 + $0x40] sm:$0xff]
      %v2939 = vld [vmem:[%s37 + $0x48] sm:$0xff]
      %v2940 = vld [vmem:[%s37 + $0x50] sm:$0xff]
      %v2941 = vld [vmem:[%s37 + $0x58] sm:$0xff]
      %v2942 = vld [vmem:[%s37 + $0x60] sm:$0xff]
      %v2943 = vld [vmem:[%s37 + $0x68] sm:$0xff]
      %v2944 = vld [vmem:[%s37 + $0x70] sm:$0xff]
      %v2945 = vld [vmem:[%s37 + $0x78] sm:$0xff]
      %v2946 = vld [vmem:[%s37 + $0x80] sm:$0xff]
      %v2947 = vld [vmem:[%s37 + $0x88] sm:$0xff]
      %v2948 = vld [vmem:[%s37 + $0x90] sm:$0xff]
      %v2949 = vld [vmem:[%s37 + $0x98] sm:$0xff]
      %v2950 = vld [vmem:[%s37 + $0xa0] sm:$0xff]
      %v2951 = vld [vmem:[%s37 + $0xa8] sm:$0xff]
      %v2952 = vld [vmem:[%s37 + $0xb0] sm:$0xff]
      %v2953 = vld [vmem:[%s37 + $0xb8] sm:$0xff]
      %v2954 = vld [vmem:[%s37 + $0xc0] sm:$0xff]
      %v2955 = vld [vmem:[%s37 + $0xc8] sm:$0xff]
      %v2956 = vld [vmem:[%s37 + $0xd0] sm:$0xff]
      %v2957 = vld [vmem:[%s37 + $0xd8] sm:$0xff]
      %v2958 = vld [vmem:[%s37 + $0xe0] sm:$0xff]
      %v2959 = vld [vmem:[%s37 + $0xe8] sm:$0xff]
      %v2960 = vld [vmem:[%s37 + $0xf0] sm:$0xff]
      %v2961 = vld [vmem:[%s37 + $0xf8] sm:$0xff]
      %v2962 = vld [vmem:[%s39] sm:$0xff]
      %v2963 = vld [vmem:[%s39 + $0x8] sm:$0xff]
      %v2966 = vperm.slane %v2962, 0
      %v2967 = vperm.slane %v2962, 1
      %v2968 = vperm.slane %v2962, 2
      %v2969 = vperm.slane %v2962, 3
      %v2970 = vperm.slane %v2962, 4
      %v2971 = vperm.slane %v2962, 5
      %v2972 = vperm.slane %v2962, 6
      %v2973 = vperm.slane %v2962, 7
      %v2974 = vperm.slane %v2963, 0
      %v2975 = vperm.slane %v2963, 1
      %v2976 = vperm.slane %v2963, 2
      %v2977 = vperm.slane %v2963, 3
      %v2978 = vperm.slane %v2963, 4
      %v2979 = vperm.slane %v2963, 5
      %v2980 = vperm.slane %v2963, 6
      %v2981 = vperm.slane %v2963, 7
      %v3030 = vunpack.c.l.b16 %v2930
      %v3031 = vunpack.c.h.b16 %v2930
      %v3032 = vunpack.c.l.b16 %v2931
      %v3033 = vunpack.c.h.b16 %v2931
      %v3034 = vunpack.c.l.b16 %v2932
      %v3035 = vunpack.c.h.b16 %v2932
      %v3036 = vunpack.c.l.b16 %v2933
      %v3037 = vunpack.c.h.b16 %v2933
      %v3038 = vunpack.c.l.b16 %v2934
      %v3039 = vunpack.c.h.b16 %v2934
      %v3040 = vunpack.c.l.b16 %v2935
      %v3041 = vunpack.c.h.b16 %v2935
      %v3042 = vunpack.c.l.b16 %v2936
      %v3043 = vunpack.c.h.b16 %v2936
      %v3044 = vunpack.c.l.b16 %v2937
      %v3045 = vunpack.c.h.b16 %v2937
      %v3046 = vunpack.c.l.b16 %v2938
      %v3047 = vunpack.c.h.b16 %v2938
      %v3048 = vunpack.c.l.b16 %v2939
      %v3049 = vunpack.c.h.b16 %v2939
      %v3050 = vunpack.c.l.b16 %v2940
      %v3051 = vunpack.c.h.b16 %v2940
      %v3052 = vunpack.c.l.b16 %v2941
      %v3053 = vunpack.c.h.b16 %v2941
      %v3054 = vunpack.c.l.b16 %v2942
      %v3055 = vunpack.c.h.b16 %v2942
      %v3056 = vunpack.c.l.b16 %v2943
      %v3057 = vunpack.c.h.b16 %v2943
      %v3058 = vunpack.c.l.b16 %v2944
      %v3059 = vunpack.c.h.b16 %v2944
      %v3060 = vunpack.c.l.b16 %v2945
      %v3061 = vunpack.c.h.b16 %v2945
      %v3062 = vunpack.c.l.b16 %v2946
      %v3063 = vunpack.c.h.b16 %v2946
      %v3064 = vunpack.c.l.b16 %v2947
      %v3065 = vunpack.c.h.b16 %v2947
      %v3066 = vunpack.c.l.b16 %v2948
      %v3067 = vunpack.c.h.b16 %v2948
      %v3068 = vunpack.c.l.b16 %v2949
      %v3069 = vunpack.c.h.b16 %v2949
      %v3070 = vunpack.c.l.b16 %v2950
      %v3071 = vunpack.c.h.b16 %v2950
      %v3072 = vunpack.c.l.b16 %v2951
      %v3073 = vunpack.c.h.b16 %v2951
      %v3074 = vunpack.c.l.b16 %v2952
      %v3075 = vunpack.c.h.b16 %v2952
      %v3076 = vunpack.c.l.b16 %v2953
      %v3077 = vunpack.c.h.b16 %v2953
      %v3078 = vunpack.c.l.b16 %v2954
      %v3079 = vunpack.c.h.b16 %v2954
      %v3080 = vunpack.c.l.b16 %v2955
      %v3081 = vunpack.c.h.b16 %v2955
      %v3082 = vunpack.c.l.b16 %v2956
      %v3083 = vunpack.c.h.b16 %v2956
      %v3084 = vunpack.c.l.b16 %v2957
      %v3085 = vunpack.c.h.b16 %v2957
      %v3086 = vunpack.c.l.b16 %v2958
      %v3087 = vunpack.c.h.b16 %v2958
      %v3088 = vunpack.c.l.b16 %v2959
      %v3089 = vunpack.c.h.b16 %v2959
      %v3090 = vunpack.c.l.b16 %v2960
      %v3091 = vunpack.c.h.b16 %v2960
      %v3092 = vunpack.c.l.b16 %v2961
      %v3093 = vunpack.c.h.b16 %v2961
      %v3094 = vpack.c.b16 %v3046, %v3030
      %v3095 = vpack.c.b16 %v3047, %v3031
      %v3096 = vpack.c.b16 %v3048, %v3032
      %v3097 = vpack.c.b16 %v3049, %v3033
      %v3098 = vpack.c.b16 %v3050, %v3034
      %v3099 = vpack.c.b16 %v3051, %v3035
      %v3100 = vpack.c.b16 %v3052, %v3036
      %v3101 = vpack.c.b16 %v3053, %v3037
      %v3102 = vpack.c.b16 %v3054, %v3038
      %v3103 = vpack.c.b16 %v3055, %v3039
      %v3104 = vpack.c.b16 %v3056, %v3040
      %v3105 = vpack.c.b16 %v3057, %v3041
      %v3106 = vpack.c.b16 %v3058, %v3042
      %v3107 = vpack.c.b16 %v3059, %v3043
      %v3108 = vpack.c.b16 %v3060, %v3044
      %v3109 = vpack.c.b16 %v3061, %v3045
      %v3110 = vpack.c.b16 %v3078, %v3062
      %v3111 = vpack.c.b16 %v3079, %v3063
      %v3112 = vpack.c.b16 %v3080, %v3064
      %v3113 = vpack.c.b16 %v3081, %v3065
      %v3114 = vpack.c.b16 %v3082, %v3066
      %v3115 = vpack.c.b16 %v3083, %v3067
      %v3116 = vpack.c.b16 %v3084, %v3068
      %v3117 = vpack.c.b16 %v3085, %v3069
      %v3118 = vpack.c.b16 %v3086, %v3070
      %v3119 = vpack.c.b16 %v3087, %v3071
      %v3120 = vpack.c.b16 %v3088, %v3072
      %v3121 = vpack.c.b16 %v3089, %v3073
      %v3122 = vpack.c.b16 %v3090, %v3074
      %v3123 = vpack.c.b16 %v3091, %v3075
      %v3124 = vpack.c.b16 %v3092, %v3076
      %v3125 = vpack.c.b16 %v3093, %v3077
      %v3159 = vsel %vm1036, %v2929, 0
      %3161 = vmatpush.bf16.msra.mxu0 0
      %3162 = vmatpush.bf16.msra.mxu0 0
      %3163 = vmatpush.bf16.msra.mxu0 0
      %3164 = vmatpush.bf16.msra.mxu0 0
      %3165 = vmatpush.bf16.msra.mxu0 0
      %3166 = vmatpush.bf16.msra.mxu0 0
      %3167 = vmatpush.bf16.msra.mxu0 %v3110
      %3168 = vmatpush.bf16.msra.mxu0 %v3094
      %3169 = vmatmul.bf16.gmra.mxu0 %v3159
      %v3170 = vpop.f32.mrf.mxu0
      %v3171 = vadd.f32 %v2966, %v3170
      %v3172 = vpop.f32.mrf.mxu0
      %3173 = vdwg.mxu0
      %3174 = vmatpush.bf16.msra.mxu0 0
      %3175 = vmatpush.bf16.msra.mxu0 0
      %3176 = vmatpush.bf16.msra.mxu0 0
      %3177 = vmatpush.bf16.msra.mxu0 0
      %3178 = vmatpush.bf16.msra.mxu0 0
      %3179 = vmatpush.bf16.msra.mxu0 0
      %3180 = vmatpush.bf16.msra.mxu0 %v3111
      %3181 = vmatpush.bf16.msra.mxu0 %v3095
      %3182 = vmatmul.bf16.gmra.mxu0 %v3159
      %v3183 = vpop.f32.mrf.mxu0
      %v3184 = vadd.f32 %v2967, %v3183
      %v3185 = vpop.f32.mrf.mxu0
      %3186 = vdwg.mxu0
      %3187 = vmatpush.bf16.msra.mxu0 0
      %3188 = vmatpush.bf16.msra.mxu0 0
      %3189 = vmatpush.bf16.msra.mxu0 0
      %3190 = vmatpush.bf16.msra.mxu0 0
      %3191 = vmatpush.bf16.msra.mxu0 0
      %3192 = vmatpush.bf16.msra.mxu0 0
      %3193 = vmatpush.bf16.msra.mxu0 %v3112
      %3194 = vmatpush.bf16.msra.mxu0 %v3096
      %3195 = vmatmul.bf16.gmra.mxu0 %v3159
      %v3196 = vpop.f32.mrf.mxu0
      %v3197 = vadd.f32 %v2968, %v3196
      %v3198 = vpop.f32.mrf.mxu0
      %3199 = vdwg.mxu0
      %3200 = vmatpush.bf16.msra.mxu0 0
      %3201 = vmatpush.bf16.msra.mxu0 0
      %3202 = vmatpush.bf16.msra.mxu0 0
      %3203 = vmatpush.bf16.msra.mxu0 0
      %3204 = vmatpush.bf16.msra.mxu0 0
      %3205 = vmatpush.bf16.msra.mxu0 0
      %3206 = vmatpush.bf16.msra.mxu0 %v3113
      %3207 = vmatpush.bf16.msra.mxu0 %v3097
      %3208 = vmatmul.bf16.gmra.mxu0 %v3159
      %v3209 = vpop.f32.mrf.mxu0
      %v3210 = vadd.f32 %v2969, %v3209
      %v3211 = vpop.f32.mrf.mxu0
      %3212 = vdwg.mxu0
      %3213 = vmatpush.bf16.msra.mxu0 0
      %3214 = vmatpush.bf16.msra.mxu0 0
      %3215 = vmatpush.bf16.msra.mxu0 0
      %3216 = vmatpush.bf16.msra.mxu0 0
      %3217 = vmatpush.bf16.msra.mxu0 0
      %3218 = vmatpush.bf16.msra.mxu0 0
      %3219 = vmatpush.bf16.msra.mxu0 %v3114
      %3220 = vmatpush.bf16.msra.mxu0 %v3098
      %3221 = vmatmul.bf16.gmra.mxu0 %v3159
      %v3222 = vpop.f32.mrf.mxu0
      %v3223 = vadd.f32 %v2970, %v3222
      %v3224 = vpop.f32.mrf.mxu0
      %3225 = vdwg.mxu0
      %3226 = vmatpush.bf16.msra.mxu0 0
      %3227 = vmatpush.bf16.msra.mxu0 0
      %3228 = vmatpush.bf16.msra.mxu0 0
      %3229 = vmatpush.bf16.msra.mxu0 0
      %3230 = vmatpush.bf16.msra.mxu0 0
      %3231 = vmatpush.bf16.msra.mxu0 0
      %3232 = vmatpush.bf16.msra.mxu0 %v3115
      %3233 = vmatpush.bf16.msra.mxu0 %v3099
      %3234 = vmatmul.bf16.gmra.mxu0 %v3159
      %v3235 = vpop.f32.mrf.mxu0
      %v3236 = vadd.f32 %v2971, %v3235
      %v3237 = vpop.f32.mrf.mxu0
      %3238 = vdwg.mxu0
      %3239 = vmatpush.bf16.msra.mxu0 0
      %3240 = vmatpush.bf16.msra.mxu0 0
      %3241 = vmatpush.bf16.msra.mxu0 0
      %3242 = vmatpush.bf16.msra.mxu0 0
      %3243 = vmatpush.bf16.msra.mxu0 0
      %3244 = vmatpush.bf16.msra.mxu0 0
      %3245 = vmatpush.bf16.msra.mxu0 %v3116
      %3246 = vmatpush.bf16.msra.mxu0 %v3100
      %3247 = vmatmul.bf16.gmra.mxu0 %v3159
      %v3248 = vpop.f32.mrf.mxu0
      %v3249 = vadd.f32 %v2972, %v3248
      %v3250 = vpop.f32.mrf.mxu0
      %3251 = vdwg.mxu0
      %3252 = vmatpush.bf16.msra.mxu0 0
      %3253 = vmatpush.bf16.msra.mxu0 0
      %3254 = vmatpush.bf16.msra.mxu0 0
      %3255 = vmatpush.bf16.msra.mxu0 0
      %3256 = vmatpush.bf16.msra.mxu0 0
      %3257 = vmatpush.bf16.msra.mxu0 0
      %3258 = vmatpush.bf16.msra.mxu0 %v3117
      %3259 = vmatpush.bf16.msra.mxu0 %v3101
      %3260 = vmatmul.bf16.gmra.mxu0 %v3159
      %v3261 = vpop.f32.mrf.mxu0
      %v3262 = vadd.f32 %v2973, %v3261
      %v3263 = vpop.f32.mrf.mxu0
      %3264 = vdwg.mxu0
      %3265 = vmatpush.bf16.msra.mxu0 0
      %3266 = vmatpush.bf16.msra.mxu0 0
      %3267 = vmatpush.bf16.msra.mxu0 0
      %3268 = vmatpush.bf16.msra.mxu0 0
      %3269 = vmatpush.bf16.msra.mxu0 0
      %3270 = vmatpush.bf16.msra.mxu0 0
      %3271 = vmatpush.bf16.msra.mxu0 %v3118
      %3272 = vmatpush.bf16.msra.mxu0 %v3102
      %3273 = vmatmul.bf16.gmra.mxu0 %v3159
      %v3274 = vpop.f32.mrf.mxu0
      %v3275 = vadd.f32 %v2974, %v3274
      %v3276 = vpop.f32.mrf.mxu0
      %3277 = vdwg.mxu0
      %3278 = vmatpush.bf16.msra.mxu0 0
      %3279 = vmatpush.bf16.msra.mxu0 0
      %3280 = vmatpush.bf16.msra.mxu0 0
      %3281 = vmatpush.bf16.msra.mxu0 0
      %3282 = vmatpush.bf16.msra.mxu0 0
      %3283 = vmatpush.bf16.msra.mxu0 0
      %3284 = vmatpush.bf16.msra.mxu0 %v3119
      %3285 = vmatpush.bf16.msra.mxu0 %v3103
      %3286 = vmatmul.bf16.gmra.mxu0 %v3159
      %v3287 = vpop.f32.mrf.mxu0
      %v3288 = vadd.f32 %v2975, %v3287
      %v3289 = vpop.f32.mrf.mxu0
      %3290 = vdwg.mxu0
      %3291 = vmatpush.bf16.msra.mxu0 0
      %3292 = vmatpush.bf16.msra.mxu0 0
      %3293 = vmatpush.bf16.msra.mxu0 0
      %3294 = vmatpush.bf16.msra.mxu0 0
      %3295 = vmatpush.bf16.msra.mxu0 0
      %3296 = vmatpush.bf16.msra.mxu0 0
      %3297 = vmatpush.bf16.msra.mxu0 %v3120
      %3298 = vmatpush.bf16.msra.mxu0 %v3104
      %3299 = vmatmul.bf16.gmra.mxu0 %v3159
      %v3300 = vpop.f32.mrf.mxu0
      %v3301 = vadd.f32 %v2976, %v3300
      %v3302 = vpop.f32.mrf.mxu0
      %3303 = vdwg.mxu0
      %3304 = vmatpush.bf16.msra.mxu0 0
      %3305 = vmatpush.bf16.msra.mxu0 0
      %3306 = vmatpush.bf16.msra.mxu0 0
      %3307 = vmatpush.bf16.msra.mxu0 0
      %3308 = vmatpush.bf16.msra.mxu0 0
      %3309 = vmatpush.bf16.msra.mxu0 0
      %3310 = vmatpush.bf16.msra.mxu0 %v3121
      %3311 = vmatpush.bf16.msra.mxu0 %v3105
      %3312 = vmatmul.bf16.gmra.mxu0 %v3159
      %v3313 = vpop.f32.mrf.mxu0
      %v3314 = vadd.f32 %v2977, %v3313
      %v3315 = vpop.f32.mrf.mxu0
      %3316 = vdwg.mxu0
      %3317 = vmatpush.bf16.msra.mxu0 0
      %3318 = vmatpush.bf16.msra.mxu0 0
      %3319 = vmatpush.bf16.msra.mxu0 0
      %3320 = vmatpush.bf16.msra.mxu0 0
      %3321 = vmatpush.bf16.msra.mxu0 0
      %3322 = vmatpush.bf16.msra.mxu0 0
      %3323 = vmatpush.bf16.msra.mxu0 %v3122
      %3324 = vmatpush.bf16.msra.mxu0 %v3106
      %3325 = vmatmul.bf16.gmra.mxu0 %v3159
      %v3326 = vpop.f32.mrf.mxu0
      %v3327 = vadd.f32 %v2978, %v3326
      %v3328 = vpop.f32.mrf.mxu0
      %3329 = vdwg.mxu0
      %3330 = vmatpush.bf16.msra.mxu0 0
      %3331 = vmatpush.bf16.msra.mxu0 0
      %3332 = vmatpush.bf16.msra.mxu0 0
      %3333 = vmatpush.bf16.msra.mxu0 0
      %3334 = vmatpush.bf16.msra.mxu0 0
      %3335 = vmatpush.bf16.msra.mxu0 0
      %3336 = vmatpush.bf16.msra.mxu0 %v3123
      %3337 = vmatpush.bf16.msra.mxu0 %v3107
      %3338 = vmatmul.bf16.gmra.mxu0 %v3159
      %v3339 = vpop.f32.mrf.mxu0
      %v3340 = vadd.f32 %v2979, %v3339
      %v3341 = vpop.f32.mrf.mxu0
      %3342 = vdwg.mxu0
      %3343 = vmatpush.bf16.msra.mxu0 0
      %3344 = vmatpush.bf16.msra.mxu0 0
      %3345 = vmatpush.bf16.msra.mxu0 0
      %3346 = vmatpush.bf16.msra.mxu0 0
      %3347 = vmatpush.bf16.msra.mxu0 0
      %3348 = vmatpush.bf16.msra.mxu0 0
      %3349 = vmatpush.bf16.msra.mxu0 %v3124
      %3350 = vmatpush.bf16.msra.mxu0 %v3108
      %3351 = vmatmul.bf16.gmra.mxu0 %v3159
      %v3352 = vpop.f32.mrf.mxu0
      %v3353 = vadd.f32 %v2980, %v3352
      %v3354 = vpop.f32.mrf.mxu0
      %3355 = vdwg.mxu0
      %3356 = vmatpush.bf16.msra.mxu0 0
      %3357 = vmatpush.bf16.msra.mxu0 0
      %3358 = vmatpush.bf16.msra.mxu0 0
      %3359 = vmatpush.bf16.msra.mxu0 0
      %3360 = vmatpush.bf16.msra.mxu0 0
      %3361 = vmatpush.bf16.msra.mxu0 0
      %3362 = vmatpush.bf16.msra.mxu0 %v3125
      %3363 = vmatpush.bf16.msra.mxu0 %v3109
      %3364 = vmatmul.bf16.gmra.mxu0 %v3159
      %v3365 = vpop.f32.mrf.mxu0
      %v3366 = vadd.f32 %v2981, %v3365
      %v3367 = vpop.f32.mrf.mxu0
      %3368 = vdwg.mxu0
      %v3369 = vmax.f32 %v3171, 0.0
      %v3370 = vmax.f32 %v3184, 0.0
      %v3371 = vmax.f32 %v3197, 0.0
      %v3372 = vmax.f32 %v3210, 0.0
      %v3373 = vmax.f32 %v3223, 0.0
      %v3374 = vmax.f32 %v3236, 0.0
      %v3375 = vmax.f32 %v3249, 0.0
      %v3376 = vmax.f32 %v3262, 0.0
      %v3377 = vmax.f32 %v3275, 0.0
      %v3378 = vmax.f32 %v3288, 0.0
      %v3379 = vmax.f32 %v3301, 0.0
      %v3380 = vmax.f32 %v3314, 0.0
      %v3381 = vmax.f32 %v3327, 0.0
      %v3382 = vmax.f32 %v3340, 0.0
      %v3383 = vmax.f32 %v3353, 0.0
      %v3384 = vmax.f32 %v3366, 0.0
      %v3385 = vpack.c.bf16 %v3369, %v3369
      %v3386 = vpack.c.bf16 %v3370, %v3370
      %v3387 = vpack.c.bf16 %v3371, %v3371
      %v3388 = vpack.c.bf16 %v3372, %v3372
      %v3389 = vpack.c.bf16 %v3373, %v3373
      %v3390 = vpack.c.bf16 %v3374, %v3374
      %v3391 = vpack.c.bf16 %v3375, %v3375
      %v3392 = vpack.c.bf16 %v3376, %v3376
      %v3393 = vpack.c.bf16 %v3377, %v3377
      %v3394 = vpack.c.bf16 %v3378, %v3378
      %v3395 = vpack.c.bf16 %v3379, %v3379
      %v3396 = vpack.c.bf16 %v3380, %v3380
      %v3397 = vpack.c.bf16 %v3381, %v3381
      %v3398 = vpack.c.bf16 %v3382, %v3382
      %v3399 = vpack.c.bf16 %v3383, %v3383
      %v3400 = vpack.c.bf16 %v3384, %v3384
      %v3401 = vld [vmem:[%s41] sm:$0xf]
      %v3402 = vld [vmem:[%s41 + $0x4] sm:$0xf]
      %v3403 = vld [vmem:[%s41 + $0x8] sm:$0xf]
      %v3404 = vld [vmem:[%s41 + $0xc] sm:$0xf]
      %v3405 = vld [vmem:[%s41 + $0x10] sm:$0xf]
      %v3406 = vld [vmem:[%s41 + $0x14] sm:$0xf]
      %v3407 = vld [vmem:[%s41 + $0x18] sm:$0xf]
      %v3408 = vld [vmem:[%s41 + $0x1c] sm:$0xf]
      %v3409 = vld [vmem:[%s41 + $0x20] sm:$0xf]
      %v3410 = vld [vmem:[%s41 + $0x24] sm:$0xf]
      %v3411 = vld [vmem:[%s41 + $0x28] sm:$0xf]
      %v3412 = vld [vmem:[%s41 + $0x2c] sm:$0xf]
      %v3413 = vld [vmem:[%s41 + $0x30] sm:$0xf]
      %v3414 = vld [vmem:[%s41 + $0x34] sm:$0xf]
      %v3415 = vld [vmem:[%s41 + $0x38] sm:$0xf]
      %v3416 = vld [vmem:[%s41 + $0x3c] sm:$0xf]
      %v3417 = vld [vmem:[%s41 + $0x40] sm:$0xf]
      %v3418 = vld [vmem:[%s41 + $0x44] sm:$0xf]
      %v3419 = vld [vmem:[%s41 + $0x48] sm:$0xf]
      %v3420 = vld [vmem:[%s41 + $0x4c] sm:$0xf]
      %v3421 = vld [vmem:[%s41 + $0x50] sm:$0xf]
      %v3422 = vld [vmem:[%s41 + $0x54] sm:$0xf]
      %v3423 = vld [vmem:[%s41 + $0x58] sm:$0xf]
      %v3424 = vld [vmem:[%s41 + $0x5c] sm:$0xf]
      %v3425 = vld [vmem:[%s41 + $0x60] sm:$0xf]
      %v3426 = vld [vmem:[%s41 + $0x64] sm:$0xf]
      %v3427 = vld [vmem:[%s41 + $0x68] sm:$0xf]
      %v3428 = vld [vmem:[%s41 + $0x6c] sm:$0xf]
      %v3429 = vld [vmem:[%s41 + $0x70] sm:$0xf]
      %v3430 = vld [vmem:[%s41 + $0x74] sm:$0xf]
      %v3431 = vld [vmem:[%s41 + $0x78] sm:$0xf]
      %v3432 = vld [vmem:[%s41 + $0x7c] sm:$0xf]
      %v3433 = vld [vmem:[%s41 + $0x80] sm:$0xf]
      %v3434 = vld [vmem:[%s41 + $0x84] sm:$0xf]
      %v3435 = vld [vmem:[%s41 + $0x88] sm:$0xf]
      %v3436 = vld [vmem:[%s41 + $0x8c] sm:$0xf]
      %v3437 = vld [vmem:[%s41 + $0x90] sm:$0xf]
      %v3438 = vld [vmem:[%s41 + $0x94] sm:$0xf]
      %v3439 = vld [vmem:[%s41 + $0x98] sm:$0xf]
      %v3440 = vld [vmem:[%s41 + $0x9c] sm:$0xf]
      %v3441 = vld [vmem:[%s41 + $0xa0] sm:$0xf]
      %v3442 = vld [vmem:[%s41 + $0xa4] sm:$0xf]
      %v3443 = vld [vmem:[%s41 + $0xa8] sm:$0xf]
      %v3444 = vld [vmem:[%s41 + $0xac] sm:$0xf]
      %v3445 = vld [vmem:[%s41 + $0xb0] sm:$0xf]
      %v3446 = vld [vmem:[%s41 + $0xb4] sm:$0xf]
      %v3447 = vld [vmem:[%s41 + $0xb8] sm:$0xf]
      %v3448 = vld [vmem:[%s41 + $0xbc] sm:$0xf]
      %v3449 = vld [vmem:[%s41 + $0xc0] sm:$0xf]
      %v3450 = vld [vmem:[%s41 + $0xc4] sm:$0xf]
      %v3451 = vld [vmem:[%s41 + $0xc8] sm:$0xf]
      %v3452 = vld [vmem:[%s41 + $0xcc] sm:$0xf]
      %v3453 = vld [vmem:[%s41 + $0xd0] sm:$0xf]
      %v3454 = vld [vmem:[%s41 + $0xd4] sm:$0xf]
      %v3455 = vld [vmem:[%s41 + $0xd8] sm:$0xf]
      %v3456 = vld [vmem:[%s41 + $0xdc] sm:$0xf]
      %v3457 = vld [vmem:[%s41 + $0xe0] sm:$0xf]
      %v3458 = vld [vmem:[%s41 + $0xe4] sm:$0xf]
      %v3459 = vld [vmem:[%s41 + $0xe8] sm:$0xf]
      %v3460 = vld [vmem:[%s41 + $0xec] sm:$0xf]
      %v3461 = vld [vmem:[%s41 + $0xf0] sm:$0xf]
      %v3462 = vld [vmem:[%s41 + $0xf4] sm:$0xf]
      %v3463 = vld [vmem:[%s41 + $0xf8] sm:$0xf]
      %v3464 = vld [vmem:[%s41 + $0xfc] sm:$0xf]
      %v3465 = vld [vmem:[%s41 + $0x100] sm:$0xf]
      %v3466 = vld [vmem:[%s41 + $0x104] sm:$0xf]
      %v3467 = vld [vmem:[%s41 + $0x108] sm:$0xf]
      %v3468 = vld [vmem:[%s41 + $0x10c] sm:$0xf]
      %v3469 = vld [vmem:[%s41 + $0x110] sm:$0xf]
      %v3470 = vld [vmem:[%s41 + $0x114] sm:$0xf]
      %v3471 = vld [vmem:[%s41 + $0x118] sm:$0xf]
      %v3472 = vld [vmem:[%s41 + $0x11c] sm:$0xf]
      %v3473 = vld [vmem:[%s41 + $0x120] sm:$0xf]
      %v3474 = vld [vmem:[%s41 + $0x124] sm:$0xf]
      %v3475 = vld [vmem:[%s41 + $0x128] sm:$0xf]
      %v3476 = vld [vmem:[%s41 + $0x12c] sm:$0xf]
      %v3477 = vld [vmem:[%s41 + $0x130] sm:$0xf]
      %v3478 = vld [vmem:[%s41 + $0x134] sm:$0xf]
      %v3479 = vld [vmem:[%s41 + $0x138] sm:$0xf]
      %v3480 = vld [vmem:[%s41 + $0x13c] sm:$0xf]
      %v3481 = vld [vmem:[%s41 + $0x140] sm:$0xf]
      %v3482 = vld [vmem:[%s41 + $0x144] sm:$0xf]
      %v3483 = vld [vmem:[%s41 + $0x148] sm:$0xf]
      %v3484 = vld [vmem:[%s41 + $0x14c] sm:$0xf]
      %v3485 = vld [vmem:[%s41 + $0x150] sm:$0xf]
      %v3486 = vld [vmem:[%s41 + $0x154] sm:$0xf]
      %v3487 = vld [vmem:[%s41 + $0x158] sm:$0xf]
      %v3488 = vld [vmem:[%s41 + $0x15c] sm:$0xf]
      %v3489 = vld [vmem:[%s41 + $0x160] sm:$0xf]
      %v3490 = vld [vmem:[%s41 + $0x164] sm:$0xf]
      %v3491 = vld [vmem:[%s41 + $0x168] sm:$0xf]
      %v3492 = vld [vmem:[%s41 + $0x16c] sm:$0xf]
      %v3493 = vld [vmem:[%s41 + $0x170] sm:$0xf]
      %v3494 = vld [vmem:[%s41 + $0x174] sm:$0xf]
      %v3495 = vld [vmem:[%s41 + $0x178] sm:$0xf]
      %v3496 = vld [vmem:[%s41 + $0x17c] sm:$0xf]
      %v3497 = vld [vmem:[%s41 + $0x180] sm:$0xf]
      %v3498 = vld [vmem:[%s41 + $0x184] sm:$0xf]
      %v3499 = vld [vmem:[%s41 + $0x188] sm:$0xf]
      %v3500 = vld [vmem:[%s41 + $0x18c] sm:$0xf]
      %v3501 = vld [vmem:[%s41 + $0x190] sm:$0xf]
      %v3502 = vld [vmem:[%s41 + $0x194] sm:$0xf]
      %v3503 = vld [vmem:[%s41 + $0x198] sm:$0xf]
      %v3504 = vld [vmem:[%s41 + $0x19c] sm:$0xf]
      %v3505 = vld [vmem:[%s41 + $0x1a0] sm:$0xf]
      %v3506 = vld [vmem:[%s41 + $0x1a4] sm:$0xf]
      %v3507 = vld [vmem:[%s41 + $0x1a8] sm:$0xf]
      %v3508 = vld [vmem:[%s41 + $0x1ac] sm:$0xf]
      %v3509 = vld [vmem:[%s41 + $0x1b0] sm:$0xf]
      %v3510 = vld [vmem:[%s41 + $0x1b4] sm:$0xf]
      %v3511 = vld [vmem:[%s41 + $0x1b8] sm:$0xf]
      %v3512 = vld [vmem:[%s41 + $0x1bc] sm:$0xf]
      %v3513 = vld [vmem:[%s41 + $0x1c0] sm:$0xf]
      %v3514 = vld [vmem:[%s41 + $0x1c4] sm:$0xf]
      %v3515 = vld [vmem:[%s41 + $0x1c8] sm:$0xf]
      %v3516 = vld [vmem:[%s41 + $0x1cc] sm:$0xf]
      %v3517 = vld [vmem:[%s41 + $0x1d0] sm:$0xf]
      %v3518 = vld [vmem:[%s41 + $0x1d4] sm:$0xf]
      %v3519 = vld [vmem:[%s41 + $0x1d8] sm:$0xf]
      %v3520 = vld [vmem:[%s41 + $0x1dc] sm:$0xf]
      %v3521 = vld [vmem:[%s41 + $0x1e0] sm:$0xf]
      %v3522 = vld [vmem:[%s41 + $0x1e4] sm:$0xf]
      %v3523 = vld [vmem:[%s41 + $0x1e8] sm:$0xf]
      %v3524 = vld [vmem:[%s41 + $0x1ec] sm:$0xf]
      %v3525 = vld [vmem:[%s41 + $0x1f0] sm:$0xf]
      %v3526 = vld [vmem:[%s41 + $0x1f4] sm:$0xf]
      %v3527 = vld [vmem:[%s41 + $0x1f8] sm:$0xf]
      %v3528 = vld [vmem:[%s41 + $0x1fc] sm:$0xf]
      %v3529 = vld [vmem:[%s41 + $0x200] sm:$0xf]
      %v3530 = vld [vmem:[%s41 + $0x204] sm:$0xf]
      %v3531 = vld [vmem:[%s41 + $0x208] sm:$0xf]
      %v3532 = vld [vmem:[%s41 + $0x20c] sm:$0xf]
      %v3533 = vld [vmem:[%s41 + $0x210] sm:$0xf]
      %v3534 = vld [vmem:[%s41 + $0x214] sm:$0xf]
      %v3535 = vld [vmem:[%s41 + $0x218] sm:$0xf]
      %v3536 = vld [vmem:[%s41 + $0x21c] sm:$0xf]
      %v3537 = vld [vmem:[%s41 + $0x220] sm:$0xf]
      %v3538 = vld [vmem:[%s41 + $0x224] sm:$0xf]
      %v3539 = vld [vmem:[%s41 + $0x228] sm:$0xf]
      %v3540 = vld [vmem:[%s41 + $0x22c] sm:$0xf]
      %v3541 = vld [vmem:[%s41 + $0x230] sm:$0xf]
      %v3542 = vld [vmem:[%s41 + $0x234] sm:$0xf]
      %v3543 = vld [vmem:[%s41 + $0x238] sm:$0xf]
      %v3544 = vld [vmem:[%s41 + $0x23c] sm:$0xf]
      %v3545 = vld [vmem:[%s41 + $0x240] sm:$0xf]
      %v3546 = vld [vmem:[%s41 + $0x244] sm:$0xf]
      %v3547 = vld [vmem:[%s41 + $0x248] sm:$0xf]
      %v3548 = vld [vmem:[%s41 + $0x24c] sm:$0xf]
      %v3549 = vld [vmem:[%s41 + $0x250] sm:$0xf]
      %v3550 = vld [vmem:[%s41 + $0x254] sm:$0xf]
      %v3551 = vld [vmem:[%s41 + $0x258] sm:$0xf]
      %v3552 = vld [vmem:[%s41 + $0x25c] sm:$0xf]
      %v3553 = vld [vmem:[%s41 + $0x260] sm:$0xf]
      %v3554 = vld [vmem:[%s41 + $0x264] sm:$0xf]
      %v3555 = vld [vmem:[%s41 + $0x268] sm:$0xf]
      %v3556 = vld [vmem:[%s41 + $0x26c] sm:$0xf]
      %v3557 = vld [vmem:[%s41 + $0x270] sm:$0xf]
      %v3558 = vld [vmem:[%s41 + $0x274] sm:$0xf]
      %v3559 = vld [vmem:[%s41 + $0x278] sm:$0xf]
      %v3560 = vld [vmem:[%s41 + $0x27c] sm:$0xf]
      %v3561 = vld [vmem:[%s41 + $0x280] sm:$0xf]
      %v3562 = vld [vmem:[%s41 + $0x284] sm:$0xf]
      %v3563 = vld [vmem:[%s41 + $0x288] sm:$0xf]
      %v3564 = vld [vmem:[%s41 + $0x28c] sm:$0xf]
      %v3565 = vld [vmem:[%s41 + $0x290] sm:$0xf]
      %v3566 = vld [vmem:[%s41 + $0x294] sm:$0xf]
      %v3567 = vld [vmem:[%s41 + $0x298] sm:$0xf]
      %v3568 = vld [vmem:[%s41 + $0x29c] sm:$0xf]
      %v3569 = vld [vmem:[%s41 + $0x2a0] sm:$0xf]
      %v3570 = vld [vmem:[%s41 + $0x2a4] sm:$0xf]
      %v3571 = vld [vmem:[%s41 + $0x2a8] sm:$0xf]
      %v3572 = vld [vmem:[%s41 + $0x2ac] sm:$0xf]
      %v3573 = vld [vmem:[%s41 + $0x2b0] sm:$0xf]
      %v3574 = vld [vmem:[%s41 + $0x2b4] sm:$0xf]
      %v3575 = vld [vmem:[%s41 + $0x2b8] sm:$0xf]
      %v3576 = vld [vmem:[%s41 + $0x2bc] sm:$0xf]
      %v3577 = vld [vmem:[%s41 + $0x2c0] sm:$0xf]
      %v3578 = vld [vmem:[%s41 + $0x2c4] sm:$0xf]
      %v3579 = vld [vmem:[%s41 + $0x2c8] sm:$0xf]
      %v3580 = vld [vmem:[%s41 + $0x2cc] sm:$0xf]
      %v3581 = vld [vmem:[%s41 + $0x2d0] sm:$0xf]
      %v3582 = vld [vmem:[%s41 + $0x2d4] sm:$0xf]
      %v3583 = vld [vmem:[%s41 + $0x2d8] sm:$0xf]
      %v3584 = vld [vmem:[%s41 + $0x2dc] sm:$0xf]
      %v3585 = vld [vmem:[%s41 + $0x2e0] sm:$0xf]
      %v3586 = vld [vmem:[%s41 + $0x2e4] sm:$0xf]
      %v3587 = vld [vmem:[%s41 + $0x2e8] sm:$0xf]
      %v3588 = vld [vmem:[%s41 + $0x2ec] sm:$0xf]
      %v3589 = vld [vmem:[%s41 + $0x2f0] sm:$0xf]
      %v3590 = vld [vmem:[%s41 + $0x2f4] sm:$0xf]
      %v3591 = vld [vmem:[%s41 + $0x2f8] sm:$0xf]
      %v3592 = vld [vmem:[%s41 + $0x2fc] sm:$0xf]
      %v3593 = vld [vmem:[%s41 + $0x300] sm:$0xf]
      %v3594 = vld [vmem:[%s41 + $0x304] sm:$0xf]
      %v3595 = vld [vmem:[%s41 + $0x308] sm:$0xf]
      %v3596 = vld [vmem:[%s41 + $0x30c] sm:$0xf]
      %v3597 = vld [vmem:[%s41 + $0x310] sm:$0xf]
      %v3598 = vld [vmem:[%s41 + $0x314] sm:$0xf]
      %v3599 = vld [vmem:[%s41 + $0x318] sm:$0xf]
      %v3600 = vld [vmem:[%s41 + $0x31c] sm:$0xf]
      %v3601 = vld [vmem:[%s41 + $0x320] sm:$0xf]
      %v3602 = vld [vmem:[%s41 + $0x324] sm:$0xf]
      %v3603 = vld [vmem:[%s41 + $0x328] sm:$0xf]
      %v3604 = vld [vmem:[%s41 + $0x32c] sm:$0xf]
      %v3605 = vld [vmem:[%s41 + $0x330] sm:$0xf]
      %v3606 = vld [vmem:[%s41 + $0x334] sm:$0xf]
      %v3607 = vld [vmem:[%s41 + $0x338] sm:$0xf]
      %v3608 = vld [vmem:[%s41 + $0x33c] sm:$0xf]
      %v3609 = vld [vmem:[%s41 + $0x340] sm:$0xf]
      %v3610 = vld [vmem:[%s41 + $0x344] sm:$0xf]
      %v3611 = vld [vmem:[%s41 + $0x348] sm:$0xf]
      %v3612 = vld [vmem:[%s41 + $0x34c] sm:$0xf]
      %v3613 = vld [vmem:[%s41 + $0x350] sm:$0xf]
      %v3614 = vld [vmem:[%s41 + $0x354] sm:$0xf]
      %v3615 = vld [vmem:[%s41 + $0x358] sm:$0xf]
      %v3616 = vld [vmem:[%s41 + $0x35c] sm:$0xf]
      %v3617 = vld [vmem:[%s41 + $0x360] sm:$0xf]
      %v3618 = vld [vmem:[%s41 + $0x364] sm:$0xf]
      %v3619 = vld [vmem:[%s41 + $0x368] sm:$0xf]
      %v3620 = vld [vmem:[%s41 + $0x36c] sm:$0xf]
      %v3621 = vld [vmem:[%s41 + $0x370] sm:$0xf]
      %v3622 = vld [vmem:[%s41 + $0x374] sm:$0xf]
      %v3623 = vld [vmem:[%s41 + $0x378] sm:$0xf]
      %v3624 = vld [vmem:[%s41 + $0x37c] sm:$0xf]
      %v3625 = vld [vmem:[%s41 + $0x380] sm:$0xf]
      %v3626 = vld [vmem:[%s41 + $0x384] sm:$0xf]
      %v3627 = vld [vmem:[%s41 + $0x388] sm:$0xf]
      %v3628 = vld [vmem:[%s41 + $0x38c] sm:$0xf]
      %v3629 = vld [vmem:[%s41 + $0x390] sm:$0xf]
      %v3630 = vld [vmem:[%s41 + $0x394] sm:$0xf]
      %v3631 = vld [vmem:[%s41 + $0x398] sm:$0xf]
      %v3632 = vld [vmem:[%s41 + $0x39c] sm:$0xf]
      %v3633 = vld [vmem:[%s41 + $0x3a0] sm:$0xf]
      %v3634 = vld [vmem:[%s41 + $0x3a4] sm:$0xf]
      %v3635 = vld [vmem:[%s41 + $0x3a8] sm:$0xf]
      %v3636 = vld [vmem:[%s41 + $0x3ac] sm:$0xf]
      %v3637 = vld [vmem:[%s41 + $0x3b0] sm:$0xf]
      %v3638 = vld [vmem:[%s41 + $0x3b4] sm:$0xf]
      %v3639 = vld [vmem:[%s41 + $0x3b8] sm:$0xf]
      %v3640 = vld [vmem:[%s41 + $0x3bc] sm:$0xf]
      %v3641 = vld [vmem:[%s41 + $0x3c0] sm:$0xf]
      %v3642 = vld [vmem:[%s41 + $0x3c4] sm:$0xf]
      %v3643 = vld [vmem:[%s41 + $0x3c8] sm:$0xf]
      %v3644 = vld [vmem:[%s41 + $0x3cc] sm:$0xf]
      %v3645 = vld [vmem:[%s41 + $0x3d0] sm:$0xf]
      %v3646 = vld [vmem:[%s41 + $0x3d4] sm:$0xf]
      %v3647 = vld [vmem:[%s41 + $0x3d8] sm:$0xf]
      %v3648 = vld [vmem:[%s41 + $0x3dc] sm:$0xf]
      %v3649 = vld [vmem:[%s41 + $0x3e0] sm:$0xf]
      %v3650 = vld [vmem:[%s41 + $0x3e4] sm:$0xf]
      %v3651 = vld [vmem:[%s41 + $0x3e8] sm:$0xf]
      %v3652 = vld [vmem:[%s41 + $0x3ec] sm:$0xf]
      %v3653 = vld [vmem:[%s41 + $0x3f0] sm:$0xf]
      %v3654 = vld [vmem:[%s41 + $0x3f4] sm:$0xf]
      %v3655 = vld [vmem:[%s41 + $0x3f8] sm:$0xf]
      %v3656 = vld [vmem:[%s41 + $0x3fc] sm:$0xf]
      %v3657 = vld [vmem:[%s43] sm:$0x1]
      %v3659 = vperm.slane %v3657, 0
      %v3917 = vunpack.c.l.b16 %v3401
      %v3918 = vunpack.c.l.b16 %v3402
      %v3919 = vunpack.c.l.b16 %v3403
      %v3920 = vunpack.c.l.b16 %v3404
      %v3921 = vunpack.c.l.b16 %v3405
      %v3922 = vunpack.c.l.b16 %v3406
      %v3923 = vunpack.c.l.b16 %v3407
      %v3924 = vunpack.c.l.b16 %v3408
      %v3925 = vunpack.c.l.b16 %v3409
      %v3926 = vunpack.c.l.b16 %v3410
      %v3927 = vunpack.c.l.b16 %v3411
      %v3928 = vunpack.c.l.b16 %v3412
      %v3929 = vunpack.c.l.b16 %v3413
      %v3930 = vunpack.c.l.b16 %v3414
      %v3931 = vunpack.c.l.b16 %v3415
      %v3932 = vunpack.c.l.b16 %v3416
      %v3933 = vunpack.c.l.b16 %v3417
      %v3934 = vunpack.c.l.b16 %v3418
      %v3935 = vunpack.c.l.b16 %v3419
      %v3936 = vunpack.c.l.b16 %v3420
      %v3937 = vunpack.c.l.b16 %v3421
      %v3938 = vunpack.c.l.b16 %v3422
      %v3939 = vunpack.c.l.b16 %v3423
      %v3940 = vunpack.c.l.b16 %v3424
      %v3941 = vunpack.c.l.b16 %v3425
      %v3942 = vunpack.c.l.b16 %v3426
      %v3943 = vunpack.c.l.b16 %v3427
      %v3944 = vunpack.c.l.b16 %v3428
      %v3945 = vunpack.c.l.b16 %v3429
      %v3946 = vunpack.c.l.b16 %v3430
      %v3947 = vunpack.c.l.b16 %v3431
      %v3948 = vunpack.c.l.b16 %v3432
      %v3949 = vunpack.c.l.b16 %v3433
      %v3950 = vunpack.c.l.b16 %v3434
      %v3951 = vunpack.c.l.b16 %v3435
      %v3952 = vunpack.c.l.b16 %v3436
      %v3953 = vunpack.c.l.b16 %v3437
      %v3954 = vunpack.c.l.b16 %v3438
      %v3955 = vunpack.c.l.b16 %v3439
      %v3956 = vunpack.c.l.b16 %v3440
      %v3957 = vunpack.c.l.b16 %v3441
      %v3958 = vunpack.c.l.b16 %v3442
      %v3959 = vunpack.c.l.b16 %v3443
      %v3960 = vunpack.c.l.b16 %v3444
      %v3961 = vunpack.c.l.b16 %v3445
      %v3962 = vunpack.c.l.b16 %v3446
      %v3963 = vunpack.c.l.b16 %v3447
      %v3964 = vunpack.c.l.b16 %v3448
      %v3965 = vunpack.c.l.b16 %v3449
      %v3966 = vunpack.c.l.b16 %v3450
      %v3967 = vunpack.c.l.b16 %v3451
      %v3968 = vunpack.c.l.b16 %v3452
      %v3969 = vunpack.c.l.b16 %v3453
      %v3970 = vunpack.c.l.b16 %v3454
      %v3971 = vunpack.c.l.b16 %v3455
      %v3972 = vunpack.c.l.b16 %v3456
      %v3973 = vunpack.c.l.b16 %v3457
      %v3974 = vunpack.c.l.b16 %v3458
      %v3975 = vunpack.c.l.b16 %v3459
      %v3976 = vunpack.c.l.b16 %v3460
      %v3977 = vunpack.c.l.b16 %v3461
      %v3978 = vunpack.c.l.b16 %v3462
      %v3979 = vunpack.c.l.b16 %v3463
      %v3980 = vunpack.c.l.b16 %v3464
      %v3981 = vunpack.c.l.b16 %v3465
      %v3982 = vunpack.c.l.b16 %v3466
      %v3983 = vunpack.c.l.b16 %v3467
      %v3984 = vunpack.c.l.b16 %v3468
      %v3985 = vunpack.c.l.b16 %v3469
      %v3986 = vunpack.c.l.b16 %v3470
      %v3987 = vunpack.c.l.b16 %v3471
      %v3988 = vunpack.c.l.b16 %v3472
      %v3989 = vunpack.c.l.b16 %v3473
      %v3990 = vunpack.c.l.b16 %v3474
      %v3991 = vunpack.c.l.b16 %v3475
      %v3992 = vunpack.c.l.b16 %v3476
      %v3993 = vunpack.c.l.b16 %v3477
      %v3994 = vunpack.c.l.b16 %v3478
      %v3995 = vunpack.c.l.b16 %v3479
      %v3996 = vunpack.c.l.b16 %v3480
      %v3997 = vunpack.c.l.b16 %v3481
      %v3998 = vunpack.c.l.b16 %v3482
      %v3999 = vunpack.c.l.b16 %v3483
      %v4000 = vunpack.c.l.b16 %v3484
      %v4001 = vunpack.c.l.b16 %v3485
      %v4002 = vunpack.c.l.b16 %v3486
      %v4003 = vunpack.c.l.b16 %v3487
      %v4004 = vunpack.c.l.b16 %v3488
      %v4005 = vunpack.c.l.b16 %v3489
      %v4006 = vunpack.c.l.b16 %v3490
      %v4007 = vunpack.c.l.b16 %v3491
      %v4008 = vunpack.c.l.b16 %v3492
      %v4009 = vunpack.c.l.b16 %v3493
      %v4010 = vunpack.c.l.b16 %v3494
      %v4011 = vunpack.c.l.b16 %v3495
      %v4012 = vunpack.c.l.b16 %v3496
      %v4013 = vunpack.c.l.b16 %v3497
      %v4014 = vunpack.c.l.b16 %v3498
      %v4015 = vunpack.c.l.b16 %v3499
      %v4016 = vunpack.c.l.b16 %v3500
      %v4017 = vunpack.c.l.b16 %v3501
      %v4018 = vunpack.c.l.b16 %v3502
      %v4019 = vunpack.c.l.b16 %v3503
      %v4020 = vunpack.c.l.b16 %v3504
      %v4021 = vunpack.c.l.b16 %v3505
      %v4022 = vunpack.c.l.b16 %v3506
      %v4023 = vunpack.c.l.b16 %v3507
      %v4024 = vunpack.c.l.b16 %v3508
      %v4025 = vunpack.c.l.b16 %v3509
      %v4026 = vunpack.c.l.b16 %v3510
      %v4027 = vunpack.c.l.b16 %v3511
      %v4028 = vunpack.c.l.b16 %v3512
      %v4029 = vunpack.c.l.b16 %v3513
      %v4030 = vunpack.c.l.b16 %v3514
      %v4031 = vunpack.c.l.b16 %v3515
      %v4032 = vunpack.c.l.b16 %v3516
      %v4033 = vunpack.c.l.b16 %v3517
      %v4034 = vunpack.c.l.b16 %v3518
      %v4035 = vunpack.c.l.b16 %v3519
      %v4036 = vunpack.c.l.b16 %v3520
      %v4037 = vunpack.c.l.b16 %v3521
      %v4038 = vunpack.c.l.b16 %v3522
      %v4039 = vunpack.c.l.b16 %v3523
      %v4040 = vunpack.c.l.b16 %v3524
      %v4041 = vunpack.c.l.b16 %v3525
      %v4042 = vunpack.c.l.b16 %v3526
      %v4043 = vunpack.c.l.b16 %v3527
      %v4044 = vunpack.c.l.b16 %v3528
      %v4045 = vunpack.c.l.b16 %v3529
      %v4046 = vunpack.c.l.b16 %v3530
      %v4047 = vunpack.c.l.b16 %v3531
      %v4048 = vunpack.c.l.b16 %v3532
      %v4049 = vunpack.c.l.b16 %v3533
      %v4050 = vunpack.c.l.b16 %v3534
      %v4051 = vunpack.c.l.b16 %v3535
      %v4052 = vunpack.c.l.b16 %v3536
      %v4053 = vunpack.c.l.b16 %v3537
      %v4054 = vunpack.c.l.b16 %v3538
      %v4055 = vunpack.c.l.b16 %v3539
      %v4056 = vunpack.c.l.b16 %v3540
      %v4057 = vunpack.c.l.b16 %v3541
      %v4058 = vunpack.c.l.b16 %v3542
      %v4059 = vunpack.c.l.b16 %v3543
      %v4060 = vunpack.c.l.b16 %v3544
      %v4061 = vunpack.c.l.b16 %v3545
      %v4062 = vunpack.c.l.b16 %v3546
      %v4063 = vunpack.c.l.b16 %v3547
      %v4064 = vunpack.c.l.b16 %v3548
      %v4065 = vunpack.c.l.b16 %v3549
      %v4066 = vunpack.c.l.b16 %v3550
      %v4067 = vunpack.c.l.b16 %v3551
      %v4068 = vunpack.c.l.b16 %v3552
      %v4069 = vunpack.c.l.b16 %v3553
      %v4070 = vunpack.c.l.b16 %v3554
      %v4071 = vunpack.c.l.b16 %v3555
      %v4072 = vunpack.c.l.b16 %v3556
      %v4073 = vunpack.c.l.b16 %v3557
      %v4074 = vunpack.c.l.b16 %v3558
      %v4075 = vunpack.c.l.b16 %v3559
      %v4076 = vunpack.c.l.b16 %v3560
      %v4077 = vunpack.c.l.b16 %v3561
      %v4078 = vunpack.c.l.b16 %v3562
      %v4079 = vunpack.c.l.b16 %v3563
      %v4080 = vunpack.c.l.b16 %v3564
      %v4081 = vunpack.c.l.b16 %v3565
      %v4082 = vunpack.c.l.b16 %v3566
      %v4083 = vunpack.c.l.b16 %v3567
      %v4084 = vunpack.c.l.b16 %v3568
      %v4085 = vunpack.c.l.b16 %v3569
      %v4086 = vunpack.c.l.b16 %v3570
      %v4087 = vunpack.c.l.b16 %v3571
      %v4088 = vunpack.c.l.b16 %v3572
      %v4089 = vunpack.c.l.b16 %v3573
      %v4090 = vunpack.c.l.b16 %v3574
      %v4091 = vunpack.c.l.b16 %v3575
      %v4092 = vunpack.c.l.b16 %v3576
      %v4093 = vunpack.c.l.b16 %v3577
      %v4094 = vunpack.c.l.b16 %v3578
      %v4095 = vunpack.c.l.b16 %v3579
      %v4096 = vunpack.c.l.b16 %v3580
      %v4097 = vunpack.c.l.b16 %v3581
      %v4098 = vunpack.c.l.b16 %v3582
      %v4099 = vunpack.c.l.b16 %v3583
      %v4100 = vunpack.c.l.b16 %v3584
      %v4101 = vunpack.c.l.b16 %v3585
      %v4102 = vunpack.c.l.b16 %v3586
      %v4103 = vunpack.c.l.b16 %v3587
      %v4104 = vunpack.c.l.b16 %v3588
      %v4105 = vunpack.c.l.b16 %v3589
      %v4106 = vunpack.c.l.b16 %v3590
      %v4107 = vunpack.c.l.b16 %v3591
      %v4108 = vunpack.c.l.b16 %v3592
      %v4109 = vunpack.c.l.b16 %v3593
      %v4110 = vunpack.c.l.b16 %v3594
      %v4111 = vunpack.c.l.b16 %v3595
      %v4112 = vunpack.c.l.b16 %v3596
      %v4113 = vunpack.c.l.b16 %v3597
      %v4114 = vunpack.c.l.b16 %v3598
      %v4115 = vunpack.c.l.b16 %v3599
      %v4116 = vunpack.c.l.b16 %v3600
      %v4117 = vunpack.c.l.b16 %v3601
      %v4118 = vunpack.c.l.b16 %v3602
      %v4119 = vunpack.c.l.b16 %v3603
      %v4120 = vunpack.c.l.b16 %v3604
      %v4121 = vunpack.c.l.b16 %v3605
      %v4122 = vunpack.c.l.b16 %v3606
      %v4123 = vunpack.c.l.b16 %v3607
      %v4124 = vunpack.c.l.b16 %v3608
      %v4125 = vunpack.c.l.b16 %v3609
      %v4126 = vunpack.c.l.b16 %v3610
      %v4127 = vunpack.c.l.b16 %v3611
      %v4128 = vunpack.c.l.b16 %v3612
      %v4129 = vunpack.c.l.b16 %v3613
      %v4130 = vunpack.c.l.b16 %v3614
      %v4131 = vunpack.c.l.b16 %v3615
      %v4132 = vunpack.c.l.b16 %v3616
      %v4133 = vunpack.c.l.b16 %v3617
      %v4134 = vunpack.c.l.b16 %v3618
      %v4135 = vunpack.c.l.b16 %v3619
      %v4136 = vunpack.c.l.b16 %v3620
      %v4137 = vunpack.c.l.b16 %v3621
      %v4138 = vunpack.c.l.b16 %v3622
      %v4139 = vunpack.c.l.b16 %v3623
      %v4140 = vunpack.c.l.b16 %v3624
      %v4141 = vunpack.c.l.b16 %v3625
      %v4142 = vunpack.c.l.b16 %v3626
      %v4143 = vunpack.c.l.b16 %v3627
      %v4144 = vunpack.c.l.b16 %v3628
      %v4145 = vunpack.c.l.b16 %v3629
      %v4146 = vunpack.c.l.b16 %v3630
      %v4147 = vunpack.c.l.b16 %v3631
      %v4148 = vunpack.c.l.b16 %v3632
      %v4149 = vunpack.c.l.b16 %v3633
      %v4150 = vunpack.c.l.b16 %v3634
      %v4151 = vunpack.c.l.b16 %v3635
      %v4152 = vunpack.c.l.b16 %v3636
      %v4153 = vunpack.c.l.b16 %v3637
      %v4154 = vunpack.c.l.b16 %v3638
      %v4155 = vunpack.c.l.b16 %v3639
      %v4156 = vunpack.c.l.b16 %v3640
      %v4157 = vunpack.c.l.b16 %v3641
      %v4158 = vunpack.c.l.b16 %v3642
      %v4159 = vunpack.c.l.b16 %v3643
      %v4160 = vunpack.c.l.b16 %v3644
      %v4161 = vunpack.c.l.b16 %v3645
      %v4162 = vunpack.c.l.b16 %v3646
      %v4163 = vunpack.c.l.b16 %v3647
      %v4164 = vunpack.c.l.b16 %v3648
      %v4165 = vunpack.c.l.b16 %v3649
      %v4166 = vunpack.c.l.b16 %v3650
      %v4167 = vunpack.c.l.b16 %v3651
      %v4168 = vunpack.c.l.b16 %v3652
      %v4169 = vunpack.c.l.b16 %v3653
      %v4170 = vunpack.c.l.b16 %v3654
      %v4171 = vunpack.c.l.b16 %v3655
      %v4172 = vunpack.c.l.b16 %v3656
      %v4173 = vpack.c.b16 %v3918, %v3917
      %v4174 = vpack.c.b16 %v3920, %v3919
      %v4175 = vpack.c.b16 %v3922, %v3921
      %v4176 = vpack.c.b16 %v3924, %v3923
      %v4177 = vpack.c.b16 %v3926, %v3925
      %v4178 = vpack.c.b16 %v3928, %v3927
      %v4179 = vpack.c.b16 %v3930, %v3929
      %v4180 = vpack.c.b16 %v3932, %v3931
      %v4181 = vpack.c.b16 %v3934, %v3933
      %v4182 = vpack.c.b16 %v3936, %v3935
      %v4183 = vpack.c.b16 %v3938, %v3937
      %v4184 = vpack.c.b16 %v3940, %v3939
      %v4185 = vpack.c.b16 %v3942, %v3941
      %v4186 = vpack.c.b16 %v3944, %v3943
      %v4187 = vpack.c.b16 %v3946, %v3945
      %v4188 = vpack.c.b16 %v3948, %v3947
      %v4189 = vpack.c.b16 %v3950, %v3949
      %v4190 = vpack.c.b16 %v3952, %v3951
      %v4191 = vpack.c.b16 %v3954, %v3953
      %v4192 = vpack.c.b16 %v3956, %v3955
      %v4193 = vpack.c.b16 %v3958, %v3957
      %v4194 = vpack.c.b16 %v3960, %v3959
      %v4195 = vpack.c.b16 %v3962, %v3961
      %v4196 = vpack.c.b16 %v3964, %v3963
      %v4197 = vpack.c.b16 %v3966, %v3965
      %v4198 = vpack.c.b16 %v3968, %v3967
      %v4199 = vpack.c.b16 %v3970, %v3969
      %v4200 = vpack.c.b16 %v3972, %v3971
      %v4201 = vpack.c.b16 %v3974, %v3973
      %v4202 = vpack.c.b16 %v3976, %v3975
      %v4203 = vpack.c.b16 %v3978, %v3977
      %v4204 = vpack.c.b16 %v3980, %v3979
      %v4205 = vpack.c.b16 %v3982, %v3981
      %v4206 = vpack.c.b16 %v3984, %v3983
      %v4207 = vpack.c.b16 %v3986, %v3985
      %v4208 = vpack.c.b16 %v3988, %v3987
      %v4209 = vpack.c.b16 %v3990, %v3989
      %v4210 = vpack.c.b16 %v3992, %v3991
      %v4211 = vpack.c.b16 %v3994, %v3993
      %v4212 = vpack.c.b16 %v3996, %v3995
      %v4213 = vpack.c.b16 %v3998, %v3997
      %v4214 = vpack.c.b16 %v4000, %v3999
      %v4215 = vpack.c.b16 %v4002, %v4001
      %v4216 = vpack.c.b16 %v4004, %v4003
      %v4217 = vpack.c.b16 %v4006, %v4005
      %v4218 = vpack.c.b16 %v4008, %v4007
      %v4219 = vpack.c.b16 %v4010, %v4009
      %v4220 = vpack.c.b16 %v4012, %v4011
      %v4221 = vpack.c.b16 %v4014, %v4013
      %v4222 = vpack.c.b16 %v4016, %v4015
      %v4223 = vpack.c.b16 %v4018, %v4017
      %v4224 = vpack.c.b16 %v4020, %v4019
      %v4225 = vpack.c.b16 %v4022, %v4021
      %v4226 = vpack.c.b16 %v4024, %v4023
      %v4227 = vpack.c.b16 %v4026, %v4025
      %v4228 = vpack.c.b16 %v4028, %v4027
      %v4229 = vpack.c.b16 %v4030, %v4029
      %v4230 = vpack.c.b16 %v4032, %v4031
      %v4231 = vpack.c.b16 %v4034, %v4033
      %v4232 = vpack.c.b16 %v4036, %v4035
      %v4233 = vpack.c.b16 %v4038, %v4037
      %v4234 = vpack.c.b16 %v4040, %v4039
      %v4235 = vpack.c.b16 %v4042, %v4041
      %v4236 = vpack.c.b16 %v4044, %v4043
      %v4237 = vpack.c.b16 %v4046, %v4045
      %v4238 = vpack.c.b16 %v4048, %v4047
      %v4239 = vpack.c.b16 %v4050, %v4049
      %v4240 = vpack.c.b16 %v4052, %v4051
      %v4241 = vpack.c.b16 %v4054, %v4053
      %v4242 = vpack.c.b16 %v4056, %v4055
      %v4243 = vpack.c.b16 %v4058, %v4057
      %v4244 = vpack.c.b16 %v4060, %v4059
      %v4245 = vpack.c.b16 %v4062, %v4061
      %v4246 = vpack.c.b16 %v4064, %v4063
      %v4247 = vpack.c.b16 %v4066, %v4065
      %v4248 = vpack.c.b16 %v4068, %v4067
      %v4249 = vpack.c.b16 %v4070, %v4069
      %v4250 = vpack.c.b16 %v4072, %v4071
      %v4251 = vpack.c.b16 %v4074, %v4073
      %v4252 = vpack.c.b16 %v4076, %v4075
      %v4253 = vpack.c.b16 %v4078, %v4077
      %v4254 = vpack.c.b16 %v4080, %v4079
      %v4255 = vpack.c.b16 %v4082, %v4081
      %v4256 = vpack.c.b16 %v4084, %v4083
      %v4257 = vpack.c.b16 %v4086, %v4085
      %v4258 = vpack.c.b16 %v4088, %v4087
      %v4259 = vpack.c.b16 %v4090, %v4089
      %v4260 = vpack.c.b16 %v4092, %v4091
      %v4261 = vpack.c.b16 %v4094, %v4093
      %v4262 = vpack.c.b16 %v4096, %v4095
      %v4263 = vpack.c.b16 %v4098, %v4097
      %v4264 = vpack.c.b16 %v4100, %v4099
      %v4265 = vpack.c.b16 %v4102, %v4101
      %v4266 = vpack.c.b16 %v4104, %v4103
      %v4267 = vpack.c.b16 %v4106, %v4105
      %v4268 = vpack.c.b16 %v4108, %v4107
      %v4269 = vpack.c.b16 %v4110, %v4109
      %v4270 = vpack.c.b16 %v4112, %v4111
      %v4271 = vpack.c.b16 %v4114, %v4113
      %v4272 = vpack.c.b16 %v4116, %v4115
      %v4273 = vpack.c.b16 %v4118, %v4117
      %v4274 = vpack.c.b16 %v4120, %v4119
      %v4275 = vpack.c.b16 %v4122, %v4121
      %v4276 = vpack.c.b16 %v4124, %v4123
      %v4277 = vpack.c.b16 %v4126, %v4125
      %v4278 = vpack.c.b16 %v4128, %v4127
      %v4279 = vpack.c.b16 %v4130, %v4129
      %v4280 = vpack.c.b16 %v4132, %v4131
      %v4281 = vpack.c.b16 %v4134, %v4133
      %v4282 = vpack.c.b16 %v4136, %v4135
      %v4283 = vpack.c.b16 %v4138, %v4137
      %v4284 = vpack.c.b16 %v4140, %v4139
      %v4285 = vpack.c.b16 %v4142, %v4141
      %v4286 = vpack.c.b16 %v4144, %v4143
      %v4287 = vpack.c.b16 %v4146, %v4145
      %v4288 = vpack.c.b16 %v4148, %v4147
      %v4289 = vpack.c.b16 %v4150, %v4149
      %v4290 = vpack.c.b16 %v4152, %v4151
      %v4291 = vpack.c.b16 %v4154, %v4153
      %v4292 = vpack.c.b16 %v4156, %v4155
      %v4293 = vpack.c.b16 %v4158, %v4157
      %v4294 = vpack.c.b16 %v4160, %v4159
      %v4295 = vpack.c.b16 %v4162, %v4161
      %v4296 = vpack.c.b16 %v4164, %v4163
      %v4297 = vpack.c.b16 %v4166, %v4165
      %v4298 = vpack.c.b16 %v4168, %v4167
      %v4299 = vpack.c.b16 %v4170, %v4169
      %v4300 = vpack.c.b16 %v4172, %v4171
      %4429 = vmatpush.bf16.msra.mxu0 %v4180
      %4430 = vmatpush.bf16.msra.mxu0 %v4179
      %4431 = vmatpush.bf16.msra.mxu0 %v4178
      %4432 = vmatpush.bf16.msra.mxu0 %v4177
      %4433 = vmatpush.bf16.msra.mxu0 %v4176
      %4434 = vmatpush.bf16.msra.mxu0 %v4175
      %4435 = vmatpush.bf16.msra.mxu0 %v4174
      %4436 = vmatpush.bf16.msra.mxu0 %v4173
      %4437 = vmatmul.bf16.gmra.mxu0 %v3385
      %v4438 = vpop.f32.mrf.mxu0
      %v4439 = vadd.f32 %v3659, %v4438
      %v4440 = vpop.f32.mrf.mxu0
      %4441 = vdwg.mxu0
      %4442 = vmatpush.bf16.msra.mxu0 %v4188
      %4443 = vmatpush.bf16.msra.mxu0 %v4187
      %4444 = vmatpush.bf16.msra.mxu0 %v4186
      %4445 = vmatpush.bf16.msra.mxu0 %v4185
      %4446 = vmatpush.bf16.msra.mxu0 %v4184
      %4447 = vmatpush.bf16.msra.mxu0 %v4183
      %4448 = vmatpush.bf16.msra.mxu0 %v4182
      %4449 = vmatpush.bf16.msra.mxu0 %v4181
      %4450 = vmatmul.bf16.gmra.mxu0 %v3386
      %v4451 = vpop.f32.mrf.mxu0
      %v4452 = vadd.f32 %v4439, %v4451
      %v4453 = vpop.f32.mrf.mxu0
      %4454 = vdwg.mxu0
      %4455 = vmatpush.bf16.msra.mxu0 %v4196
      %4456 = vmatpush.bf16.msra.mxu0 %v4195
      %4457 = vmatpush.bf16.msra.mxu0 %v4194
      %4458 = vmatpush.bf16.msra.mxu0 %v4193
      %4459 = vmatpush.bf16.msra.mxu0 %v4192
      %4460 = vmatpush.bf16.msra.mxu0 %v4191
      %4461 = vmatpush.bf16.msra.mxu0 %v4190
      %4462 = vmatpush.bf16.msra.mxu0 %v4189
      %4463 = vmatmul.bf16.gmra.mxu0 %v3387
      %v4464 = vpop.f32.mrf.mxu0
      %v4465 = vadd.f32 %v4452, %v4464
      %v4466 = vpop.f32.mrf.mxu0
      %4467 = vdwg.mxu0
      %4468 = vmatpush.bf16.msra.mxu0 %v4204
      %4469 = vmatpush.bf16.msra.mxu0 %v4203
      %4470 = vmatpush.bf16.msra.mxu0 %v4202
      %4471 = vmatpush.bf16.msra.mxu0 %v4201
      %4472 = vmatpush.bf16.msra.mxu0 %v4200
      %4473 = vmatpush.bf16.msra.mxu0 %v4199
      %4474 = vmatpush.bf16.msra.mxu0 %v4198
      %4475 = vmatpush.bf16.msra.mxu0 %v4197
      %4476 = vmatmul.bf16.gmra.mxu0 %v3388
      %v4477 = vpop.f32.mrf.mxu0
      %v4478 = vadd.f32 %v4465, %v4477
      %v4479 = vpop.f32.mrf.mxu0
      %4480 = vdwg.mxu0
      %4481 = vmatpush.bf16.msra.mxu0 %v4212
      %4482 = vmatpush.bf16.msra.mxu0 %v4211
      %4483 = vmatpush.bf16.msra.mxu0 %v4210
      %4484 = vmatpush.bf16.msra.mxu0 %v4209
      %4485 = vmatpush.bf16.msra.mxu0 %v4208
      %4486 = vmatpush.bf16.msra.mxu0 %v4207
      %4487 = vmatpush.bf16.msra.mxu0 %v4206
      %4488 = vmatpush.bf16.msra.mxu0 %v4205
      %4489 = vmatmul.bf16.gmra.mxu0 %v3389
      %v4490 = vpop.f32.mrf.mxu0
      %v4491 = vadd.f32 %v4478, %v4490
      %v4492 = vpop.f32.mrf.mxu0
      %4493 = vdwg.mxu0
      %4494 = vmatpush.bf16.msra.mxu0 %v4220
      %4495 = vmatpush.bf16.msra.mxu0 %v4219
      %4496 = vmatpush.bf16.msra.mxu0 %v4218
      %4497 = vmatpush.bf16.msra.mxu0 %v4217
      %4498 = vmatpush.bf16.msra.mxu0 %v4216
      %4499 = vmatpush.bf16.msra.mxu0 %v4215
      %4500 = vmatpush.bf16.msra.mxu0 %v4214
      %4501 = vmatpush.bf16.msra.mxu0 %v4213
      %4502 = vmatmul.bf16.gmra.mxu0 %v3390
      %v4503 = vpop.f32.mrf.mxu0
      %v4504 = vadd.f32 %v4491, %v4503
      %v4505 = vpop.f32.mrf.mxu0
      %4506 = vdwg.mxu0
      %4507 = vmatpush.bf16.msra.mxu0 %v4228
      %4508 = vmatpush.bf16.msra.mxu0 %v4227
      %4509 = vmatpush.bf16.msra.mxu0 %v4226
      %4510 = vmatpush.bf16.msra.mxu0 %v4225
      %4511 = vmatpush.bf16.msra.mxu0 %v4224
      %4512 = vmatpush.bf16.msra.mxu0 %v4223
      %4513 = vmatpush.bf16.msra.mxu0 %v4222
      %4514 = vmatpush.bf16.msra.mxu0 %v4221
      %4515 = vmatmul.bf16.gmra.mxu0 %v3391
      %v4516 = vpop.f32.mrf.mxu0
      %v4517 = vadd.f32 %v4504, %v4516
      %v4518 = vpop.f32.mrf.mxu0
      %4519 = vdwg.mxu0
      %4520 = vmatpush.bf16.msra.mxu0 %v4236
      %4521 = vmatpush.bf16.msra.mxu0 %v4235
      %4522 = vmatpush.bf16.msra.mxu0 %v4234
      %4523 = vmatpush.bf16.msra.mxu0 %v4233
      %4524 = vmatpush.bf16.msra.mxu0 %v4232
      %4525 = vmatpush.bf16.msra.mxu0 %v4231
      %4526 = vmatpush.bf16.msra.mxu0 %v4230
      %4527 = vmatpush.bf16.msra.mxu0 %v4229
      %4528 = vmatmul.bf16.gmra.mxu0 %v3392
      %v4529 = vpop.f32.mrf.mxu0
      %v4530 = vadd.f32 %v4517, %v4529
      %v4531 = vpop.f32.mrf.mxu0
      %4532 = vdwg.mxu0
      %4533 = vmatpush.bf16.msra.mxu0 %v4244
      %4534 = vmatpush.bf16.msra.mxu0 %v4243
      %4535 = vmatpush.bf16.msra.mxu0 %v4242
      %4536 = vmatpush.bf16.msra.mxu0 %v4241
      %4537 = vmatpush.bf16.msra.mxu0 %v4240
      %4538 = vmatpush.bf16.msra.mxu0 %v4239
      %4539 = vmatpush.bf16.msra.mxu0 %v4238
      %4540 = vmatpush.bf16.msra.mxu0 %v4237
      %4541 = vmatmul.bf16.gmra.mxu0 %v3393
      %v4542 = vpop.f32.mrf.mxu0
      %v4543 = vadd.f32 %v4530, %v4542
      %v4544 = vpop.f32.mrf.mxu0
      %4545 = vdwg.mxu0
      %4546 = vmatpush.bf16.msra.mxu0 %v4252
      %4547 = vmatpush.bf16.msra.mxu0 %v4251
      %4548 = vmatpush.bf16.msra.mxu0 %v4250
      %4549 = vmatpush.bf16.msra.mxu0 %v4249
      %4550 = vmatpush.bf16.msra.mxu0 %v4248
      %4551 = vmatpush.bf16.msra.mxu0 %v4247
      %4552 = vmatpush.bf16.msra.mxu0 %v4246
      %4553 = vmatpush.bf16.msra.mxu0 %v4245
      %4554 = vmatmul.bf16.gmra.mxu0 %v3394
      %v4555 = vpop.f32.mrf.mxu0
      %v4556 = vadd.f32 %v4543, %v4555
      %v4557 = vpop.f32.mrf.mxu0
      %4558 = vdwg.mxu0
      %4559 = vmatpush.bf16.msra.mxu0 %v4260
      %4560 = vmatpush.bf16.msra.mxu0 %v4259
      %4561 = vmatpush.bf16.msra.mxu0 %v4258
      %4562 = vmatpush.bf16.msra.mxu0 %v4257
      %4563 = vmatpush.bf16.msra.mxu0 %v4256
      %4564 = vmatpush.bf16.msra.mxu0 %v4255
      %4565 = vmatpush.bf16.msra.mxu0 %v4254
      %4566 = vmatpush.bf16.msra.mxu0 %v4253
      %4567 = vmatmul.bf16.gmra.mxu0 %v3395
      %v4568 = vpop.f32.mrf.mxu0
      %v4569 = vadd.f32 %v4556, %v4568
      %v4570 = vpop.f32.mrf.mxu0
      %4571 = vdwg.mxu0
      %4572 = vmatpush.bf16.msra.mxu0 %v4268
      %4573 = vmatpush.bf16.msra.mxu0 %v4267
      %4574 = vmatpush.bf16.msra.mxu0 %v4266
      %4575 = vmatpush.bf16.msra.mxu0 %v4265
      %4576 = vmatpush.bf16.msra.mxu0 %v4264
      %4577 = vmatpush.bf16.msra.mxu0 %v4263
      %4578 = vmatpush.bf16.msra.mxu0 %v4262
      %4579 = vmatpush.bf16.msra.mxu0 %v4261
      %4580 = vmatmul.bf16.gmra.mxu0 %v3396
      %v4581 = vpop.f32.mrf.mxu0
      %v4582 = vadd.f32 %v4569, %v4581
      %v4583 = vpop.f32.mrf.mxu0
      %4584 = vdwg.mxu0
      %4585 = vmatpush.bf16.msra.mxu0 %v4276
      %4586 = vmatpush.bf16.msra.mxu0 %v4275
      %4587 = vmatpush.bf16.msra.mxu0 %v4274
      %4588 = vmatpush.bf16.msra.mxu0 %v4273
      %4589 = vmatpush.bf16.msra.mxu0 %v4272
      %4590 = vmatpush.bf16.msra.mxu0 %v4271
      %4591 = vmatpush.bf16.msra.mxu0 %v4270
      %4592 = vmatpush.bf16.msra.mxu0 %v4269
      %4593 = vmatmul.bf16.gmra.mxu0 %v3397
      %v4594 = vpop.f32.mrf.mxu0
      %v4595 = vadd.f32 %v4582, %v4594
      %v4596 = vpop.f32.mrf.mxu0
      %4597 = vdwg.mxu0
      %4598 = vmatpush.bf16.msra.mxu0 %v4284
      %4599 = vmatpush.bf16.msra.mxu0 %v4283
      %4600 = vmatpush.bf16.msra.mxu0 %v4282
      %4601 = vmatpush.bf16.msra.mxu0 %v4281
      %4602 = vmatpush.bf16.msra.mxu0 %v4280
      %4603 = vmatpush.bf16.msra.mxu0 %v4279
      %4604 = vmatpush.bf16.msra.mxu0 %v4278
      %4605 = vmatpush.bf16.msra.mxu0 %v4277
      %4606 = vmatmul.bf16.gmra.mxu0 %v3398
      %v4607 = vpop.f32.mrf.mxu0
      %v4608 = vadd.f32 %v4595, %v4607
      %v4609 = vpop.f32.mrf.mxu0
      %4610 = vdwg.mxu0
      %4611 = vmatpush.bf16.msra.mxu0 %v4292
      %4612 = vmatpush.bf16.msra.mxu0 %v4291
      %4613 = vmatpush.bf16.msra.mxu0 %v4290
      %4614 = vmatpush.bf16.msra.mxu0 %v4289
      %4615 = vmatpush.bf16.msra.mxu0 %v4288
      %4616 = vmatpush.bf16.msra.mxu0 %v4287
      %4617 = vmatpush.bf16.msra.mxu0 %v4286
      %4618 = vmatpush.bf16.msra.mxu0 %v4285
      %4619 = vmatmul.bf16.gmra.mxu0 %v3399
      %v4620 = vpop.f32.mrf.mxu0
      %v4621 = vadd.f32 %v4608, %v4620
      %v4622 = vpop.f32.mrf.mxu0
      %4623 = vdwg.mxu0
      %4624 = vmatpush.bf16.msra.mxu0 %v4300
      %4625 = vmatpush.bf16.msra.mxu0 %v4299
      %4626 = vmatpush.bf16.msra.mxu0 %v4298
      %4627 = vmatpush.bf16.msra.mxu0 %v4297
      %4628 = vmatpush.bf16.msra.mxu0 %v4296
      %4629 = vmatpush.bf16.msra.mxu0 %v4295
      %4630 = vmatpush.bf16.msra.mxu0 %v4294
      %4631 = vmatpush.bf16.msra.mxu0 %v4293
      %4632 = vmatmul.bf16.gmra.mxu0 %v3400
      %v4633 = vpop.f32.mrf.mxu0
      %v4634 = vadd.f32 %v4621, %v4633
      %v4635 = vpop.f32.mrf.mxu0
      %4636 = vdwg.mxu0
      %v4637 = vadd.f32 %v2928, %v4634
      %v4638 = vld [vmem:[%s45] sm:$0x1]
      %v4639 = vld [vmem:[%s47] sm:$0x1]
      %v4640 = vsel %vm1036, %v4637, 0.0
      %4641 = vadd.xlane.f32.xlu0 %v4640
      %v4642 = vpop.xlane.xlu0 %4641
      %v4643 = vmul.f32 %v4642, %v1071
      %v4644 = vsub.f32 %v4637, %v4643
      %v4645 = vmul.f32 %v4644, %v4644
      %v4646 = vsel %vm1036, %v4645, 0.0
      %4647 = vadd.xlane.f32.xlu0 %v4646
      %v4648 = vpop.xlane.xlu0 %4647
      %v4649 = vmul.f32 %v4648, %v1071
      %v4650 = vadd.f32 %v4649, 1e-05
      %v4651 = vrsqrt.pop %v4650
      %v4652 = vmul.f32 %v4651, %v4650
      %v4653 = vmul.f32 %v4652, %v4651
      %v4654 = vmul.f32 0.5, %v4653
      %v4655 = vsub.f32 1.5, %v4654
      %v4656 = vmul.f32 %v4651, %v4655
      %vm4657 = vweird.f32 %v4650
      %vm4658 = vweird.f32 %v4651
      %vm4659 = vmor %vm4657, %vm4658
      %v4660 = vsel %vm4659, %v4651, %v4656
      %v4661 = vmul.f32 %v4644, %v4660
      %v4663 = vperm.slane %v4638, 0
      %v4665 = vmul.f32 %v4661, %v4663
      %v4667 = vperm.slane %v4639, 0
      %v4669 = vadd.f32 %v4665, %v4667
      %v4670 = vld [vmem:[%s1017] sm:$0x3f]
      %v4671 = vld [vmem:[%s49] sm:$0xff]
      %v4672 = vld [vmem:[%s49 + $0x8] sm:$0xff]
      %v4673 = vld [vmem:[%s49 + $0x10] sm:$0xff]
      %v4674 = vld [vmem:[%s49 + $0x18] sm:$0xff]
      %v4675 = vld [vmem:[%s51] sm:$0x1]
      %v4677 = vperm.slane %v4675, 0
      %v4680 = vsel %vm1036, %v4669, 0
      %4682 = vmatpush.msra.mxu0 0.0
      %4683 = vmatpush.msra.mxu0 0.0
      %4684 = vmatpush.msra.mxu0 0.0
      %4685 = vmatpush.msra.mxu0 0.0
      %4686 = vmatpush.msra.mxu0 0.0
      %4687 = vmatpush.msra.mxu0 0.0
      %4688 = vmatpush.msra.mxu0 0.0
      %4689 = vmatpush.msra.mxu0 0.0
      %4690 = vmatpush.msra.mxu0 0.0
      %4691 = vmatpush.msra.mxu0 0.0
      %4692 = vmatpush.msra.mxu0 0.0
      %4693 = vmatpush.msra.mxu0 0.0
      %4694 = vmatpush.msra.mxu0 %v4674
      %4695 = vmatpush.msra.mxu0 %v4673
      %4696 = vmatpush.msra.mxu0 %v4672
      %4697 = vmatpush.msra.mxu0 %v4671
      %4698 = vmatmul.f32.gmra.mxu0 %v4680
      %v4699 = vpop.f32.mrf.mxu0
      %v4700 = vadd.f32 %v4677, %v4699
      %4701 = vdwg.mxu0
      %v4702 = vld [vmem:[%s53] sm:$0xff]
      %v4703 = vld [vmem:[%s53 + $0x8] sm:$0xff]
      %v4704 = vld [vmem:[%s53 + $0x10] sm:$0xff]
      %v4705 = vld [vmem:[%s53 + $0x18] sm:$0xff]
      %v4706 = vld [vmem:[%s55] sm:$0x1]
      %v4708 = vperm.slane %v4706, 0
      %v4711 = vsel %vm1036, %v4670, 0
      %4713 = vmatpush.msra.mxu0 0.0
      %4714 = vmatpush.msra.mxu0 0.0
      %4715 = vmatpush.msra.mxu0 0.0
      %4716 = vmatpush.msra.mxu0 0.0
      %4717 = vmatpush.msra.mxu0 0.0
      %4718 = vmatpush.msra.mxu0 0.0
      %4719 = vmatpush.msra.mxu0 0.0
      %4720 = vmatpush.msra.mxu0 0.0
      %4721 = vmatpush.msra.mxu0 0.0
      %4722 = vmatpush.msra.mxu0 0.0
      %4723 = vmatpush.msra.mxu0 0.0
      %4724 = vmatpush.msra.mxu0 0.0
      %4725 = vmatpush.msra.mxu0 %v4705
      %4726 = vmatpush.msra.mxu0 %v4704
      %4727 = vmatpush.msra.mxu0 %v4703
      %4728 = vmatpush.msra.mxu0 %v4702
      %4729 = vmatmul.f32.gmra.mxu0 %v4711
      %v4730 = vpop.f32.mrf.mxu0
      %v4731 = vadd.f32 %v4708, %v4730
      %4732 = vdwg.mxu0
      %v4733 = vld [vmem:[%s57] sm:$0xff]
      %v4734 = vld [vmem:[%s57 + $0x8] sm:$0xff]
      %v4735 = vld [vmem:[%s57 + $0x10] sm:$0xff]
      %v4736 = vld [vmem:[%s57 + $0x18] sm:$0xff]
      %v4737 = vld [vmem:[%s59] sm:$0x1]
      %v4739 = vperm.slane %v4737, 0
      %4741 = vmatpush.msra.mxu0 0.0
      %4742 = vmatpush.msra.mxu0 0.0
      %4743 = vmatpush.msra.mxu0 0.0
      %4744 = vmatpush.msra.mxu0 0.0
      %4745 = vmatpush.msra.mxu0 0.0
      %4746 = vmatpush.msra.mxu0 0.0
      %4747 = vmatpush.msra.mxu0 0.0
      %4748 = vmatpush.msra.mxu0 0.0
      %4749 = vmatpush.msra.mxu0 0.0
      %4750 = vmatpush.msra.mxu0 0.0
      %4751 = vmatpush.msra.mxu0 0.0
      %4752 = vmatpush.msra.mxu0 0.0
      %4753 = vmatpush.msra.mxu0 %v4736
      %4754 = vmatpush.msra.mxu0 %v4735
      %4755 = vmatpush.msra.mxu0 %v4734
      %4756 = vmatpush.msra.mxu0 %v4733
      %4757 = vmatmul.f32.gmra.mxu0 %v4711
      %v4758 = vpop.f32.mrf.mxu0
      %v4759 = vadd.f32 %v4739, %v4758
      %4760 = vdwg.mxu0
      %v4762 = vsel %vm1036, %v4700, 0
      %v4765 = vsel %vm1036, %v4731, 0
      %4767 = vmatpush.xpose.msra.mxu0 0.0
      %4768 = vmatpush.xpose.msra.mxu0 0.0
      %4769 = vmatpush.xpose.msra.mxu0 0.0
      %4770 = vmatpush.xpose.msra.mxu0 0.0
      %4771 = vmatpush.xpose.msra.mxu0 0.0
      %4772 = vmatpush.xpose.msra.mxu0 0.0
      %4773 = vmatpush.xpose.msra.mxu0 0.0
      %4774 = vmatpush.xpose.msra.mxu0 0.0
      %4775 = vmatpush.xpose.msra.mxu0 0.0
      %4776 = vmatpush.xpose.msra.mxu0 0.0
      %4777 = vmatpush.xpose.msra.mxu0 0.0
      %4778 = vmatpush.xpose.msra.mxu0 0.0
      %4779 = vmatpush.xpose.msra.mxu0 0.0
      %4780 = vmatpush.xpose.msra.mxu0 0.0
      %4781 = vmatpush.xpose.msra.mxu0 0.0
      %4782 = vmatpush.xpose.msra.mxu0 %v4765
      %4783 = vmatmul.f32.gmra.mxu0 %v4762
      %v4784 = vpop.f32.mrf.mxu0
      %v4785 = vadd.f32 0.0, %v4784
      %4786 = vdwg.mxu0
      %v4787 = vmul.f32 %v4785, 0.17677669
      %s4788 = sld [smem:[#allocation3 + %s86]]
      %v4789 = vlaneseq
      %v4790 = vand.u32 %v4789, 127
      %v4791 = vstv %s4788
      %vm4792 = vcmp.lt.s32.totalorder %v4790, %v4791
      %v4793 = vsel %vm4792, 0.0, -1e+09
      %v4794 = vadd.f32 %v4787, %v4793
      %vm4795 = vcmask 48128
      %v4796 = vsel %vm4795, %v4794, -inf
      %4797 = vmax.xlane.f32.xlu0 %v4796
      %v4798 = vpop.xlane.xlu0 %4797
      %v4799 = vsub.f32 %v4794, %v4798
      %v4800 = vmul.f32 %v4799, 1.442695
      %v4801 = vpow.pop %v4800
      %v4802 = vsel %vm4795, %v4801, 0.0
      %4803 = vadd.xlane.f32.xlu0 %v4802
      %v4804 = vpop.xlane.xlu0 %4803
      %v4805 = vrcp.pop %v4804
      %v4806 = vmul.f32 %v4801, %v4805
      %v4808 = vsel %vm4795, %v4806, 0
      %vm4810 = vcmask 1045504
      %v4812 = vsel %vm4810, %v4759, 0
      %4814 = vmatpush.msra.mxu0 0.0
      %4815 = vmatpush.msra.mxu0 0.0
      %4816 = vmatpush.msra.mxu0 0.0
      %4817 = vmatpush.msra.mxu0 0.0
      %4818 = vmatpush.msra.mxu0 0.0
      %4819 = vmatpush.msra.mxu0 0.0
      %4820 = vmatpush.msra.mxu0 0.0
      %4821 = vmatpush.msra.mxu0 0.0
      %4822 = vmatpush.msra.mxu0 0.0
      %4823 = vmatpush.msra.mxu0 0.0
      %4824 = vmatpush.msra.mxu0 0.0
      %4825 = vmatpush.msra.mxu0 0.0
      %4826 = vmatpush.msra.mxu0 0.0
      %4827 = vmatpush.msra.mxu0 0.0
      %4828 = vmatpush.msra.mxu0 0.0
      %4829 = vmatpush.msra.mxu0 %v4812
      %4830 = vmatmul.f32.gmra.mxu0 %v4808
      %v4831 = vpop.f32.mrf.mxu0
      %v4832 = vadd.f32 0.0, %v4831
      %4833 = vdwg.mxu0
      %v4834 = vld [vmem:[%s1021] sm:$0xff]
      %vm4835 = vcmp.gt.f32.partialorder %v4834, 0.0
      %v4836 = vsel %vm4835, 1, 0
      %4837 = vset.pattern.permute.xlu0 0
      %4838 = vperm.xlu0 %4837, %v4836
      %v4839 = vpop.permute.xlu0 %4838
      %vm4840 = vcmp.eq.s32.totalorder %v4839, 1
      %v4841 = vsel %vm4840, %v4832, -1e+30
      %v4842 = vsel %vm1036, %v4841, -inf
      %v4843 = vrot.slane %v4842, 4
      %v4844 = vmax.f32 %v4842, %v4843
      %v4845 = vrot.slane %v4844, 2
      %v4846 = vmax.f32 %v4844, %v4845
      %v4847 = vrot.slane %v4846, 1
      %v4848 = vmax.f32 %v4846, %v4847
      %v4849 = vadd.f32 %v4848, %v1452
      %v4850 = vld [vmem:[%s63] sm:$0xff]
      %v4851 = vld [vmem:[%s63 + $0x8] sm:$0xff]
      %v4852 = vld [vmem:[%s63 + $0x10] sm:$0xff]
      %v4853 = vld [vmem:[%s63 + $0x18] sm:$0xff]
      %v4854 = vld [vmem:[%s65] sm:$0x1]
      %v4856 = vperm.slane %v4854, 0
      %v4859 = vsel %vm1036, %v4849, 0
      %4861 = vmatpush.msra.mxu0 0.0
      %4862 = vmatpush.msra.mxu0 0.0
      %4863 = vmatpush.msra.mxu0 0.0
      %4864 = vmatpush.msra.mxu0 0.0
      %4865 = vmatpush.msra.mxu0 0.0
      %4866 = vmatpush.msra.mxu0 0.0
      %4867 = vmatpush.msra.mxu0 0.0
      %4868 = vmatpush.msra.mxu0 0.0
      %4869 = vmatpush.msra.mxu0 0.0
      %4870 = vmatpush.msra.mxu0 0.0
      %4871 = vmatpush.msra.mxu0 0.0
      %4872 = vmatpush.msra.mxu0 0.0
      %4873 = vmatpush.msra.mxu0 %v4853
      %4874 = vmatpush.msra.mxu0 %v4852
      %4875 = vmatpush.msra.mxu0 %v4851
      %4876 = vmatpush.msra.mxu0 %v4850
      %4877 = vmatmul.f32.gmra.mxu0 %v4859
      %v4878 = vpop.f32.mrf.mxu0
      %v4879 = vadd.f32 %v4856, %v4878
      %4880 = vdwg.mxu0
      %vm4881 = vcmask 15360
      %4882 = vst.msk [vmem:[%s1025] sm:$0xff] %vm4881, %v4879
      %p4883 = scmp.lt.s32.totalorder %s86, 1
      %s4884 = scalar_select %p4883, %s86, 1
      %s4885 = smul.addr %s4884, 8
      %s4886 = scalar_lea.vmem %s67, %s4885
      // Predicated region
      $region149: #{big_model_forward.1} parent=147 // pred_check
        %p4887 = pneg %p791
      $region150: #{big_model_forward.1} parent=147 // pred_check_branch
        %4889 = sbr.rel (%p4887) target = $region152
      $region151: #{big_model_forward.1} parent=147 // pred_region
        _
      $region152: #{big_model_forward.1} parent=147 // pred_fallthru
        _
    $region148: #{big_model_forward.1} parent=5 // pred_fallthru
      _
    %p4890 = scmp.le.s32.totalorder 2, %s81
    // Predicated region
    $region153: #{big_model_forward.1} parent=5 // pred_check
      %p4891 = pneg %p4890
    $region154: #{big_model_forward.1} parent=5 // pred_check_branch
      %4893 = sbr.rel (%p4891) target = $region156
    $region155: #{big_model_forward.1} parent=5 // pred_region
      %s4894 = ssub.s32 %s81, 2
      // Predicated region
      $region157: #{big_model_forward.1} parent=155 // pred_check
        %p4895 = pneg %p797
      $region158: #{big_model_forward.1} parent=155 // pred_check_branch
        %4897 = sbr.rel (%p4895) target = $region160
      $region159: #{big_model_forward.1} parent=155 // pred_region
        %p4898 = scmp.lt.s32.totalorder %s87, 1
        %s4899 = scalar_select %p4898, %s87, 1
        %s4900 = smul.addr %s4899, 8
        %s4901 = scalar_lea.vmem %s67, %s4900
      $region160: #{big_model_forward.1} parent=155 // pred_fallthru
        _
    $region156: #{big_model_forward.1} parent=5 // pred_fallthru
      _
  $region6: #{big_model_forward.1} parent=0 // loop_footer
    %s85 = sadd.s32 1, %s81
  $region7: #{big_model_forward.1} parent=0 // loop_footer_branch
    %80 = sbr.rel target = $region3
  $region8: #{big_model_forward.1} parent=0 // loop_exit
    _

</llo_original>
